<compile_context>
chip_gen: v7x
topology: tpu7x:2x2x1
jax: 0.10.0
libtpu: 0.0.40
codegen_flags: <defaults>
</compile_context>

<pallas_src>
import functools
import jax
import jax.numpy as jnp
from jax.experimental import pallas as pl
from jax.experimental.pallas import tpu as pltpu

IN_DIM = 32 * 32          # 1024
HID = 100                 # logical hidden width (as in the PyTorch module)
LATENT_DIM = 2            # logical latent width (2-d latent space)
HID_P = 128               # hidden width zero-padded to a full lane (128)
LAT_P = 128               # latent width zero-padded to a full lane (128)
DEFAULT_BATCH_TILE = 256  # primary perf knob: rows per grid step

_RELU_LAYERS = (0, 1, 2, 3, 5, 6, 7, 8)

# Logical (unpadded) layer shapes, matching the PyTorch nn.Linear stack.
_DIMS = [
    (IN_DIM, HID), (HID, HID), (HID, HID), (HID, HID), (HID, LATENT_DIM),   # encoder
    (LATENT_DIM, HID), (HID, HID), (HID, HID), (HID, HID), (HID, IN_DIM),   # decoder
]
# Padded shapes used inside the kernel (zero padding keeps the math exact).
_DIMS_P = [
    (IN_DIM, HID_P), (HID_P, HID_P), (HID_P, HID_P), (HID_P, HID_P), (HID_P, LAT_P),
    (LAT_P, HID_P), (HID_P, HID_P), (HID_P, HID_P), (HID_P, HID_P), (HID_P, IN_DIM),
]


def _round_up(x, m):
    return (x + m - 1) // m * m


def _autoencoder_kernel(x_ref, *refs):
    """refs = (w0, b0, w1, b1, ..., w9, b9, out_ref).

    Layers 0..4 : encoder (ReLU after layers 0-3, none after 4)
    Layers 5..9 : decoder (ReLU after layers 5-8, Sigmoid after 9)

    Matmul inputs are bf16 (MXU fast path), accumulation and all elementwise
    (bias add / ReLU / sigmoid) are f32.
    """
    out_ref = refs[-1]
    params = refs[:-1]

    h = x_ref[...].astype(jnp.float32)
    for li in range(10):
        w = params[2 * li][...]          # (in_p, out_p) bf16
        b = params[2 * li + 1][...]      # (1, out_p)    f32
        h = jnp.dot(h.astype(jnp.bfloat16), w,
                    preferred_element_type=jnp.float32) + b
        if li in _RELU_LAYERS:
            h = jnp.maximum(h, 0.0)
        elif li == 9:
            h = jax.nn.sigmoid(h)
    out_ref[...] = h.astype(out_ref.dtype)


def init_params(key, dtype=jnp.float32):
    """Deterministic synthetic parameters with PyTorch-Linear-like init.

    Returns a flat list [w0, b0, ..., w9, b9] with wi shaped (in, out) and
    bi shaped (1, out) (transposed relative to torch's (out, in) weight).
    """
    params = []
    for fan_in, fan_out in _DIMS:
        key, kw, kb = jax.random.split(key, 3)
        bound = 1.0 / (fan_in ** 0.5)  # matches torch.nn.Linear default init range
        w = jax.random.uniform(kw, (fan_in, fan_out), dtype, minval=-bound, maxval=bound)
        b = jax.random.uniform(kb, (1, fan_out), dtype, minval=-bound, maxval=bound)
        params += [w, b]
    return params


def pad_params(raw_params):
    """Zero-pad params to lane-dense shapes; weights -> bf16, biases stay f32.

    The extra weight columns and biases are zero and the corresponding next-layer
    weight rows are zero, so the padded network computes exactly the same function
    on the original output coordinates.
    """
    padded = []
    for li, (in_p, out_p) in enumerate(_DIMS_P):
        w, b = raw_params[2 * li], raw_params[2 * li + 1]
        wp = jnp.zeros((in_p, out_p), jnp.float32).at[: w.shape[0], : w.shape[1]].set(w)
        bp = jnp.zeros((1, out_p), jnp.float32).at[:, : b.shape[1]].set(b)
        padded += [wp.astype(jnp.bfloat16), bp.astype(jnp.float32)]
    return tuple(padded)


def _choose_batch_tile(B, requested):
    """Pick a sublane-aligned batch tile; prefer >=2 grid steps (2 TCs on v7x)."""
    b8 = _round_up(B, 8)
    tile = min(requested, b8)
    if tile >= b8 and b8 > 8:          # would be a single-step grid -> split it
        tile = max(8, b8 // 2)
    return _round_up(tile, 8)


@functools.partial(jax.jit, static_argnames=("batch_tile",))
def autoencoder_forward(x, params, batch_tile=DEFAULT_BATCH_TILE):
    B, F = x.shape
    assert F == IN_DIM, f"expected flattened 32x32 input, got {F}"

    tile = _choose_batch_tile(B, batch_tile)
    B_pad = _round_up(B, tile)
    x_in = jnp.pad(x, ((0, B_pad - B), (0, 0))) if B_pad != B else x
    grid = (B_pad // tile,)

    x_spec = pl.BlockSpec((tile, IN_DIM), lambda i: (i, 0))
    out_spec = pl.BlockSpec((tile, IN_DIM), lambda i: (i, 0))
    # Constant-index, full-array blocks for all 20 params (all are 2-D); the block
    # index never changes so the compiler keeps them resident across grid steps.
    param_specs = [pl.BlockSpec(p.shape, lambda i: (0, 0)) for p in params]

    n_weights = sum(i * o for i, o in _DIMS_P)
    n_bias = sum(o for _, o in _DIMS_P)
    cost = pl.CostEstimate(
        flops=2 * B_pad * n_weights,
        transcendentals=B_pad * IN_DIM,  # final sigmoid
        bytes_accessed=B_pad * IN_DIM * 4 * 2 + n_weights * 2 + n_bias * 4,
    )

    out = pl.pallas_call(
        _autoencoder_kernel,
        out_shape=jax.ShapeDtypeStruct((B_pad, IN_DIM), x.dtype),
        grid_spec=pltpu.PrefetchScalarGridSpec(
            num_scalar_prefetch=0,
            grid=grid,
            in_specs=[x_spec] + param_specs,
            out_specs=out_spec,
        ),
        compiler_params=pltpu.CompilerParams(
            dimension_semantics=("parallel",),
        ),
        cost_estimate=cost,
    )(x_in, *params)

    return out[:B] if B_pad != B else out


def _reference_forward(x, raw_params):
    """Pure-JAX reference that mirrors the kernel's bf16-matmul / f32-activation math."""
    h = x.astype(jnp.float32)
    for li in range(10):
        w, b = raw_params[2 * li], raw_params[2 * li + 1]
        h = jnp.dot(h.astype(jnp.bfloat16), w.astype(jnp.bfloat16),
                    preferred_element_type=jnp.float32) + b
        if li in _RELU_LAYERS:
            h = jnp.maximum(h, 0.0)
        elif li == 9:
            h = jax.nn.sigmoid(h)
    return h.astype(x.dtype)


if __name__ == "__main__":
    key = jax.random.PRNGKey(0)
    kx, kp = jax.random.split(key)

    B = 16  # small demo batch; kernel auto-picks an 8-row tile -> 2 parallel grid steps
    x = jax.random.normal(kx, (B, IN_DIM), jnp.float32)
    raw_params = init_params(kp)
    params = pad_params(raw_params)

    out = jax.block_until_ready(autoencoder_forward(x, params))
    ref = _reference_forward(x, raw_params)

    assert out.shape == (B, IN_DIM)
    assert bool(jnp.all(jnp.isfinite(out)))
    max_err = float(jnp.max(jnp.abs(out - ref)))
    assert max_err < 2e-2, f"mismatch vs reference, max abs err {max_err}"

    print("KERNEL_OK")
</pallas_src>

<mosaic_0001>
module attributes {stable_mosaic.version = 11 : i64} {
  func.func @_autoencoder_kernel(%arg0: i32, %arg1: memref<8x1024xf32, #tpu.memory_space<vmem>>, %arg2: memref<1024x128xbf16, #tpu.memory_space<vmem>>, %arg3: memref<1x128xf32, #tpu.memory_space<vmem>>, %arg4: memref<128x128xbf16, #tpu.memory_space<vmem>>, %arg5: memref<1x128xf32, #tpu.memory_space<vmem>>, %arg6: memref<128x128xbf16, #tpu.memory_space<vmem>>, %arg7: memref<1x128xf32, #tpu.memory_space<vmem>>, %arg8: memref<128x128xbf16, #tpu.memory_space<vmem>>, %arg9: memref<1x128xf32, #tpu.memory_space<vmem>>, %arg10: memref<128x128xbf16, #tpu.memory_space<vmem>>, %arg11: memref<1x128xf32, #tpu.memory_space<vmem>>, %arg12: memref<128x128xbf16, #tpu.memory_space<vmem>>, %arg13: memref<1x128xf32, #tpu.memory_space<vmem>>, %arg14: memref<128x128xbf16, #tpu.memory_space<vmem>>, %arg15: memref<1x128xf32, #tpu.memory_space<vmem>>, %arg16: memref<128x128xbf16, #tpu.memory_space<vmem>>, %arg17: memref<1x128xf32, #tpu.memory_space<vmem>>, %arg18: memref<128x128xbf16, #tpu.memory_space<vmem>>, %arg19: memref<1x128xf32, #tpu.memory_space<vmem>>, %arg20: memref<128x1024xbf16, #tpu.memory_space<vmem>>, %arg21: memref<1x1024xf32, #tpu.memory_space<vmem>>, %arg22: memref<8x1024xf32, #tpu.memory_space<vmem>>) attributes {dimension_semantics = [#tpu.dimension_semantics<parallel>], iteration_bounds = array<i64: 2>, scalar_prefetch = 0 : i64, scratch_operands = 0 : i64, tpu.core_type = #tpu.core_type<tc>, window_params = [{transform_indices = @transform_0, window_bounds = array<i64: 8, 1024>}, {pipeline_mode = #tpu.pipeline_mode<synchronous>, transform_indices = @transform_1, window_bounds = array<i64: 1024, 128>}, {pipeline_mode = #tpu.pipeline_mode<synchronous>, transform_indices = @transform_2, window_bounds = array<i64: 1, 128>}, {pipeline_mode = #tpu.pipeline_mode<synchronous>, transform_indices = @transform_3, window_bounds = array<i64: 128, 128>}, {pipeline_mode = #tpu.pipeline_mode<synchronous>, transform_indices = @transform_4, window_bounds = array<i64: 1, 128>}, {pipeline_mode = #tpu.pipeline_mode<synchronous>, transform_indices = @transform_5, window_bounds = array<i64: 128, 128>}, {pipeline_mode = #tpu.pipeline_mode<synchronous>, transform_indices = @transform_6, window_bounds = array<i64: 1, 128>}, {pipeline_mode = #tpu.pipeline_mode<synchronous>, transform_indices = @transform_7, window_bounds = array<i64: 128, 128>}, {pipeline_mode = #tpu.pipeline_mode<synchronous>, transform_indices = @transform_8, window_bounds = array<i64: 1, 128>}, {pipeline_mode = #tpu.pipeline_mode<synchronous>, transform_indices = @transform_9, window_bounds = array<i64: 128, 128>}, {pipeline_mode = #tpu.pipeline_mode<synchronous>, transform_indices = @transform_10, window_bounds = array<i64: 1, 128>}, {pipeline_mode = #tpu.pipeline_mode<synchronous>, transform_indices = @transform_11, window_bounds = array<i64: 128, 128>}, {pipeline_mode = #tpu.pipeline_mode<synchronous>, transform_indices = @transform_12, window_bounds = array<i64: 1, 128>}, {pipeline_mode = #tpu.pipeline_mode<synchronous>, transform_indices = @transform_13, window_bounds = array<i64: 128, 128>}, {pipeline_mode = #tpu.pipeline_mode<synchronous>, transform_indices = @transform_14, window_bounds = array<i64: 1, 128>}, {pipeline_mode = #tpu.pipeline_mode<synchronous>, transform_indices = @transform_15, window_bounds = array<i64: 128, 128>}, {pipeline_mode = #tpu.pipeline_mode<synchronous>, transform_indices = @transform_16, window_bounds = array<i64: 1, 128>}, {pipeline_mode = #tpu.pipeline_mode<synchronous>, transform_indices = @transform_17, window_bounds = array<i64: 128, 128>}, {pipeline_mode = #tpu.pipeline_mode<synchronous>, transform_indices = @transform_18, window_bounds = array<i64: 1, 128>}, {pipeline_mode = #tpu.pipeline_mode<synchronous>, transform_indices = @transform_19, window_bounds = array<i64: 128, 1024>}, {pipeline_mode = #tpu.pipeline_mode<synchronous>, transform_indices = @transform_20, window_bounds = array<i64: 1, 1024>}, {transform_indices = @transform_21, window_bounds = array<i64: 8, 1024>}]} {
    %c0 = arith.constant 0 : index
    %c0_0 = arith.constant 0 : index
    %0 = vector.load %arg1[%c0, %c0_0] : memref<8x1024xf32, #tpu.memory_space<vmem>>, vector<8x1024xf32>
    %c0_1 = arith.constant 0 : index
    %c0_2 = arith.constant 0 : index
    %1 = vector.load %arg2[%c0_1, %c0_2] : memref<1024x128xbf16, #tpu.memory_space<vmem>>, vector<1024x128xbf16>
    %c0_3 = arith.constant 0 : index
    %c0_4 = arith.constant 0 : index
    %2 = vector.load %arg3[%c0_3, %c0_4] : memref<1x128xf32, #tpu.memory_space<vmem>>, vector<1x128xf32>
    %3 = arith.truncf %0 : vector<8x1024xf32> to vector<8x1024xbf16>
    %cst = arith.constant dense<0.000000e+00> : vector<8x128xf32>
    %4 = tpu.matmul %3, %1, %cst {dimension_numbers = #tpu.dot_dimension_numbers<[1], [0], [0], [1], [0, 0, 1, 1], [], []>} : vector<8x1024xbf16>, vector<1024x128xbf16>, vector<8x128xf32> -> vector<8x128xf32>
    %5 = vector.broadcast %2 : vector<1x128xf32> to vector<8x128xf32>
    %6 = arith.addf %4, %5 : vector<8x128xf32>
    %cst_5 = arith.constant 0.000000e+00 : f32
    %7 = vector.broadcast %cst_5 : f32 to vector<8x128xf32>
    %8 = arith.maximumf %6, %7 : vector<8x128xf32>
    %c0_6 = arith.constant 0 : index
    %c0_7 = arith.constant 0 : index
    %9 = vector.load %arg4[%c0_6, %c0_7] : memref<128x128xbf16, #tpu.memory_space<vmem>>, vector<128x128xbf16>
    %c0_8 = arith.constant 0 : index
    %c0_9 = arith.constant 0 : index
    %10 = vector.load %arg5[%c0_8, %c0_9] : memref<1x128xf32, #tpu.memory_space<vmem>>, vector<1x128xf32>
    %11 = arith.truncf %8 : vector<8x128xf32> to vector<8x128xbf16>
    %cst_10 = arith.constant dense<0.000000e+00> : vector<8x128xf32>
    %12 = tpu.matmul %11, %9, %cst_10 {dimension_numbers = #tpu.dot_dimension_numbers<[1], [0], [0], [1], [0, 0, 1, 1], [], []>} : vector<8x128xbf16>, vector<128x128xbf16>, vector<8x128xf32> -> vector<8x128xf32>
    %13 = vector.broadcast %10 : vector<1x128xf32> to vector<8x128xf32>
    %14 = arith.addf %12, %13 : vector<8x128xf32>
    %cst_11 = arith.constant 0.000000e+00 : f32
    %15 = vector.broadcast %cst_11 : f32 to vector<8x128xf32>
    %16 = arith.maximumf %14, %15 : vector<8x128xf32>
    %c0_12 = arith.constant 0 : index
    %c0_13 = arith.constant 0 : index
    %17 = vector.load %arg6[%c0_12, %c0_13] : memref<128x128xbf16, #tpu.memory_space<vmem>>, vector<128x128xbf16>
    %c0_14 = arith.constant 0 : index
    %c0_15 = arith.constant 0 : index
    %18 = vector.load %arg7[%c0_14, %c0_15] : memref<1x128xf32, #tpu.memory_space<vmem>>, vector<1x128xf32>
    %19 = arith.truncf %16 : vector<8x128xf32> to vector<8x128xbf16>
    %cst_16 = arith.constant dense<0.000000e+00> : vector<8x128xf32>
    %20 = tpu.matmul %19, %17, %cst_16 {dimension_numbers = #tpu.dot_dimension_numbers<[1], [0], [0], [1], [0, 0, 1, 1], [], []>} : vector<8x128xbf16>, vector<128x128xbf16>, vector<8x128xf32> -> vector<8x128xf32>
    %21 = vector.broadcast %18 : vector<1x128xf32> to vector<8x128xf32>
    %22 = arith.addf %20, %21 : vector<8x128xf32>
    %cst_17 = arith.constant 0.000000e+00 : f32
    %23 = vector.broadcast %cst_17 : f32 to vector<8x128xf32>
    %24 = arith.maximumf %22, %23 : vector<8x128xf32>
    %c0_18 = arith.constant 0 : index
    %c0_19 = arith.constant 0 : index
    %25 = vector.load %arg8[%c0_18, %c0_19] : memref<128x128xbf16, #tpu.memory_space<vmem>>, vector<128x128xbf16>
    %c0_20 = arith.constant 0 : index
    %c0_21 = arith.constant 0 : index
    %26 = vector.load %arg9[%c0_20, %c0_21] : memref<1x128xf32, #tpu.memory_space<vmem>>, vector<1x128xf32>
    %27 = arith.truncf %24 : vector<8x128xf32> to vector<8x128xbf16>
    %cst_22 = arith.constant dense<0.000000e+00> : vector<8x128xf32>
    %28 = tpu.matmul %27, %25, %cst_22 {dimension_numbers = #tpu.dot_dimension_numbers<[1], [0], [0], [1], [0, 0, 1, 1], [], []>} : vector<8x128xbf16>, vector<128x128xbf16>, vector<8x128xf32> -> vector<8x128xf32>
    %29 = vector.broadcast %26 : vector<1x128xf32> to vector<8x128xf32>
    %30 = arith.addf %28, %29 : vector<8x128xf32>
    %cst_23 = arith.constant 0.000000e+00 : f32
    %31 = vector.broadcast %cst_23 : f32 to vector<8x128xf32>
    %32 = arith.maximumf %30, %31 : vector<8x128xf32>
    %c0_24 = arith.constant 0 : index
    %c0_25 = arith.constant 0 : index
    %33 = vector.load %arg10[%c0_24, %c0_25] : memref<128x128xbf16, #tpu.memory_space<vmem>>, vector<128x128xbf16>
    %c0_26 = arith.constant 0 : index
    %c0_27 = arith.constant 0 : index
    %34 = vector.load %arg11[%c0_26, %c0_27] : memref<1x128xf32, #tpu.memory_space<vmem>>, vector<1x128xf32>
    %35 = arith.truncf %32 : vector<8x128xf32> to vector<8x128xbf16>
    %cst_28 = arith.constant dense<0.000000e+00> : vector<8x128xf32>
    %36 = tpu.matmul %35, %33, %cst_28 {dimension_numbers = #tpu.dot_dimension_numbers<[1], [0], [0], [1], [0, 0, 1, 1], [], []>} : vector<8x128xbf16>, vector<128x128xbf16>, vector<8x128xf32> -> vector<8x128xf32>
    %37 = vector.broadcast %34 : vector<1x128xf32> to vector<8x128xf32>
    %38 = arith.addf %36, %37 : vector<8x128xf32>
    %c0_29 = arith.constant 0 : index
    %c0_30 = arith.constant 0 : index
    %39 = vector.load %arg12[%c0_29, %c0_30] : memref<128x128xbf16, #tpu.memory_space<vmem>>, vector<128x128xbf16>
    %c0_31 = arith.constant 0 : index
    %c0_32 = arith.constant 0 : index
    %40 = vector.load %arg13[%c0_31, %c0_32] : memref<1x128xf32, #tpu.memory_space<vmem>>, vector<1x128xf32>
    %41 = arith.truncf %38 : vector<8x128xf32> to vector<8x128xbf16>
    %cst_33 = arith.constant dense<0.000000e+00> : vector<8x128xf32>
    %42 = tpu.matmul %41, %39, %cst_33 {dimension_numbers = #tpu.dot_dimension_numbers<[1], [0], [0], [1], [0, 0, 1, 1], [], []>} : vector<8x128xbf16>, vector<128x128xbf16>, vector<8x128xf32> -> vector<8x128xf32>
    %43 = vector.broadcast %40 : vector<1x128xf32> to vector<8x128xf32>
    %44 = arith.addf %42, %43 : vector<8x128xf32>
    %cst_34 = arith.constant 0.000000e+00 : f32
    %45 = vector.broadcast %cst_34 : f32 to vector<8x128xf32>
    %46 = arith.maximumf %44, %45 : vector<8x128xf32>
    %c0_35 = arith.constant 0 : index
    %c0_36 = arith.constant 0 : index
    %47 = vector.load %arg14[%c0_35, %c0_36] : memref<128x128xbf16, #tpu.memory_space<vmem>>, vector<128x128xbf16>
    %c0_37 = arith.constant 0 : index
    %c0_38 = arith.constant 0 : index
    %48 = vector.load %arg15[%c0_37, %c0_38] : memref<1x128xf32, #tpu.memory_space<vmem>>, vector<1x128xf32>
    %49 = arith.truncf %46 : vector<8x128xf32> to vector<8x128xbf16>
    %cst_39 = arith.constant dense<0.000000e+00> : vector<8x128xf32>
    %50 = tpu.matmul %49, %47, %cst_39 {dimension_numbers = #tpu.dot_dimension_numbers<[1], [0], [0], [1], [0, 0, 1, 1], [], []>} : vector<8x128xbf16>, vector<128x128xbf16>, vector<8x128xf32> -> vector<8x128xf32>
    %51 = vector.broadcast %48 : vector<1x128xf32> to vector<8x128xf32>
    %52 = arith.addf %50, %51 : vector<8x128xf32>
    %cst_40 = arith.constant 0.000000e+00 : f32
    %53 = vector.broadcast %cst_40 : f32 to vector<8x128xf32>
    %54 = arith.maximumf %52, %53 : vector<8x128xf32>
    %c0_41 = arith.constant 0 : index
    %c0_42 = arith.constant 0 : index
    %55 = vector.load %arg16[%c0_41, %c0_42] : memref<128x128xbf16, #tpu.memory_space<vmem>>, vector<128x128xbf16>
    %c0_43 = arith.constant 0 : index
    %c0_44 = arith.constant 0 : index
    %56 = vector.load %arg17[%c0_43, %c0_44] : memref<1x128xf32, #tpu.memory_space<vmem>>, vector<1x128xf32>
    %57 = arith.truncf %54 : vector<8x128xf32> to vector<8x128xbf16>
    %cst_45 = arith.constant dense<0.000000e+00> : vector<8x128xf32>
    %58 = tpu.matmul %57, %55, %cst_45 {dimension_numbers = #tpu.dot_dimension_numbers<[1], [0], [0], [1], [0, 0, 1, 1], [], []>} : vector<8x128xbf16>, vector<128x128xbf16>, vector<8x128xf32> -> vector<8x128xf32>
    %59 = vector.broadcast %56 : vector<1x128xf32> to vector<8x128xf32>
    %60 = arith.addf %58, %59 : vector<8x128xf32>
    %cst_46 = arith.constant 0.000000e+00 : f32
    %61 = vector.broadcast %cst_46 : f32 to vector<8x128xf32>
    %62 = arith.maximumf %60, %61 : vector<8x128xf32>
    %c0_47 = arith.constant 0 : index
    %c0_48 = arith.constant 0 : index
    %63 = vector.load %arg18[%c0_47, %c0_48] : memref<128x128xbf16, #tpu.memory_space<vmem>>, vector<128x128xbf16>
    %c0_49 = arith.constant 0 : index
    %c0_50 = arith.constant 0 : index
    %64 = vector.load %arg19[%c0_49, %c0_50] : memref<1x128xf32, #tpu.memory_space<vmem>>, vector<1x128xf32>
    %65 = arith.truncf %62 : vector<8x128xf32> to vector<8x128xbf16>
    %cst_51 = arith.constant dense<0.000000e+00> : vector<8x128xf32>
    %66 = tpu.matmul %65, %63, %cst_51 {dimension_numbers = #tpu.dot_dimension_numbers<[1], [0], [0], [1], [0, 0, 1, 1], [], []>} : vector<8x128xbf16>, vector<128x128xbf16>, vector<8x128xf32> -> vector<8x128xf32>
    %67 = vector.broadcast %64 : vector<1x128xf32> to vector<8x128xf32>
    %68 = arith.addf %66, %67 : vector<8x128xf32>
    %cst_52 = arith.constant 0.000000e+00 : f32
    %69 = vector.broadcast %cst_52 : f32 to vector<8x128xf32>
    %70 = arith.maximumf %68, %69 : vector<8x128xf32>
    %c0_53 = arith.constant 0 : index
    %c0_54 = arith.constant 0 : index
    %71 = vector.load %arg20[%c0_53, %c0_54] : memref<128x1024xbf16, #tpu.memory_space<vmem>>, vector<128x1024xbf16>
    %c0_55 = arith.constant 0 : index
    %c0_56 = arith.constant 0 : index
    %72 = vector.load %arg21[%c0_55, %c0_56] : memref<1x1024xf32, #tpu.memory_space<vmem>>, vector<1x1024xf32>
    %73 = arith.truncf %70 : vector<8x128xf32> to vector<8x128xbf16>
    %cst_57 = arith.constant dense<0.000000e+00> : vector<8x1024xf32>
    %74 = tpu.matmul %73, %71, %cst_57 {dimension_numbers = #tpu.dot_dimension_numbers<[1], [0], [0], [1], [0, 0, 1, 1], [], []>} : vector<8x128xbf16>, vector<128x1024xbf16>, vector<8x1024xf32> -> vector<8x1024xf32>
    %75 = vector.broadcast %72 : vector<1x1024xf32> to vector<8x1024xf32>
    %76 = arith.addf %74, %75 : vector<8x1024xf32>
    %77 = arith.negf %76 : vector<8x1024xf32>
    %78 = math.exp %77 : vector<8x1024xf32>
    %cst_58 = arith.constant 1.000000e+00 : f32
    %79 = vector.broadcast %cst_58 : f32 to vector<8x1024xf32>
    %80 = arith.addf %79, %78 : vector<8x1024xf32>
    %81 = arith.divf %79, %80 : vector<8x1024xf32>
    %c0_59 = arith.constant 0 : index
    %c0_60 = arith.constant 0 : index
    %82 = vector.load %arg22[%c0_59, %c0_60] : memref<8x1024xf32, #tpu.memory_space<vmem>>, vector<8x1024xf32>
    tpu.vector_store %arg22[%c0_59, %c0_60], %81 {strides = array<i32>} : memref<8x1024xf32, #tpu.memory_space<vmem>>, vector<8x1024xf32>,
    return
  }
  func.func @transform_0(%arg0: i32) -> (i32, i32) {
    %c0_i32 = arith.constant 0 : i32
    %c0_i32_0 = arith.constant 0 : i32
    return %arg0, %c0_i32 : i32, i32
  }
  func.func @transform_1(%arg0: i32) -> (i32, i32) {
    %c0_i32 = arith.constant 0 : i32
    %c0_i32_0 = arith.constant 0 : i32
    %c0_i32_1 = arith.constant 0 : i32
    return %c0_i32, %c0_i32_0 : i32, i32
  }
  func.func @transform_2(%arg0: i32) -> (i32, i32) {
    %c0_i32 = arith.constant 0 : i32
    %c0_i32_0 = arith.constant 0 : i32
    %c0_i32_1 = arith.constant 0 : i32
    return %c0_i32, %c0_i32_0 : i32, i32
  }
  func.func @transform_3(%arg0: i32) -> (i32, i32) {
    %c0_i32 = arith.constant 0 : i32
    %c0_i32_0 = arith.constant 0 : i32
    %c0_i32_1 = arith.constant 0 : i32
    return %c0_i32, %c0_i32_0 : i32, i32
  }
  func.func @transform_4(%arg0: i32) -> (i32, i32) {
    %c0_i32 = arith.constant 0 : i32
    %c0_i32_0 = arith.constant 0 : i32
    %c0_i32_1 = arith.constant 0 : i32
    return %c0_i32, %c0_i32_0 : i32, i32
  }
  func.func @transform_5(%arg0: i32) -> (i32, i32) {
    %c0_i32 = arith.constant 0 : i32
    %c0_i32_0 = arith.constant 0 : i32
    %c0_i32_1 = arith.constant 0 : i32
    return %c0_i32, %c0_i32_0 : i32, i32
  }
  func.func @transform_6(%arg0: i32) -> (i32, i32) {
    %c0_i32 = arith.constant 0 : i32
    %c0_i32_0 = arith.constant 0 : i32
    %c0_i32_1 = arith.constant 0 : i32
    return %c0_i32, %c0_i32_0 : i32, i32
  }
  func.func @transform_7(%arg0: i32) -> (i32, i32) {
    %c0_i32 = arith.constant 0 : i32
    %c0_i32_0 = arith.constant 0 : i32
    %c0_i32_1 = arith.constant 0 : i32
    return %c0_i32, %c0_i32_0 : i32, i32
  }
  func.func @transform_8(%arg0: i32) -> (i32, i32) {
    %c0_i32 = arith.constant 0 : i32
    %c0_i32_0 = arith.constant 0 : i32
    %c0_i32_1 = arith.constant 0 : i32
    return %c0_i32, %c0_i32_0 : i32, i32
  }
  func.func @transform_9(%arg0: i32) -> (i32, i32) {
    %c0_i32 = arith.constant 0 : i32
    %c0_i32_0 = arith.constant 0 : i32
    %c0_i32_1 = arith.constant 0 : i32
    return %c0_i32, %c0_i32_0 : i32, i32
  }
  func.func @transform_10(%arg0: i32) -> (i32, i32) {
    %c0_i32 = arith.constant 0 : i32
    %c0_i32_0 = arith.constant 0 : i32
    %c0_i32_1 = arith.constant 0 : i32
    return %c0_i32, %c0_i32_0 : i32, i32
  }
  func.func @transform_11(%arg0: i32) -> (i32, i32) {
    %c0_i32 = arith.constant 0 : i32
    %c0_i32_0 = arith.constant 0 : i32
    %c0_i32_1 = arith.constant 0 : i32
    return %c0_i32, %c0_i32_0 : i32, i32
  }
  func.func @transform_12(%arg0: i32) -> (i32, i32) {
    %c0_i32 = arith.constant 0 : i32
    %c0_i32_0 = arith.constant 0 : i32
    %c0_i32_1 = arith.constant 0 : i32
    return %c0_i32, %c0_i32_0 : i32, i32
  }
  func.func @transform_13(%arg0: i32) -> (i32, i32) {
    %c0_i32 = arith.constant 0 : i32
    %c0_i32_0 = arith.constant 0 : i32
    %c0_i32_1 = arith.constant 0 : i32
    return %c0_i32, %c0_i32_0 : i32, i32
  }
  func.func @transform_14(%arg0: i32) -> (i32, i32) {
    %c0_i32 = arith.constant 0 : i32
    %c0_i32_0 = arith.constant 0 : i32
    %c0_i32_1 = arith.constant 0 : i32
    return %c0_i32, %c0_i32_0 : i32, i32
  }
  func.func @transform_15(%arg0: i32) -> (i32, i32) {
    %c0_i32 = arith.constant 0 : i32
    %c0_i32_0 = arith.constant 0 : i32
    %c0_i32_1 = arith.constant 0 : i32
    return %c0_i32, %c0_i32_0 : i32, i32
  }
  func.func @transform_16(%arg0: i32) -> (i32, i32) {
    %c0_i32 = arith.constant 0 : i32
    %c0_i32_0 = arith.constant 0 : i32
    %c0_i32_1 = arith.constant 0 : i32
    return %c0_i32, %c0_i32_0 : i32, i32
  }
  func.func @transform_17(%arg0: i32) -> (i32, i32) {
    %c0_i32 = arith.constant 0 : i32
    %c0_i32_0 = arith.constant 0 : i32
    %c0_i32_1 = arith.constant 0 : i32
    return %c0_i32, %c0_i32_0 : i32, i32
  }
  func.func @transform_18(%arg0: i32) -> (i32, i32) {
    %c0_i32 = arith.constant 0 : i32
    %c0_i32_0 = arith.constant 0 : i32
    %c0_i32_1 = arith.constant 0 : i32
    return %c0_i32, %c0_i32_0 : i32, i32
  }
  func.func @transform_19(%arg0: i32) -> (i32, i32) {
    %c0_i32 = arith.constant 0 : i32
    %c0_i32_0 = arith.constant 0 : i32
    %c0_i32_1 = arith.constant 0 : i32
    return %c0_i32, %c0_i32_0 : i32, i32
  }
  func.func @transform_20(%arg0: i32) -> (i32, i32) {
    %c0_i32 = arith.constant 0 : i32
    %c0_i32_0 = arith.constant 0 : i32
    %c0_i32_1 = arith.constant 0 : i32
    return %c0_i32, %c0_i32_0 : i32, i32
  }
  func.func @transform_21(%arg0: i32) -> (i32, i32) {
    %c0_i32 = arith.constant 0 : i32
    %c0_i32_0 = arith.constant 0 : i32
    return %arg0, %c0_i32 : i32, i32
  }
}

</mosaic_0001>

<llo_original>
// kernel: autoencoder_forward.1
$region0: #{autoencoder_forward.1}
  #allocation0 [shape = 'u32[]', space=smem, size = 0x4, offset = 0x4, fixed_abs, tag = 'smem constant byte address 0x4 - core index']
  #allocation1 [shape = 'u32[144,128]{1,0:T(1,128)}', space=vmem, size = 0x12000, scoped, tag = 'internal scratch']
  %s0 = inlined_call_operand.hbm [shape: f32[16,1024], index: 0, kind: input, shape index: {}]
  %s1 = inlined_call_operand.hbm [shape: bf16[1024,128], index: 1, kind: input, shape index: {}]
  %s2 = inlined_call_operand.hbm [shape: f32[1,128], index: 2, kind: input, shape index: {}]
  %s3 = inlined_call_operand.hbm [shape: bf16[128,128], index: 3, kind: input, shape index: {}]
  %s4 = inlined_call_operand.hbm [shape: f32[1,128], index: 4, kind: input, shape index: {}]
  %s5 = inlined_call_operand.hbm [shape: bf16[128,128], index: 5, kind: input, shape index: {}]
  %s6 = inlined_call_operand.hbm [shape: f32[1,128], index: 6, kind: input, shape index: {}]
  %s7 = inlined_call_operand.hbm [shape: bf16[128,128], index: 7, kind: input, shape index: {}]
  %s8 = inlined_call_operand.hbm [shape: f32[1,128], index: 8, kind: input, shape index: {}]
  %s9 = inlined_call_operand.hbm [shape: bf16[128,128], index: 9, kind: input, shape index: {}]
  %s10 = inlined_call_operand.hbm [shape: f32[1,128], index: 10, kind: input, shape index: {}]
  %s11 = inlined_call_operand.hbm [shape: bf16[128,128], index: 11, kind: input, shape index: {}]
  %s12 = inlined_call_operand.hbm [shape: f32[1,128], index: 12, kind: input, shape index: {}]
  %s13 = inlined_call_operand.hbm [shape: bf16[128,128], index: 13, kind: input, shape index: {}]
  %s14 = inlined_call_operand.hbm [shape: f32[1,128], index: 14, kind: input, shape index: {}]
  %s15 = inlined_call_operand.hbm [shape: bf16[128,128], index: 15, kind: input, shape index: {}]
  %s16 = inlined_call_operand.hbm [shape: f32[1,128], index: 16, kind: input, shape index: {}]
  %s17 = inlined_call_operand.vmem [shape: bf16[128,128], index: 17, kind: input, shape index: {}]
  %s18 = inlined_call_operand.vmem [shape: f32[1,128], index: 18, kind: input, shape index: {}]
  %s19 = inlined_call_operand.hbm [shape: bf16[128,1024], index: 19, kind: input, shape index: {}]
  %s20 = inlined_call_operand.vmem [shape: f32[1,1024], index: 20, kind: input, shape index: {}]
  %s21 = inlined_call_operand.hbm [shape: f32[16,1024], index: 21, kind: output, shape index: {}]
  %s22 = sld [smem:[#allocation0]]
  $region189: #{autoencoder_forward.1} parent=0
    _
  %s24 = ssub.s32 1, %s22
  %s25 = scalar_select 0, %s24, %s22
  $region1: #{autoencoder_forward.1} parent=0
    #allocation2 [shape = 'u8[65536]{0}', space=vmem, size = 0x10000, scoped, tag = 'input window, operand 0']
    #allocation3 [shape = 's32[2]{0}', space=sflag, size = 0x8, scoped, tag = 'scoped memory for autoencoder_forward.1']
    #allocation4 [shape = 's32[2]{0}', space=sflag, size = 0x8, scoped, tag = 'scoped memory for autoencoder_forward.1']
    #allocation5 [shape = 'u8[262144]{0}', space=vmem, size = 0x40000, scoped, tag = 'input window, operand 1, single buffered']
    #allocation6 [shape = 's32[1]{0}', space=sflag, size = 0x4, scoped, tag = 'scoped memory for autoencoder_forward.1']
    #allocation7 [shape = 'u8[512]{0}', space=vmem, size = 0x400, scoped, tag = 'input window, operand 2, single buffered']
    #allocation8 [shape = 'u8[32768]{0}', space=vmem, size = 0x8000, scoped, tag = 'input window, operand 3, single buffered']
    #allocation9 [shape = 's32[1]{0}', space=sflag, size = 0x4, scoped, tag = 'scoped memory for autoencoder_forward.1']
    #allocation10 [shape = 'u8[512]{0}', space=vmem, size = 0x400, scoped, tag = 'input window, operand 4, single buffered']
    #allocation11 [shape = 'u8[32768]{0}', space=vmem, size = 0x8000, scoped, tag = 'input window, operand 5, single buffered']
    #allocation12 [shape = 's32[1]{0}', space=sflag, size = 0x4, scoped, tag = 'scoped memory for autoencoder_forward.1']
    #allocation13 [shape = 'u8[512]{0}', space=vmem, size = 0x400, scoped, tag = 'input window, operand 6, single buffered']
    #allocation14 [shape = 'u8[32768]{0}', space=vmem, size = 0x8000, scoped, tag = 'input window, operand 7, single buffered']
    #allocation15 [shape = 's32[1]{0}', space=sflag, size = 0x4, scoped, tag = 'scoped memory for autoencoder_forward.1']
    #allocation16 [shape = 'u8[512]{0}', space=vmem, size = 0x400, scoped, tag = 'input window, operand 8, single buffered']
    #allocation17 [shape = 'u8[32768]{0}', space=vmem, size = 0x8000, scoped, tag = 'input window, operand 9, single buffered']
    #allocation18 [shape = 's32[1]{0}', space=sflag, size = 0x4, scoped, tag = 'scoped memory for autoencoder_forward.1']
    #allocation19 [shape = 'u8[512]{0}', space=vmem, size = 0x400, scoped, tag = 'input window, operand 10, single buffered']
    #allocation20 [shape = 'u8[32768]{0}', space=vmem, size = 0x8000, scoped, tag = 'input window, operand 11, single buffered']
    #allocation21 [shape = 's32[1]{0}', space=sflag, size = 0x4, scoped, tag = 'scoped memory for autoencoder_forward.1']
    #allocation22 [shape = 'u8[512]{0}', space=vmem, size = 0x400, scoped, tag = 'input window, operand 12, single buffered']
    #allocation23 [shape = 'u8[32768]{0}', space=vmem, size = 0x8000, scoped, tag = 'input window, operand 13, single buffered']
    #allocation24 [shape = 's32[1]{0}', space=sflag, size = 0x4, scoped, tag = 'scoped memory for autoencoder_forward.1']
    #allocation25 [shape = 'u8[512]{0}', space=vmem, size = 0x400, scoped, tag = 'input window, operand 14, single buffered']
    #allocation26 [shape = 'u8[32768]{0}', space=vmem, size = 0x8000, scoped, tag = 'input window, operand 15, single buffered']
    #allocation27 [shape = 's32[1]{0}', space=sflag, size = 0x4, scoped, tag = 'scoped memory for autoencoder_forward.1']
    #allocation28 [shape = 'u8[512]{0}', space=vmem, size = 0x400, scoped, tag = 'input window, operand 16, single buffered']
    #allocation29 [shape = 'u8[262144]{0}', space=vmem, size = 0x40000, scoped, tag = 'input window, operand 19, single buffered']
    #allocation30 [shape = 's32[1]{0}', space=sflag, size = 0x4, scoped, tag = 'scoped memory for autoencoder_forward.1']
    #allocation31 [shape = 'u8[65536]{0}', space=vmem, size = 0x10000, scoped, tag = 'output window, operand 0']
    %26 = vsyncpa [#allocation3], 0
    %s27 = scalar_lea.sflag [#allocation3], 1
    %28 = vsyncpa %s27, 0
    %29 = vsyncpa [#allocation6], 0
    %30 = vsyncpa [#allocation9], 0
    %31 = vsyncpa [#allocation12], 0
    %32 = vsyncpa [#allocation15], 0
    %33 = vsyncpa [#allocation18], 0
    %34 = vsyncpa [#allocation21], 0
    %35 = vsyncpa [#allocation24], 0
    %36 = vsyncpa [#allocation27], 0
    %37 = vsyncpa [#allocation30], 0
    %38 = vsyncpa [#allocation4], 0
    %s39 = scalar_lea.sflag [#allocation4], 1
    %40 = vsyncpa %s39, 0
    loop: start=0, step=1, limit=4
    $region2: #{autoencoder_forward.1} parent=1 // loop_pre_header
      _
    $region3: #{autoencoder_forward.1} parent=1 // loop_header
      %s42 = sphi 0, %s46
      %p43 = scmp.ge.s32.totalorder %s42, 4
      %s52 = sphi 0, %s54
      %s55 = sphi 0, %s52
      %s56 = sphi 0, %s55
      %s72 = sphi 0, %s56
      %s76 = sphi 0, %s76
      %s78 = sphi 0, %s76
      %s79 = sphi 0, %s78
      %s93 = sphi 0, %s79
      %s97 = sphi 0, %s97
      %s99 = sphi 0, %s97
      %s100 = sphi 0, %s99
      %s114 = sphi 0, %s100
      %s118 = sphi 0, %s118
      %s120 = sphi 0, %s118
      %s121 = sphi 0, %s120
      %s135 = sphi 0, %s121
      %s139 = sphi 0, %s139
      %s141 = sphi 0, %s139
      %s142 = sphi 0, %s141
      %s156 = sphi 0, %s142
      %s160 = sphi 0, %s160
      %s162 = sphi 0, %s160
      %s163 = sphi 0, %s162
      %s177 = sphi 0, %s163
      %s181 = sphi 0, %s181
      %s183 = sphi 0, %s181
      %s184 = sphi 0, %s183
      %s198 = sphi 0, %s184
      %s202 = sphi 0, %s202
      %s204 = sphi 0, %s202
      %s205 = sphi 0, %s204
      %s219 = sphi 0, %s205
      %s223 = sphi 0, %s223
      %s225 = sphi 0, %s223
      %s226 = sphi 0, %s225
      %s240 = sphi 0, %s226
      %s244 = sphi 0, %s244
      %s246 = sphi 0, %s244
      %s247 = sphi 0, %s246
      %s261 = sphi 0, %s247
      %s265 = sphi 0, %s265
      %s267 = sphi 0, %s265
      %s268 = sphi 0, %s267
      %s282 = sphi 0, %s268
      %s286 = sphi 0, %s286
      %s288 = sphi 0, %s286
      %s289 = sphi 0, %s288
      %s303 = sphi 0, %s289
      %s307 = sphi 0, %s307
      %s309 = sphi 0, %s307
      %s310 = sphi 0, %s309
      %s324 = sphi 0, %s310
      %s328 = sphi 0, %s328
      %s330 = sphi 0, %s328
      %s331 = sphi 0, %s330
      %s345 = sphi 0, %s331
      %s349 = sphi 0, %s349
      %s351 = sphi 0, %s349
      %s352 = sphi 0, %s351
      %s366 = sphi 0, %s352
      %s370 = sphi 0, %s370
      %s372 = sphi 0, %s370
      %s373 = sphi 0, %s372
      %s387 = sphi 0, %s373
      %s391 = sphi 0, %s391
      %s393 = sphi 0, %s391
      %s394 = sphi 0, %s393
      %s408 = sphi 0, %s394
      %s412 = sphi 0, %s412
      %s414 = sphi 0, %s412
      %s415 = sphi 0, %s414
      %s429 = sphi 0, %s415
      %s433 = sphi 0, %s433
      %s435 = sphi 0, %s433
      %s436 = sphi 0, %s435
      %s450 = sphi 0, %s436
      %s454 = sphi 0, %s454
      %s456 = sphi 0, %s454
      %s457 = sphi 0, %s456
      %s471 = sphi 0, %s457
      %s475 = sphi 0, %s475
      %s477 = sphi 0, %s475
      %s478 = sphi 0, %s477
      %s492 = sphi 0, %s478
      %s498 = sphi 0, %s500
      %s501 = sphi 0, %s498
      %s502 = sphi 0, %s501
      %s518 = sphi 0, %s502
    $region4: #{autoencoder_forward.1} parent=1 // loop_header_branch
      %45 = sbr.rel (%p43) target = $region8
    $region5: #{autoencoder_forward.1} parent=1 // loop_body
      %s47 = ssub.s32 %s42, 1
      %s48 = ssub.s32 %s42, 2
      %s49 = sadd.s32 %s42, 1
      %s50 = ssub.s32 %s42, %s49
      %p51 = scmp.eq.s32.totalorder %s50, 0
      %s53 = sadd.s32 %s52, 1
      %s54 = scalar_select %p51, %s52, %s53
      %p57 = pneg %p51
      %p58 = scmp.eq.s32.totalorder %s42, 1
      %p59 = por %p57, %p58
      %p60 = scmp.ne.s32.totalorder %s52, %s55
      %p61 = scmp.eq.s32.totalorder %s42, 0
      %p62 = por %p60, %p61
      %p63 = scmp.ne.s32.totalorder %s52, %s55
      %p64 = scmp.eq.s32.totalorder %s47, 1
      %p65 = por %p63, %p64
      %p66 = scmp.ne.s32.totalorder %s55, %s56
      %p67 = scmp.eq.s32.totalorder %s47, 0
      %p68 = por %p66, %p67
      %p69 = scmp.ne.s32.totalorder %s55, %s56
      %p70 = scmp.eq.s32.totalorder %s48, 1
      %p71 = por %p69, %p70
      %p73 = scmp.ne.s32.totalorder %s56, %s72
      %p74 = scmp.eq.s32.totalorder %s48, 0
      %p75 = por %p73, %p74
      %s77 = sadd.s32 %s76, 1
      %p80 = scmp.eq.s32.totalorder %s42, 1
      %p81 = scmp.ne.s32.totalorder %s76, %s78
      %p82 = scmp.eq.s32.totalorder %s42, 0
      %p83 = por %p81, %p82
      %p84 = scmp.ne.s32.totalorder %s76, %s78
      %p85 = scmp.eq.s32.totalorder %s47, 1
      %p86 = por %p84, %p85
      %p87 = scmp.ne.s32.totalorder %s78, %s79
      %p88 = scmp.eq.s32.totalorder %s47, 0
      %p89 = por %p87, %p88
      %p90 = scmp.ne.s32.totalorder %s78, %s79
      %p91 = scmp.eq.s32.totalorder %s48, 1
      %p92 = por %p90, %p91
      %p94 = scmp.ne.s32.totalorder %s79, %s93
      %p95 = scmp.eq.s32.totalorder %s48, 0
      %p96 = por %p94, %p95
      %s98 = sadd.s32 %s97, 1
      %p101 = scmp.eq.s32.totalorder %s42, 1
      %p102 = scmp.ne.s32.totalorder %s97, %s99
      %p103 = scmp.eq.s32.totalorder %s42, 0
      %p104 = por %p102, %p103
      %p105 = scmp.ne.s32.totalorder %s97, %s99
      %p106 = scmp.eq.s32.totalorder %s47, 1
      %p107 = por %p105, %p106
      %p108 = scmp.ne.s32.totalorder %s99, %s100
      %p109 = scmp.eq.s32.totalorder %s47, 0
      %p110 = por %p108, %p109
      %p111 = scmp.ne.s32.totalorder %s99, %s100
      %p112 = scmp.eq.s32.totalorder %s48, 1
      %p113 = por %p111, %p112
      %p115 = scmp.ne.s32.totalorder %s100, %s114
      %p116 = scmp.eq.s32.totalorder %s48, 0
      %p117 = por %p115, %p116
      %s119 = sadd.s32 %s118, 1
      %p122 = scmp.eq.s32.totalorder %s42, 1
      %p123 = scmp.ne.s32.totalorder %s118, %s120
      %p124 = scmp.eq.s32.totalorder %s42, 0
      %p125 = por %p123, %p124
      %p126 = scmp.ne.s32.totalorder %s118, %s120
      %p127 = scmp.eq.s32.totalorder %s47, 1
      %p128 = por %p126, %p127
      %p129 = scmp.ne.s32.totalorder %s120, %s121
      %p130 = scmp.eq.s32.totalorder %s47, 0
      %p131 = por %p129, %p130
      %p132 = scmp.ne.s32.totalorder %s120, %s121
      %p133 = scmp.eq.s32.totalorder %s48, 1
      %p134 = por %p132, %p133
      %p136 = scmp.ne.s32.totalorder %s121, %s135
      %p137 = scmp.eq.s32.totalorder %s48, 0
      %p138 = por %p136, %p137
      %s140 = sadd.s32 %s139, 1
      %p143 = scmp.eq.s32.totalorder %s42, 1
      %p144 = scmp.ne.s32.totalorder %s139, %s141
      %p145 = scmp.eq.s32.totalorder %s42, 0
      %p146 = por %p144, %p145
      %p147 = scmp.ne.s32.totalorder %s139, %s141
      %p148 = scmp.eq.s32.totalorder %s47, 1
      %p149 = por %p147, %p148
      %p150 = scmp.ne.s32.totalorder %s141, %s142
      %p151 = scmp.eq.s32.totalorder %s47, 0
      %p152 = por %p150, %p151
      %p153 = scmp.ne.s32.totalorder %s141, %s142
      %p154 = scmp.eq.s32.totalorder %s48, 1
      %p155 = por %p153, %p154
      %p157 = scmp.ne.s32.totalorder %s142, %s156
      %p158 = scmp.eq.s32.totalorder %s48, 0
      %p159 = por %p157, %p158
      %s161 = sadd.s32 %s160, 1
      %p164 = scmp.eq.s32.totalorder %s42, 1
      %p165 = scmp.ne.s32.totalorder %s160, %s162
      %p166 = scmp.eq.s32.totalorder %s42, 0
      %p167 = por %p165, %p166
      %p168 = scmp.ne.s32.totalorder %s160, %s162
      %p169 = scmp.eq.s32.totalorder %s47, 1
      %p170 = por %p168, %p169
      %p171 = scmp.ne.s32.totalorder %s162, %s163
      %p172 = scmp.eq.s32.totalorder %s47, 0
      %p173 = por %p171, %p172
      %p174 = scmp.ne.s32.totalorder %s162, %s163
      %p175 = scmp.eq.s32.totalorder %s48, 1
      %p176 = por %p174, %p175
      %p178 = scmp.ne.s32.totalorder %s163, %s177
      %p179 = scmp.eq.s32.totalorder %s48, 0
      %p180 = por %p178, %p179
      %s182 = sadd.s32 %s181, 1
      %p185 = scmp.eq.s32.totalorder %s42, 1
      %p186 = scmp.ne.s32.totalorder %s181, %s183
      %p187 = scmp.eq.s32.totalorder %s42, 0
      %p188 = por %p186, %p187
      %p189 = scmp.ne.s32.totalorder %s181, %s183
      %p190 = scmp.eq.s32.totalorder %s47, 1
      %p191 = por %p189, %p190
      %p192 = scmp.ne.s32.totalorder %s183, %s184
      %p193 = scmp.eq.s32.totalorder %s47, 0
      %p194 = por %p192, %p193
      %p195 = scmp.ne.s32.totalorder %s183, %s184
      %p196 = scmp.eq.s32.totalorder %s48, 1
      %p197 = por %p195, %p196
      %p199 = scmp.ne.s32.totalorder %s184, %s198
      %p200 = scmp.eq.s32.totalorder %s48, 0
      %p201 = por %p199, %p200
      %s203 = sadd.s32 %s202, 1
      %p206 = scmp.eq.s32.totalorder %s42, 1
      %p207 = scmp.ne.s32.totalorder %s202, %s204
      %p208 = scmp.eq.s32.totalorder %s42, 0
      %p209 = por %p207, %p208
      %p210 = scmp.ne.s32.totalorder %s202, %s204
      %p211 = scmp.eq.s32.totalorder %s47, 1
      %p212 = por %p210, %p211
      %p213 = scmp.ne.s32.totalorder %s204, %s205
      %p214 = scmp.eq.s32.totalorder %s47, 0
      %p215 = por %p213, %p214
      %p216 = scmp.ne.s32.totalorder %s204, %s205
      %p217 = scmp.eq.s32.totalorder %s48, 1
      %p218 = por %p216, %p217
      %p220 = scmp.ne.s32.totalorder %s205, %s219
      %p221 = scmp.eq.s32.totalorder %s48, 0
      %p222 = por %p220, %p221
      %s224 = sadd.s32 %s223, 1
      %p227 = scmp.eq.s32.totalorder %s42, 1
      %p228 = scmp.ne.s32.totalorder %s223, %s225
      %p229 = scmp.eq.s32.totalorder %s42, 0
      %p230 = por %p228, %p229
      %p231 = scmp.ne.s32.totalorder %s223, %s225
      %p232 = scmp.eq.s32.totalorder %s47, 1
      %p233 = por %p231, %p232
      %p234 = scmp.ne.s32.totalorder %s225, %s226
      %p235 = scmp.eq.s32.totalorder %s47, 0
      %p236 = por %p234, %p235
      %p237 = scmp.ne.s32.totalorder %s225, %s226
      %p238 = scmp.eq.s32.totalorder %s48, 1
      %p239 = por %p237, %p238
      %p241 = scmp.ne.s32.totalorder %s226, %s240
      %p242 = scmp.eq.s32.totalorder %s48, 0
      %p243 = por %p241, %p242
      %s245 = sadd.s32 %s244, 1
      %p248 = scmp.eq.s32.totalorder %s42, 1
      %p249 = scmp.ne.s32.totalorder %s244, %s246
      %p250 = scmp.eq.s32.totalorder %s42, 0
      %p251 = por %p249, %p250
      %p252 = scmp.ne.s32.totalorder %s244, %s246
      %p253 = scmp.eq.s32.totalorder %s47, 1
      %p254 = por %p252, %p253
      %p255 = scmp.ne.s32.totalorder %s246, %s247
      %p256 = scmp.eq.s32.totalorder %s47, 0
      %p257 = por %p255, %p256
      %p258 = scmp.ne.s32.totalorder %s246, %s247
      %p259 = scmp.eq.s32.totalorder %s48, 1
      %p260 = por %p258, %p259
      %p262 = scmp.ne.s32.totalorder %s247, %s261
      %p263 = scmp.eq.s32.totalorder %s48, 0
      %p264 = por %p262, %p263
      %s266 = sadd.s32 %s265, 1
      %p269 = scmp.eq.s32.totalorder %s42, 1
      %p270 = scmp.ne.s32.totalorder %s265, %s267
      %p271 = scmp.eq.s32.totalorder %s42, 0
      %p272 = por %p270, %p271
      %p273 = scmp.ne.s32.totalorder %s265, %s267
      %p274 = scmp.eq.s32.totalorder %s47, 1
      %p275 = por %p273, %p274
      %p276 = scmp.ne.s32.totalorder %s267, %s268
      %p277 = scmp.eq.s32.totalorder %s47, 0
      %p278 = por %p276, %p277
      %p279 = scmp.ne.s32.totalorder %s267, %s268
      %p280 = scmp.eq.s32.totalorder %s48, 1
      %p281 = por %p279, %p280
      %p283 = scmp.ne.s32.totalorder %s268, %s282
      %p284 = scmp.eq.s32.totalorder %s48, 0
      %p285 = por %p283, %p284
      %s287 = sadd.s32 %s286, 1
      %p290 = scmp.eq.s32.totalorder %s42, 1
      %p291 = scmp.ne.s32.totalorder %s286, %s288
      %p292 = scmp.eq.s32.totalorder %s42, 0
      %p293 = por %p291, %p292
      %p294 = scmp.ne.s32.totalorder %s286, %s288
      %p295 = scmp.eq.s32.totalorder %s47, 1
      %p296 = por %p294, %p295
      %p297 = scmp.ne.s32.totalorder %s288, %s289
      %p298 = scmp.eq.s32.totalorder %s47, 0
      %p299 = por %p297, %p298
      %p300 = scmp.ne.s32.totalorder %s288, %s289
      %p301 = scmp.eq.s32.totalorder %s48, 1
      %p302 = por %p300, %p301
      %p304 = scmp.ne.s32.totalorder %s289, %s303
      %p305 = scmp.eq.s32.totalorder %s48, 0
      %p306 = por %p304, %p305
      %s308 = sadd.s32 %s307, 1
      %p311 = scmp.eq.s32.totalorder %s42, 1
      %p312 = scmp.ne.s32.totalorder %s307, %s309
      %p313 = scmp.eq.s32.totalorder %s42, 0
      %p314 = por %p312, %p313
      %p315 = scmp.ne.s32.totalorder %s307, %s309
      %p316 = scmp.eq.s32.totalorder %s47, 1
      %p317 = por %p315, %p316
      %p318 = scmp.ne.s32.totalorder %s309, %s310
      %p319 = scmp.eq.s32.totalorder %s47, 0
      %p320 = por %p318, %p319
      %p321 = scmp.ne.s32.totalorder %s309, %s310
      %p322 = scmp.eq.s32.totalorder %s48, 1
      %p323 = por %p321, %p322
      %p325 = scmp.ne.s32.totalorder %s310, %s324
      %p326 = scmp.eq.s32.totalorder %s48, 0
      %p327 = por %p325, %p326
      %s329 = sadd.s32 %s328, 1
      %p332 = scmp.eq.s32.totalorder %s42, 1
      %p333 = scmp.ne.s32.totalorder %s328, %s330
      %p334 = scmp.eq.s32.totalorder %s42, 0
      %p335 = por %p333, %p334
      %p336 = scmp.ne.s32.totalorder %s328, %s330
      %p337 = scmp.eq.s32.totalorder %s47, 1
      %p338 = por %p336, %p337
      %p339 = scmp.ne.s32.totalorder %s330, %s331
      %p340 = scmp.eq.s32.totalorder %s47, 0
      %p341 = por %p339, %p340
      %p342 = scmp.ne.s32.totalorder %s330, %s331
      %p343 = scmp.eq.s32.totalorder %s48, 1
      %p344 = por %p342, %p343
      %p346 = scmp.ne.s32.totalorder %s331, %s345
      %p347 = scmp.eq.s32.totalorder %s48, 0
      %p348 = por %p346, %p347
      %s350 = sadd.s32 %s349, 1
      %p353 = scmp.eq.s32.totalorder %s42, 1
      %p354 = scmp.ne.s32.totalorder %s349, %s351
      %p355 = scmp.eq.s32.totalorder %s42, 0
      %p356 = por %p354, %p355
      %p357 = scmp.ne.s32.totalorder %s349, %s351
      %p358 = scmp.eq.s32.totalorder %s47, 1
      %p359 = por %p357, %p358
      %p360 = scmp.ne.s32.totalorder %s351, %s352
      %p361 = scmp.eq.s32.totalorder %s47, 0
      %p362 = por %p360, %p361
      %p363 = scmp.ne.s32.totalorder %s351, %s352
      %p364 = scmp.eq.s32.totalorder %s48, 1
      %p365 = por %p363, %p364
      %p367 = scmp.ne.s32.totalorder %s352, %s366
      %p368 = scmp.eq.s32.totalorder %s48, 0
      %p369 = por %p367, %p368
      %s371 = sadd.s32 %s370, 1
      %p374 = scmp.eq.s32.totalorder %s42, 1
      %p375 = scmp.ne.s32.totalorder %s370, %s372
      %p376 = scmp.eq.s32.totalorder %s42, 0
      %p377 = por %p375, %p376
      %p378 = scmp.ne.s32.totalorder %s370, %s372
      %p379 = scmp.eq.s32.totalorder %s47, 1
      %p380 = por %p378, %p379
      %p381 = scmp.ne.s32.totalorder %s372, %s373
      %p382 = scmp.eq.s32.totalorder %s47, 0
      %p383 = por %p381, %p382
      %p384 = scmp.ne.s32.totalorder %s372, %s373
      %p385 = scmp.eq.s32.totalorder %s48, 1
      %p386 = por %p384, %p385
      %p388 = scmp.ne.s32.totalorder %s373, %s387
      %p389 = scmp.eq.s32.totalorder %s48, 0
      %p390 = por %p388, %p389
      %s392 = sadd.s32 %s391, 1
      %p395 = scmp.eq.s32.totalorder %s42, 1
      %p396 = scmp.ne.s32.totalorder %s391, %s393
      %p397 = scmp.eq.s32.totalorder %s42, 0
      %p398 = por %p396, %p397
      %p399 = scmp.ne.s32.totalorder %s391, %s393
      %p400 = scmp.eq.s32.totalorder %s47, 1
      %p401 = por %p399, %p400
      %p402 = scmp.ne.s32.totalorder %s393, %s394
      %p403 = scmp.eq.s32.totalorder %s47, 0
      %p404 = por %p402, %p403
      %p405 = scmp.ne.s32.totalorder %s393, %s394
      %p406 = scmp.eq.s32.totalorder %s48, 1
      %p407 = por %p405, %p406
      %p409 = scmp.ne.s32.totalorder %s394, %s408
      %p410 = scmp.eq.s32.totalorder %s48, 0
      %p411 = por %p409, %p410
      %s413 = sadd.s32 %s412, 1
      %p416 = scmp.eq.s32.totalorder %s42, 1
      %p417 = scmp.ne.s32.totalorder %s412, %s414
      %p418 = scmp.eq.s32.totalorder %s42, 0
      %p419 = por %p417, %p418
      %p420 = scmp.ne.s32.totalorder %s412, %s414
      %p421 = scmp.eq.s32.totalorder %s47, 1
      %p422 = por %p420, %p421
      %p423 = scmp.ne.s32.totalorder %s414, %s415
      %p424 = scmp.eq.s32.totalorder %s47, 0
      %p425 = por %p423, %p424
      %p426 = scmp.ne.s32.totalorder %s414, %s415
      %p427 = scmp.eq.s32.totalorder %s48, 1
      %p428 = por %p426, %p427
      %p430 = scmp.ne.s32.totalorder %s415, %s429
      %p431 = scmp.eq.s32.totalorder %s48, 0
      %p432 = por %p430, %p431
      %s434 = sadd.s32 %s433, 1
      %p437 = scmp.eq.s32.totalorder %s42, 1
      %p438 = scmp.ne.s32.totalorder %s433, %s435
      %p439 = scmp.eq.s32.totalorder %s42, 0
      %p440 = por %p438, %p439
      %p441 = scmp.ne.s32.totalorder %s433, %s435
      %p442 = scmp.eq.s32.totalorder %s47, 1
      %p443 = por %p441, %p442
      %p444 = scmp.ne.s32.totalorder %s435, %s436
      %p445 = scmp.eq.s32.totalorder %s47, 0
      %p446 = por %p444, %p445
      %p447 = scmp.ne.s32.totalorder %s435, %s436
      %p448 = scmp.eq.s32.totalorder %s48, 1
      %p449 = por %p447, %p448
      %p451 = scmp.ne.s32.totalorder %s436, %s450
      %p452 = scmp.eq.s32.totalorder %s48, 0
      %p453 = por %p451, %p452
      %s455 = sadd.s32 %s454, 1
      %p458 = scmp.eq.s32.totalorder %s42, 1
      %p459 = scmp.ne.s32.totalorder %s454, %s456
      %p460 = scmp.eq.s32.totalorder %s42, 0
      %p461 = por %p459, %p460
      %p462 = scmp.ne.s32.totalorder %s454, %s456
      %p463 = scmp.eq.s32.totalorder %s47, 1
      %p464 = por %p462, %p463
      %p465 = scmp.ne.s32.totalorder %s456, %s457
      %p466 = scmp.eq.s32.totalorder %s47, 0
      %p467 = por %p465, %p466
      %p468 = scmp.ne.s32.totalorder %s456, %s457
      %p469 = scmp.eq.s32.totalorder %s48, 1
      %p470 = por %p468, %p469
      %p472 = scmp.ne.s32.totalorder %s457, %s471
      %p473 = scmp.eq.s32.totalorder %s48, 0
      %p474 = por %p472, %p473
      %s476 = sadd.s32 %s475, 1
      %p479 = scmp.eq.s32.totalorder %s42, 1
      %p480 = scmp.ne.s32.totalorder %s475, %s477
      %p481 = scmp.eq.s32.totalorder %s42, 0
      %p482 = por %p480, %p481
      %p483 = scmp.ne.s32.totalorder %s475, %s477
      %p484 = scmp.eq.s32.totalorder %s47, 1
      %p485 = por %p483, %p484
      %p486 = scmp.ne.s32.totalorder %s477, %s478
      %p487 = scmp.eq.s32.totalorder %s47, 0
      %p488 = por %p486, %p487
      %p489 = scmp.ne.s32.totalorder %s477, %s478
      %p490 = scmp.eq.s32.totalorder %s48, 1
      %p491 = por %p489, %p490
      %p493 = scmp.ne.s32.totalorder %s478, %s492
      %p494 = scmp.eq.s32.totalorder %s48, 0
      %p495 = por %p493, %p494
      %s496 = ssub.s32 %s42, %s49
      %p497 = scmp.eq.s32.totalorder %s496, 0
      %s499 = sadd.s32 %s498, 1
      %s500 = scalar_select %p497, %s498, %s499
      %p503 = pneg %p497
      %p504 = scmp.eq.s32.totalorder %s42, 1
      %p505 = por %p503, %p504
      %p506 = scmp.ne.s32.totalorder %s498, %s501
      %p507 = scmp.eq.s32.totalorder %s42, 0
      %p508 = por %p506, %p507
      %p509 = scmp.ne.s32.totalorder %s498, %s501
      %p510 = scmp.eq.s32.totalorder %s47, 1
      %p511 = por %p509, %p510
      %p512 = scmp.ne.s32.totalorder %s501, %s502
      %p513 = scmp.eq.s32.totalorder %s47, 0
      %p514 = por %p512, %p513
      %p515 = scmp.ne.s32.totalorder %s501, %s502
      %p516 = scmp.eq.s32.totalorder %s48, 1
      %p517 = por %p515, %p516
      %p519 = scmp.ne.s32.totalorder %s502, %s518
      %p520 = scmp.eq.s32.totalorder %s48, 0
      %p521 = por %p519, %p520
      %p522 = scmp.le.s32.totalorder 1, %s42
      %p523 = scmp.lt.s32.totalorder %s42, 3
      %p524 = pnand %p522, %p523
      %p525 = pneg %p524
      // Predicated region
      $region9: #{autoencoder_forward.1} parent=5 // pred_check
        _
      $region10: #{autoencoder_forward.1} parent=5 // pred_check_branch
        %527 = sbr.rel (%p524) target = $region12
      $region11: #{autoencoder_forward.1} parent=5 // pred_region
        %s528 = ssub.s32 %s42, 1
        // Predicated region
        $region13: #{autoencoder_forward.1} parent=11 // pred_check
          %p529 = pneg %p89
        $region14: #{autoencoder_forward.1} parent=11 // pred_check_branch
          %531 = sbr.rel (%p529) target = $region16
        $region15: #{autoencoder_forward.1} parent=11 // pred_region
          %s533 = ssub.s32 8192, 8192
          %534 = vsyncadd [#allocation6], %s533
          %s535 = sshll.u32 [#allocation5], 4
          %s536 = int_to_ptr.vmem [resolvable:$true] %s535
          %541 = dma.hbm_to_vmem [thread:$0]  %s1, 8192, %s536, [#allocation6], 64, 64, 4
        $region16: #{autoencoder_forward.1} parent=11 // pred_fallthru
          _
        // Predicated region
        $region17: #{autoencoder_forward.1} parent=11 // pred_check
          %p542 = pneg %p110
        $region18: #{autoencoder_forward.1} parent=11 // pred_check_branch
          %544 = sbr.rel (%p542) target = $region20
        $region19: #{autoencoder_forward.1} parent=11 // pred_region
          %s546 = ssub.s32 16, 16
          %547 = vsyncadd [#allocation6], %s546
          %s549 = sshll.u32 [#allocation7], 4
          %s550 = int_to_ptr.vmem [resolvable:$true] %s549
          %552 = dma.hbm_to_vmem [thread:$0]  %s2, 16, %s550, [#allocation6]
        $region20: #{autoencoder_forward.1} parent=11 // pred_fallthru
          _
        // Predicated region
        $region21: #{autoencoder_forward.1} parent=11 // pred_check
          %p553 = pneg %p131
        $region22: #{autoencoder_forward.1} parent=11 // pred_check_branch
          %555 = sbr.rel (%p553) target = $region24
        $region23: #{autoencoder_forward.1} parent=11 // pred_region
          %s557 = ssub.s32 1024, 1024
          %558 = vsyncadd [#allocation9], %s557
          %s559 = sshll.u32 [#allocation8], 4
          %s560 = int_to_ptr.vmem [resolvable:$true] %s559
          %565 = dma.hbm_to_vmem [thread:$0]  %s3, 1024, %s560, [#allocation9], 64, 64, 4
        $region24: #{autoencoder_forward.1} parent=11 // pred_fallthru
          _
        // Predicated region
        $region25: #{autoencoder_forward.1} parent=11 // pred_check
          %p566 = pneg %p152
        $region26: #{autoencoder_forward.1} parent=11 // pred_check_branch
          %568 = sbr.rel (%p566) target = $region28
        $region27: #{autoencoder_forward.1} parent=11 // pred_region
          %s570 = ssub.s32 16, 16
          %571 = vsyncadd [#allocation9], %s570
          %s573 = sshll.u32 [#allocation10], 4
          %s574 = int_to_ptr.vmem [resolvable:$true] %s573
          %576 = dma.hbm_to_vmem [thread:$0]  %s4, 16, %s574, [#allocation9]
        $region28: #{autoencoder_forward.1} parent=11 // pred_fallthru
          _
        // Predicated region
        $region29: #{autoencoder_forward.1} parent=11 // pred_check
          %p577 = pneg %p173
        $region30: #{autoencoder_forward.1} parent=11 // pred_check_branch
          %579 = sbr.rel (%p577) target = $region32
        $region31: #{autoencoder_forward.1} parent=11 // pred_region
          %s581 = ssub.s32 1024, 1024
          %582 = vsyncadd [#allocation12], %s581
          %s583 = sshll.u32 [#allocation11], 4
          %s584 = int_to_ptr.vmem [resolvable:$true] %s583
          %589 = dma.hbm_to_vmem [thread:$0]  %s5, 1024, %s584, [#allocation12], 64, 64, 4
        $region32: #{autoencoder_forward.1} parent=11 // pred_fallthru
          _
        // Predicated region
        $region33: #{autoencoder_forward.1} parent=11 // pred_check
          %p590 = pneg %p194
        $region34: #{autoencoder_forward.1} parent=11 // pred_check_branch
          %592 = sbr.rel (%p590) target = $region36
        $region35: #{autoencoder_forward.1} parent=11 // pred_region
          %s594 = ssub.s32 16, 16
          %595 = vsyncadd [#allocation12], %s594
          %s597 = sshll.u32 [#allocation13], 4
          %s598 = int_to_ptr.vmem [resolvable:$true] %s597
          %600 = dma.hbm_to_vmem [thread:$0]  %s6, 16, %s598, [#allocation12]
        $region36: #{autoencoder_forward.1} parent=11 // pred_fallthru
          _
        // Predicated region
        $region37: #{autoencoder_forward.1} parent=11 // pred_check
          %p601 = pneg %p215
        $region38: #{autoencoder_forward.1} parent=11 // pred_check_branch
          %603 = sbr.rel (%p601) target = $region40
        $region39: #{autoencoder_forward.1} parent=11 // pred_region
          %s605 = ssub.s32 1024, 1024
          %606 = vsyncadd [#allocation15], %s605
          %s607 = sshll.u32 [#allocation14], 4
          %s608 = int_to_ptr.vmem [resolvable:$true] %s607
          %613 = dma.hbm_to_vmem [thread:$0]  %s7, 1024, %s608, [#allocation15], 64, 64, 4
        $region40: #{autoencoder_forward.1} parent=11 // pred_fallthru
          _
        // Predicated region
        $region41: #{autoencoder_forward.1} parent=11 // pred_check
          %p614 = pneg %p236
        $region42: #{autoencoder_forward.1} parent=11 // pred_check_branch
          %616 = sbr.rel (%p614) target = $region44
        $region43: #{autoencoder_forward.1} parent=11 // pred_region
          %s618 = ssub.s32 16, 16
          %619 = vsyncadd [#allocation15], %s618
          %s621 = sshll.u32 [#allocation16], 4
          %s622 = int_to_ptr.vmem [resolvable:$true] %s621
          %624 = dma.hbm_to_vmem [thread:$0]  %s8, 16, %s622, [#allocation15]
        $region44: #{autoencoder_forward.1} parent=11 // pred_fallthru
          _
        // Predicated region
        $region45: #{autoencoder_forward.1} parent=11 // pred_check
          %p625 = pneg %p257
        $region46: #{autoencoder_forward.1} parent=11 // pred_check_branch
          %627 = sbr.rel (%p625) target = $region48
        $region47: #{autoencoder_forward.1} parent=11 // pred_region
          %s629 = ssub.s32 1024, 1024
          %630 = vsyncadd [#allocation18], %s629
          %s631 = sshll.u32 [#allocation17], 4
          %s632 = int_to_ptr.vmem [resolvable:$true] %s631
          %637 = dma.hbm_to_vmem [thread:$0]  %s9, 1024, %s632, [#allocation18], 64, 64, 4
        $region48: #{autoencoder_forward.1} parent=11 // pred_fallthru
          _
        // Predicated region
        $region49: #{autoencoder_forward.1} parent=11 // pred_check
          %p638 = pneg %p278
        $region50: #{autoencoder_forward.1} parent=11 // pred_check_branch
          %640 = sbr.rel (%p638) target = $region52
        $region51: #{autoencoder_forward.1} parent=11 // pred_region
          %s642 = ssub.s32 16, 16
          %643 = vsyncadd [#allocation18], %s642
          %s645 = sshll.u32 [#allocation19], 4
          %s646 = int_to_ptr.vmem [resolvable:$true] %s645
          %648 = dma.hbm_to_vmem [thread:$0]  %s10, 16, %s646, [#allocation18]
        $region52: #{autoencoder_forward.1} parent=11 // pred_fallthru
          _
        // Predicated region
        $region53: #{autoencoder_forward.1} parent=11 // pred_check
          %p649 = pneg %p299
        $region54: #{autoencoder_forward.1} parent=11 // pred_check_branch
          %651 = sbr.rel (%p649) target = $region56
        $region55: #{autoencoder_forward.1} parent=11 // pred_region
          %s653 = ssub.s32 1024, 1024
          %654 = vsyncadd [#allocation21], %s653
          %s655 = sshll.u32 [#allocation20], 4
          %s656 = int_to_ptr.vmem [resolvable:$true] %s655
          %661 = dma.hbm_to_vmem [thread:$0]  %s11, 1024, %s656, [#allocation21], 64, 64, 4
        $region56: #{autoencoder_forward.1} parent=11 // pred_fallthru
          _
        // Predicated region
        $region57: #{autoencoder_forward.1} parent=11 // pred_check
          %p662 = pneg %p320
        $region58: #{autoencoder_forward.1} parent=11 // pred_check_branch
          %664 = sbr.rel (%p662) target = $region60
        $region59: #{autoencoder_forward.1} parent=11 // pred_region
          %s666 = ssub.s32 16, 16
          %667 = vsyncadd [#allocation21], %s666
          %s669 = sshll.u32 [#allocation22], 4
          %s670 = int_to_ptr.vmem [resolvable:$true] %s669
          %672 = dma.hbm_to_vmem [thread:$0]  %s12, 16, %s670, [#allocation21]
        $region60: #{autoencoder_forward.1} parent=11 // pred_fallthru
          _
        // Predicated region
        $region61: #{autoencoder_forward.1} parent=11 // pred_check
          %p673 = pneg %p341
        $region62: #{autoencoder_forward.1} parent=11 // pred_check_branch
          %675 = sbr.rel (%p673) target = $region64
        $region63: #{autoencoder_forward.1} parent=11 // pred_region
          %s677 = ssub.s32 1024, 1024
          %678 = vsyncadd [#allocation24], %s677
          %s679 = sshll.u32 [#allocation23], 4
          %s680 = int_to_ptr.vmem [resolvable:$true] %s679
          %685 = dma.hbm_to_vmem [thread:$0]  %s13, 1024, %s680, [#allocation24], 64, 64, 4
        $region64: #{autoencoder_forward.1} parent=11 // pred_fallthru
          _
        // Predicated region
        $region65: #{autoencoder_forward.1} parent=11 // pred_check
          %p686 = pneg %p362
        $region66: #{autoencoder_forward.1} parent=11 // pred_check_branch
          %688 = sbr.rel (%p686) target = $region68
        $region67: #{autoencoder_forward.1} parent=11 // pred_region
          %s690 = ssub.s32 16, 16
          %691 = vsyncadd [#allocation24], %s690
          %s693 = sshll.u32 [#allocation25], 4
          %s694 = int_to_ptr.vmem [resolvable:$true] %s693
          %696 = dma.hbm_to_vmem [thread:$0]  %s14, 16, %s694, [#allocation24]
        $region68: #{autoencoder_forward.1} parent=11 // pred_fallthru
          _
        // Predicated region
        $region69: #{autoencoder_forward.1} parent=11 // pred_check
          %p697 = pneg %p383
        $region70: #{autoencoder_forward.1} parent=11 // pred_check_branch
          %699 = sbr.rel (%p697) target = $region72
        $region71: #{autoencoder_forward.1} parent=11 // pred_region
          %s701 = ssub.s32 1024, 1024
          %702 = vsyncadd [#allocation27], %s701
          %s703 = sshll.u32 [#allocation26], 4
          %s704 = int_to_ptr.vmem [resolvable:$true] %s703
          %709 = dma.hbm_to_vmem [thread:$0]  %s15, 1024, %s704, [#allocation27], 64, 64, 4
        $region72: #{autoencoder_forward.1} parent=11 // pred_fallthru
          _
        // Predicated region
        $region73: #{autoencoder_forward.1} parent=11 // pred_check
          %p710 = pneg %p404
        $region74: #{autoencoder_forward.1} parent=11 // pred_check_branch
          %712 = sbr.rel (%p710) target = $region76
        $region75: #{autoencoder_forward.1} parent=11 // pred_region
          %s714 = ssub.s32 16, 16
          %715 = vsyncadd [#allocation27], %s714
          %s717 = sshll.u32 [#allocation28], 4
          %s718 = int_to_ptr.vmem [resolvable:$true] %s717
          %720 = dma.hbm_to_vmem [thread:$0]  %s16, 16, %s718, [#allocation27]
        $region76: #{autoencoder_forward.1} parent=11 // pred_fallthru
          _
        // Predicated region
        $region77: #{autoencoder_forward.1} parent=11 // pred_check
          %p721 = pneg %p425
        $region78: #{autoencoder_forward.1} parent=11 // pred_check_branch
          %723 = sbr.rel (%p721) target = $region80
        $region79: #{autoencoder_forward.1} parent=11 // pred_region
          _
        $region80: #{autoencoder_forward.1} parent=11 // pred_fallthru
          _
        // Predicated region
        $region81: #{autoencoder_forward.1} parent=11 // pred_check
          %p724 = pneg %p446
        $region82: #{autoencoder_forward.1} parent=11 // pred_check_branch
          %726 = sbr.rel (%p724) target = $region84
        $region83: #{autoencoder_forward.1} parent=11 // pred_region
          _
        $region84: #{autoencoder_forward.1} parent=11 // pred_fallthru
          _
        // Predicated region
        $region85: #{autoencoder_forward.1} parent=11 // pred_check
          %p727 = pneg %p467
        $region86: #{autoencoder_forward.1} parent=11 // pred_check_branch
          %729 = sbr.rel (%p727) target = $region88
        $region87: #{autoencoder_forward.1} parent=11 // pred_region
          %s731 = ssub.s32 8192, 8192
          %732 = vsyncadd [#allocation30], %s731
          %s733 = sshll.u32 [#allocation29], 4
          %s734 = int_to_ptr.vmem [resolvable:$true] %s733
          %739 = dma.hbm_to_vmem [thread:$0]  %s19, 8192, %s734, [#allocation30], 512, 512, 32
        $region88: #{autoencoder_forward.1} parent=11 // pred_fallthru
          _
        // Predicated region
        $region89: #{autoencoder_forward.1} parent=11 // pred_check
          %p740 = pneg %p488
        $region90: #{autoencoder_forward.1} parent=11 // pred_check_branch
          %742 = sbr.rel (%p740) target = $region92
        $region91: #{autoencoder_forward.1} parent=11 // pred_region
          _
        $region92: #{autoencoder_forward.1} parent=11 // pred_fallthru
          _
      $region12: #{autoencoder_forward.1} parent=5 // pred_fallthru
        _
      %p743 = scmp.lt.s32.totalorder %s42, 2
      // Predicated region
      $region93: #{autoencoder_forward.1} parent=5 // pred_check
        %p744 = pneg %p743
      $region94: #{autoencoder_forward.1} parent=5 // pred_check_branch
        %746 = sbr.rel (%p744) target = $region96
      $region95: #{autoencoder_forward.1} parent=5 // pred_region
        // Predicated region
        $region97: #{autoencoder_forward.1} parent=95 // pred_check
          %p747 = pneg %p62
        $region98: #{autoencoder_forward.1} parent=95 // pred_check_branch
          %749 = sbr.rel (%p747) target = $region100
        $region99: #{autoencoder_forward.1} parent=95 // pred_region
          %s750 = sand.u32 %s52, 1
          %s751 = scalar_lea.sflag [#allocation3], %s750
          %s752 = sand.u32 %s52, 1
          %s753 = smul.addr %s752, 64
          %s754 = scalar_lea.vmem [#allocation2], %s753
          %s756 = ssub.s32 1024, 1024
          %757 = vsyncadd %s751, %s756
          %s758 = smul.addr %s42, 8
          %s759 = smul.addr %s758, 128
          %s760 = scalar_lea.hbm %s0, %s759
          %s762 = sshll.u32 %s754, 4
          %s763 = int_to_ptr.vmem [resolvable:$true] %s762
          %765 = dma.hbm_to_vmem [thread:$0]  %s760, 1024, %s763, %s751
        $region100: #{autoencoder_forward.1} parent=95 // pred_fallthru
          _
      $region96: #{autoencoder_forward.1} parent=5 // pred_fallthru
        _
      %p766 = scmp.le.s32.totalorder 1, %s42
      %p767 = scmp.lt.s32.totalorder %s42, 3
      %p768 = pnand %p766, %p767
      %p769 = pneg %p768
      // Predicated region
      $region101: #{autoencoder_forward.1} parent=5 // pred_check
        _
      $region102: #{autoencoder_forward.1} parent=5 // pred_check_branch
        %771 = sbr.rel (%p768) target = $region104
      $region103: #{autoencoder_forward.1} parent=5 // pred_region
        %s772 = ssub.s32 %s42, 1
        %s773 = sand.u32 %s55, 1
        %s774 = scalar_lea.sflag [#allocation3], %s773
        %s775 = sand.u32 %s55, 1
        %s776 = smul.addr %s775, 64
        %s777 = scalar_lea.vmem [#allocation2], %s776
        // Predicated region
        $region105: #{autoencoder_forward.1} parent=103 // pred_check
          %p778 = pneg %p68
        $region106: #{autoencoder_forward.1} parent=103 // pred_check_branch
          %780 = sbr.rel (%p778) target = $region108
        $region107: #{autoencoder_forward.1} parent=103 // pred_region
          %781 = dma.done %s774, 1024
        $region108: #{autoencoder_forward.1} parent=103 // pred_fallthru
          _
        // Predicated region
        $region109: #{autoencoder_forward.1} parent=103 // pred_check
          %p782 = pneg %p89
        $region110: #{autoencoder_forward.1} parent=103 // pred_check_branch
          %784 = sbr.rel (%p782) target = $region112
        $region111: #{autoencoder_forward.1} parent=103 // pred_region
          %785 = dma.done [#allocation6], 8192
        $region112: #{autoencoder_forward.1} parent=103 // pred_fallthru
          _
        // Predicated region
        $region113: #{autoencoder_forward.1} parent=103 // pred_check
          %p786 = pneg %p110
        $region114: #{autoencoder_forward.1} parent=103 // pred_check_branch
          %788 = sbr.rel (%p786) target = $region116
        $region115: #{autoencoder_forward.1} parent=103 // pred_region
          %789 = dma.done [#allocation6], 16
        $region116: #{autoencoder_forward.1} parent=103 // pred_fallthru
          _
        // Predicated region
        $region117: #{autoencoder_forward.1} parent=103 // pred_check
          %p790 = pneg %p131
        $region118: #{autoencoder_forward.1} parent=103 // pred_check_branch
          %792 = sbr.rel (%p790) target = $region120
        $region119: #{autoencoder_forward.1} parent=103 // pred_region
          %793 = dma.done [#allocation9], 1024
        $region120: #{autoencoder_forward.1} parent=103 // pred_fallthru
          _
        // Predicated region
        $region121: #{autoencoder_forward.1} parent=103 // pred_check
          %p794 = pneg %p152
        $region122: #{autoencoder_forward.1} parent=103 // pred_check_branch
          %796 = sbr.rel (%p794) target = $region124
        $region123: #{autoencoder_forward.1} parent=103 // pred_region
          %797 = dma.done [#allocation9], 16
        $region124: #{autoencoder_forward.1} parent=103 // pred_fallthru
          _
        // Predicated region
        $region125: #{autoencoder_forward.1} parent=103 // pred_check
          %p798 = pneg %p173
        $region126: #{autoencoder_forward.1} parent=103 // pred_check_branch
          %800 = sbr.rel (%p798) target = $region128
        $region127: #{autoencoder_forward.1} parent=103 // pred_region
          %801 = dma.done [#allocation12], 1024
        $region128: #{autoencoder_forward.1} parent=103 // pred_fallthru
          _
        // Predicated region
        $region129: #{autoencoder_forward.1} parent=103 // pred_check
          %p802 = pneg %p194
        $region130: #{autoencoder_forward.1} parent=103 // pred_check_branch
          %804 = sbr.rel (%p802) target = $region132
        $region131: #{autoencoder_forward.1} parent=103 // pred_region
          %805 = dma.done [#allocation12], 16
        $region132: #{autoencoder_forward.1} parent=103 // pred_fallthru
          _
        // Predicated region
        $region133: #{autoencoder_forward.1} parent=103 // pred_check
          %p806 = pneg %p215
        $region134: #{autoencoder_forward.1} parent=103 // pred_check_branch
          %808 = sbr.rel (%p806) target = $region136
        $region135: #{autoencoder_forward.1} parent=103 // pred_region
          %809 = dma.done [#allocation15], 1024
        $region136: #{autoencoder_forward.1} parent=103 // pred_fallthru
          _
        // Predicated region
        $region137: #{autoencoder_forward.1} parent=103 // pred_check
          %p810 = pneg %p236
        $region138: #{autoencoder_forward.1} parent=103 // pred_check_branch
          %812 = sbr.rel (%p810) target = $region140
        $region139: #{autoencoder_forward.1} parent=103 // pred_region
          %813 = dma.done [#allocation15], 16
        $region140: #{autoencoder_forward.1} parent=103 // pred_fallthru
          _
        // Predicated region
        $region141: #{autoencoder_forward.1} parent=103 // pred_check
          %p814 = pneg %p257
        $region142: #{autoencoder_forward.1} parent=103 // pred_check_branch
          %816 = sbr.rel (%p814) target = $region144
        $region143: #{autoencoder_forward.1} parent=103 // pred_region
          %817 = dma.done [#allocation18], 1024
        $region144: #{autoencoder_forward.1} parent=103 // pred_fallthru
          _
        // Predicated region
        $region145: #{autoencoder_forward.1} parent=103 // pred_check
          %p818 = pneg %p278
        $region146: #{autoencoder_forward.1} parent=103 // pred_check_branch
          %820 = sbr.rel (%p818) target = $region148
        $region147: #{autoencoder_forward.1} parent=103 // pred_region
          %821 = dma.done [#allocation18], 16
        $region148: #{autoencoder_forward.1} parent=103 // pred_fallthru
          _
        // Predicated region
        $region149: #{autoencoder_forward.1} parent=103 // pred_check
          %p822 = pneg %p299
        $region150: #{autoencoder_forward.1} parent=103 // pred_check_branch
          %824 = sbr.rel (%p822) target = $region152
        $region151: #{autoencoder_forward.1} parent=103 // pred_region
          %825 = dma.done [#allocation21], 1024
        $region152: #{autoencoder_forward.1} parent=103 // pred_fallthru
          _
        // Predicated region
        $region153: #{autoencoder_forward.1} parent=103 // pred_check
          %p826 = pneg %p320
        $region154: #{autoencoder_forward.1} parent=103 // pred_check_branch
          %828 = sbr.rel (%p826) target = $region156
        $region155: #{autoencoder_forward.1} parent=103 // pred_region
          %829 = dma.done [#allocation21], 16
        $region156: #{autoencoder_forward.1} parent=103 // pred_fallthru
          _
        // Predicated region
        $region157: #{autoencoder_forward.1} parent=103 // pred_check
          %p830 = pneg %p341
        $region158: #{autoencoder_forward.1} parent=103 // pred_check_branch
          %832 = sbr.rel (%p830) target = $region160
        $region159: #{autoencoder_forward.1} parent=103 // pred_region
          %833 = dma.done [#allocation24], 1024
        $region160: #{autoencoder_forward.1} parent=103 // pred_fallthru
          _
        // Predicated region
        $region161: #{autoencoder_forward.1} parent=103 // pred_check
          %p834 = pneg %p362
        $region162: #{autoencoder_forward.1} parent=103 // pred_check_branch
          %836 = sbr.rel (%p834) target = $region164
        $region163: #{autoencoder_forward.1} parent=103 // pred_region
          %837 = dma.done [#allocation24], 16
        $region164: #{autoencoder_forward.1} parent=103 // pred_fallthru
          _
        // Predicated region
        $region165: #{autoencoder_forward.1} parent=103 // pred_check
          %p838 = pneg %p383
        $region166: #{autoencoder_forward.1} parent=103 // pred_check_branch
          %840 = sbr.rel (%p838) target = $region168
        $region167: #{autoencoder_forward.1} parent=103 // pred_region
          %841 = dma.done [#allocation27], 1024
        $region168: #{autoencoder_forward.1} parent=103 // pred_fallthru
          _
        // Predicated region
        $region169: #{autoencoder_forward.1} parent=103 // pred_check
          %p842 = pneg %p404
        $region170: #{autoencoder_forward.1} parent=103 // pred_check_branch
          %844 = sbr.rel (%p842) target = $region172
        $region171: #{autoencoder_forward.1} parent=103 // pred_region
          %845 = dma.done [#allocation27], 16
        $region172: #{autoencoder_forward.1} parent=103 // pred_fallthru
          _
        // Predicated region
        $region173: #{autoencoder_forward.1} parent=103 // pred_check
          %p846 = pneg %p467
        $region174: #{autoencoder_forward.1} parent=103 // pred_check_branch
          %848 = sbr.rel (%p846) target = $region176
        $region175: #{autoencoder_forward.1} parent=103 // pred_region
          %849 = dma.done [#allocation30], 8192
        $region176: #{autoencoder_forward.1} parent=103 // pred_fallthru
          _
        %s850 = sand.u32 %s55, 1
        %s851 = scalar_lea.sflag [#allocation3], %s850
        %s852 = sand.u32 %s55, 1
        %s853 = smul.addr %s852, 64
        %s854 = scalar_lea.vmem [#allocation2], %s853
        %p855 = pneg %p68
        %p856 = pneg %p65
        %p857 = pneg %p89
        %p858 = pneg %p86
        %p859 = pneg %p110
        %p860 = pneg %p107
        %p861 = pneg %p131
        %p862 = pneg %p128
        %p863 = pneg %p152
        %p864 = pneg %p149
        %p865 = pneg %p173
        %p866 = pneg %p170
        %p867 = pneg %p194
        %p868 = pneg %p191
        %p869 = pneg %p215
        %p870 = pneg %p212
        %p871 = pneg %p236
        %p872 = pneg %p233
        %p873 = pneg %p257
        %p874 = pneg %p254
        %p875 = pneg %p278
        %p876 = pneg %p275
        %p877 = pneg %p299
        %p878 = pneg %p296
        %p879 = pneg %p320
        %p880 = pneg %p317
        %p881 = pneg %p341
        %p882 = pneg %p338
        %p883 = pneg %p362
        %p884 = pneg %p359
        %p885 = pneg %p383
        %p886 = pneg %p380
        %p887 = pneg %p404
        %p888 = pneg %p401
        %p889 = pneg %p425
        %p890 = pneg %p422
        %p891 = pneg %p446
        %p892 = pneg %p443
        %p893 = pneg %p467
        %p894 = pneg %p464
        %p895 = pneg %p488
        %p896 = pneg %p485
        %p897 = pneg %p514
        %p898 = pneg %p511
        %s899 = sand.u32 %s501, 1
        %s900 = scalar_lea.sflag [#allocation4], %s899
        %s901 = sand.u32 %s501, 1
        %s902 = smul.addr %s901, 64
        %s903 = scalar_lea.vmem [#allocation31], %s902
        %v905 = vld [vmem:[%s777] sm:$0xff]
        %v906 = vld [vmem:[%s777 + $0x8] sm:$0xff]
        %v907 = vld [vmem:[%s777 + $0x10] sm:$0xff]
        %v908 = vld [vmem:[%s777 + $0x18] sm:$0xff]
        %v909 = vld [vmem:[%s777 + $0x20] sm:$0xff]
        %v910 = vld [vmem:[%s777 + $0x28] sm:$0xff]
        %v911 = vld [vmem:[%s777 + $0x30] sm:$0xff]
        %v912 = vld [vmem:[%s777 + $0x38] sm:$0xff]
        %v913 = vld [vmem:[#allocation5] sm:$0xf]
        %v914 = vld [vmem:[#allocation5 + $0x4] sm:$0xf]
        %v915 = vld [vmem:[#allocation5 + $0x8] sm:$0xf]
        %v916 = vld [vmem:[#allocation5 + $0xc] sm:$0xf]
        %v917 = vld [vmem:[#allocation5 + $0x10] sm:$0xf]
        %v918 = vld [vmem:[#allocation5 + $0x14] sm:$0xf]
        %v919 = vld [vmem:[#allocation5 + $0x18] sm:$0xf]
        %v920 = vld [vmem:[#allocation5 + $0x1c] sm:$0xf]
        %v921 = vld [vmem:[#allocation5 + $0x20] sm:$0xf]
        %v922 = vld [vmem:[#allocation5 + $0x24] sm:$0xf]
        %v923 = vld [vmem:[#allocation5 + $0x28] sm:$0xf]
        %v924 = vld [vmem:[#allocation5 + $0x2c] sm:$0xf]
        %v925 = vld [vmem:[#allocation5 + $0x30] sm:$0xf]
        %v926 = vld [vmem:[#allocation5 + $0x34] sm:$0xf]
        %v927 = vld [vmem:[#allocation5 + $0x38] sm:$0xf]
        %v928 = vld [vmem:[#allocation5 + $0x3c] sm:$0xf]
        %v929 = vld [vmem:[#allocation5 + $0x40] sm:$0xf]
        %v930 = vld [vmem:[#allocation5 + $0x44] sm:$0xf]
        %v931 = vld [vmem:[#allocation5 + $0x48] sm:$0xf]
        %v932 = vld [vmem:[#allocation5 + $0x4c] sm:$0xf]
        %v933 = vld [vmem:[#allocation5 + $0x50] sm:$0xf]
        %v934 = vld [vmem:[#allocation5 + $0x54] sm:$0xf]
        %v935 = vld [vmem:[#allocation5 + $0x58] sm:$0xf]
        %v936 = vld [vmem:[#allocation5 + $0x5c] sm:$0xf]
        %v937 = vld [vmem:[#allocation5 + $0x60] sm:$0xf]
        %v938 = vld [vmem:[#allocation5 + $0x64] sm:$0xf]
        %v939 = vld [vmem:[#allocation5 + $0x68] sm:$0xf]
        %v940 = vld [vmem:[#allocation5 + $0x6c] sm:$0xf]
        %v941 = vld [vmem:[#allocation5 + $0x70] sm:$0xf]
        %v942 = vld [vmem:[#allocation5 + $0x74] sm:$0xf]
        %v943 = vld [vmem:[#allocation5 + $0x78] sm:$0xf]
        %v944 = vld [vmem:[#allocation5 + $0x7c] sm:$0xf]
        %v945 = vld [vmem:[#allocation5 + $0x80] sm:$0xf]
        %v946 = vld [vmem:[#allocation5 + $0x84] sm:$0xf]
        %v947 = vld [vmem:[#allocation5 + $0x88] sm:$0xf]
        %v948 = vld [vmem:[#allocation5 + $0x8c] sm:$0xf]
        %v949 = vld [vmem:[#allocation5 + $0x90] sm:$0xf]
        %v950 = vld [vmem:[#allocation5 + $0x94] sm:$0xf]
        %v951 = vld [vmem:[#allocation5 + $0x98] sm:$0xf]
        %v952 = vld [vmem:[#allocation5 + $0x9c] sm:$0xf]
        %v953 = vld [vmem:[#allocation5 + $0xa0] sm:$0xf]
        %v954 = vld [vmem:[#allocation5 + $0xa4] sm:$0xf]
        %v955 = vld [vmem:[#allocation5 + $0xa8] sm:$0xf]
        %v956 = vld [vmem:[#allocation5 + $0xac] sm:$0xf]
        %v957 = vld [vmem:[#allocation5 + $0xb0] sm:$0xf]
        %v958 = vld [vmem:[#allocation5 + $0xb4] sm:$0xf]
        %v959 = vld [vmem:[#allocation5 + $0xb8] sm:$0xf]
        %v960 = vld [vmem:[#allocation5 + $0xbc] sm:$0xf]
        %v961 = vld [vmem:[#allocation5 + $0xc0] sm:$0xf]
        %v962 = vld [vmem:[#allocation5 + $0xc4] sm:$0xf]
        %v963 = vld [vmem:[#allocation5 + $0xc8] sm:$0xf]
        %v964 = vld [vmem:[#allocation5 + $0xcc] sm:$0xf]
        %v965 = vld [vmem:[#allocation5 + $0xd0] sm:$0xf]
        %v966 = vld [vmem:[#allocation5 + $0xd4] sm:$0xf]
        %v967 = vld [vmem:[#allocation5 + $0xd8] sm:$0xf]
        %v968 = vld [vmem:[#allocation5 + $0xdc] sm:$0xf]
        %v969 = vld [vmem:[#allocation5 + $0xe0] sm:$0xf]
        %v970 = vld [vmem:[#allocation5 + $0xe4] sm:$0xf]
        %v971 = vld [vmem:[#allocation5 + $0xe8] sm:$0xf]
        %v972 = vld [vmem:[#allocation5 + $0xec] sm:$0xf]
        %v973 = vld [vmem:[#allocation5 + $0xf0] sm:$0xf]
        %v974 = vld [vmem:[#allocation5 + $0xf4] sm:$0xf]
        %v975 = vld [vmem:[#allocation5 + $0xf8] sm:$0xf]
        %v976 = vld [vmem:[#allocation5 + $0xfc] sm:$0xf]
        %v977 = vld [vmem:[#allocation5 + $0x100] sm:$0xf]
        %v978 = vld [vmem:[#allocation5 + $0x104] sm:$0xf]
        %v979 = vld [vmem:[#allocation5 + $0x108] sm:$0xf]
        %v980 = vld [vmem:[#allocation5 + $0x10c] sm:$0xf]
        %v981 = vld [vmem:[#allocation5 + $0x110] sm:$0xf]
        %v982 = vld [vmem:[#allocation5 + $0x114] sm:$0xf]
        %v983 = vld [vmem:[#allocation5 + $0x118] sm:$0xf]
        %v984 = vld [vmem:[#allocation5 + $0x11c] sm:$0xf]
        %v985 = vld [vmem:[#allocation5 + $0x120] sm:$0xf]
        %v986 = vld [vmem:[#allocation5 + $0x124] sm:$0xf]
        %v987 = vld [vmem:[#allocation5 + $0x128] sm:$0xf]
        %v988 = vld [vmem:[#allocation5 + $0x12c] sm:$0xf]
        %v989 = vld [vmem:[#allocation5 + $0x130] sm:$0xf]
        %v990 = vld [vmem:[#allocation5 + $0x134] sm:$0xf]
        %v991 = vld [vmem:[#allocation5 + $0x138] sm:$0xf]
        %v992 = vld [vmem:[#allocation5 + $0x13c] sm:$0xf]
        %v993 = vld [vmem:[#allocation5 + $0x140] sm:$0xf]
        %v994 = vld [vmem:[#allocation5 + $0x144] sm:$0xf]
        %v995 = vld [vmem:[#allocation5 + $0x148] sm:$0xf]
        %v996 = vld [vmem:[#allocation5 + $0x14c] sm:$0xf]
        %v997 = vld [vmem:[#allocation5 + $0x150] sm:$0xf]
        %v998 = vld [vmem:[#allocation5 + $0x154] sm:$0xf]
        %v999 = vld [vmem:[#allocation5 + $0x158] sm:$0xf]
        %v1000 = vld [vmem:[#allocation5 + $0x15c] sm:$0xf]
        %v1001 = vld [vmem:[#allocation5 + $0x160] sm:$0xf]
        %v1002 = vld [vmem:[#allocation5 + $0x164] sm:$0xf]
        %v1003 = vld [vmem:[#allocation5 + $0x168] sm:$0xf]
        %v1004 = vld [vmem:[#allocation5 + $0x16c] sm:$0xf]
        %v1005 = vld [vmem:[#allocation5 + $0x170] sm:$0xf]
        %v1006 = vld [vmem:[#allocation5 + $0x174] sm:$0xf]
        %v1007 = vld [vmem:[#allocation5 + $0x178] sm:$0xf]
        %v1008 = vld [vmem:[#allocation5 + $0x17c] sm:$0xf]
        %v1009 = vld [vmem:[#allocation5 + $0x180] sm:$0xf]
        %v1010 = vld [vmem:[#allocation5 + $0x184] sm:$0xf]
        %v1011 = vld [vmem:[#allocation5 + $0x188] sm:$0xf]
        %v1012 = vld [vmem:[#allocation5 + $0x18c] sm:$0xf]
        %v1013 = vld [vmem:[#allocation5 + $0x190] sm:$0xf]
        %v1014 = vld [vmem:[#allocation5 + $0x194] sm:$0xf]
        %v1015 = vld [vmem:[#allocation5 + $0x198] sm:$0xf]
        %v1016 = vld [vmem:[#allocation5 + $0x19c] sm:$0xf]
        %v1017 = vld [vmem:[#allocation5 + $0x1a0] sm:$0xf]
        %v1018 = vld [vmem:[#allocation5 + $0x1a4] sm:$0xf]
        %v1019 = vld [vmem:[#allocation5 + $0x1a8] sm:$0xf]
        %v1020 = vld [vmem:[#allocation5 + $0x1ac] sm:$0xf]
        %v1021 = vld [vmem:[#allocation5 + $0x1b0] sm:$0xf]
        %v1022 = vld [vmem:[#allocation5 + $0x1b4] sm:$0xf]
        %v1023 = vld [vmem:[#allocation5 + $0x1b8] sm:$0xf]
        %v1024 = vld [vmem:[#allocation5 + $0x1bc] sm:$0xf]
        %v1025 = vld [vmem:[#allocation5 + $0x1c0] sm:$0xf]
        %v1026 = vld [vmem:[#allocation5 + $0x1c4] sm:$0xf]
        %v1027 = vld [vmem:[#allocation5 + $0x1c8] sm:$0xf]
        %v1028 = vld [vmem:[#allocation5 + $0x1cc] sm:$0xf]
        %v1029 = vld [vmem:[#allocation5 + $0x1d0] sm:$0xf]
        %v1030 = vld [vmem:[#allocation5 + $0x1d4] sm:$0xf]
        %v1031 = vld [vmem:[#allocation5 + $0x1d8] sm:$0xf]
        %v1032 = vld [vmem:[#allocation5 + $0x1dc] sm:$0xf]
        %v1033 = vld [vmem:[#allocation5 + $0x1e0] sm:$0xf]
        %v1034 = vld [vmem:[#allocation5 + $0x1e4] sm:$0xf]
        %v1035 = vld [vmem:[#allocation5 + $0x1e8] sm:$0xf]
        %v1036 = vld [vmem:[#allocation5 + $0x1ec] sm:$0xf]
        %v1037 = vld [vmem:[#allocation5 + $0x1f0] sm:$0xf]
        %v1038 = vld [vmem:[#allocation5 + $0x1f4] sm:$0xf]
        %v1039 = vld [vmem:[#allocation5 + $0x1f8] sm:$0xf]
        %v1040 = vld [vmem:[#allocation5 + $0x1fc] sm:$0xf]
        %v1041 = vld [vmem:[#allocation7] sm:$0x1]
        %v1042 = vpack.c.bf16 %v905, %v905
        %v1043 = vpack.c.bf16 %v906, %v906
        %v1044 = vpack.c.bf16 %v907, %v907
        %v1045 = vpack.c.bf16 %v908, %v908
        %v1046 = vpack.c.bf16 %v909, %v909
        %v1047 = vpack.c.bf16 %v910, %v910
        %v1048 = vpack.c.bf16 %v911, %v911
        %v1049 = vpack.c.bf16 %v912, %v912
        %v1051 = vlaneseq
        %v1052 = vshrl.u32 %v1051, 7
        %v1053 = vsub.s32 0, %v1052
        %v1054 = vrot.slane %v1041, %v1053
        %v1184 = vunpack.c.l.b16 %v913
        %v1185 = vunpack.c.l.b16 %v914
        %v1186 = vunpack.c.l.b16 %v915
        %v1187 = vunpack.c.l.b16 %v916
        %v1188 = vunpack.c.l.b16 %v917
        %v1189 = vunpack.c.l.b16 %v918
        %v1190 = vunpack.c.l.b16 %v919
        %v1191 = vunpack.c.l.b16 %v920
        %v1192 = vunpack.c.l.b16 %v921
        %v1193 = vunpack.c.l.b16 %v922
        %v1194 = vunpack.c.l.b16 %v923
        %v1195 = vunpack.c.l.b16 %v924
        %v1196 = vunpack.c.l.b16 %v925
        %v1197 = vunpack.c.l.b16 %v926
        %v1198 = vunpack.c.l.b16 %v927
        %v1199 = vunpack.c.l.b16 %v928
        %v1200 = vunpack.c.l.b16 %v929
        %v1201 = vunpack.c.l.b16 %v930
        %v1202 = vunpack.c.l.b16 %v931
        %v1203 = vunpack.c.l.b16 %v932
        %v1204 = vunpack.c.l.b16 %v933
        %v1205 = vunpack.c.l.b16 %v934
        %v1206 = vunpack.c.l.b16 %v935
        %v1207 = vunpack.c.l.b16 %v936
        %v1208 = vunpack.c.l.b16 %v937
        %v1209 = vunpack.c.l.b16 %v938
        %v1210 = vunpack.c.l.b16 %v939
        %v1211 = vunpack.c.l.b16 %v940
        %v1212 = vunpack.c.l.b16 %v941
        %v1213 = vunpack.c.l.b16 %v942
        %v1214 = vunpack.c.l.b16 %v943
        %v1215 = vunpack.c.l.b16 %v944
        %v1216 = vunpack.c.l.b16 %v945
        %v1217 = vunpack.c.l.b16 %v946
        %v1218 = vunpack.c.l.b16 %v947
        %v1219 = vunpack.c.l.b16 %v948
        %v1220 = vunpack.c.l.b16 %v949
        %v1221 = vunpack.c.l.b16 %v950
        %v1222 = vunpack.c.l.b16 %v951
        %v1223 = vunpack.c.l.b16 %v952
        %v1224 = vunpack.c.l.b16 %v953
        %v1225 = vunpack.c.l.b16 %v954
        %v1226 = vunpack.c.l.b16 %v955
        %v1227 = vunpack.c.l.b16 %v956
        %v1228 = vunpack.c.l.b16 %v957
        %v1229 = vunpack.c.l.b16 %v958
        %v1230 = vunpack.c.l.b16 %v959
        %v1231 = vunpack.c.l.b16 %v960
        %v1232 = vunpack.c.l.b16 %v961
        %v1233 = vunpack.c.l.b16 %v962
        %v1234 = vunpack.c.l.b16 %v963
        %v1235 = vunpack.c.l.b16 %v964
        %v1236 = vunpack.c.l.b16 %v965
        %v1237 = vunpack.c.l.b16 %v966
        %v1238 = vunpack.c.l.b16 %v967
        %v1239 = vunpack.c.l.b16 %v968
        %v1240 = vunpack.c.l.b16 %v969
        %v1241 = vunpack.c.l.b16 %v970
        %v1242 = vunpack.c.l.b16 %v971
        %v1243 = vunpack.c.l.b16 %v972
        %v1244 = vunpack.c.l.b16 %v973
        %v1245 = vunpack.c.l.b16 %v974
        %v1246 = vunpack.c.l.b16 %v975
        %v1247 = vunpack.c.l.b16 %v976
        %v1248 = vunpack.c.l.b16 %v977
        %v1249 = vunpack.c.l.b16 %v978
        %v1250 = vunpack.c.l.b16 %v979
        %v1251 = vunpack.c.l.b16 %v980
        %v1252 = vunpack.c.l.b16 %v981
        %v1253 = vunpack.c.l.b16 %v982
        %v1254 = vunpack.c.l.b16 %v983
        %v1255 = vunpack.c.l.b16 %v984
        %v1256 = vunpack.c.l.b16 %v985
        %v1257 = vunpack.c.l.b16 %v986
        %v1258 = vunpack.c.l.b16 %v987
        %v1259 = vunpack.c.l.b16 %v988
        %v1260 = vunpack.c.l.b16 %v989
        %v1261 = vunpack.c.l.b16 %v990
        %v1262 = vunpack.c.l.b16 %v991
        %v1263 = vunpack.c.l.b16 %v992
        %v1264 = vunpack.c.l.b16 %v993
        %v1265 = vunpack.c.l.b16 %v994
        %v1266 = vunpack.c.l.b16 %v995
        %v1267 = vunpack.c.l.b16 %v996
        %v1268 = vunpack.c.l.b16 %v997
        %v1269 = vunpack.c.l.b16 %v998
        %v1270 = vunpack.c.l.b16 %v999
        %v1271 = vunpack.c.l.b16 %v1000
        %v1272 = vunpack.c.l.b16 %v1001
        %v1273 = vunpack.c.l.b16 %v1002
        %v1274 = vunpack.c.l.b16 %v1003
        %v1275 = vunpack.c.l.b16 %v1004
        %v1276 = vunpack.c.l.b16 %v1005
        %v1277 = vunpack.c.l.b16 %v1006
        %v1278 = vunpack.c.l.b16 %v1007
        %v1279 = vunpack.c.l.b16 %v1008
        %v1280 = vunpack.c.l.b16 %v1009
        %v1281 = vunpack.c.l.b16 %v1010
        %v1282 = vunpack.c.l.b16 %v1011
        %v1283 = vunpack.c.l.b16 %v1012
        %v1284 = vunpack.c.l.b16 %v1013
        %v1285 = vunpack.c.l.b16 %v1014
        %v1286 = vunpack.c.l.b16 %v1015
        %v1287 = vunpack.c.l.b16 %v1016
        %v1288 = vunpack.c.l.b16 %v1017
        %v1289 = vunpack.c.l.b16 %v1018
        %v1290 = vunpack.c.l.b16 %v1019
        %v1291 = vunpack.c.l.b16 %v1020
        %v1292 = vunpack.c.l.b16 %v1021
        %v1293 = vunpack.c.l.b16 %v1022
        %v1294 = vunpack.c.l.b16 %v1023
        %v1295 = vunpack.c.l.b16 %v1024
        %v1296 = vunpack.c.l.b16 %v1025
        %v1297 = vunpack.c.l.b16 %v1026
        %v1298 = vunpack.c.l.b16 %v1027
        %v1299 = vunpack.c.l.b16 %v1028
        %v1300 = vunpack.c.l.b16 %v1029
        %v1301 = vunpack.c.l.b16 %v1030
        %v1302 = vunpack.c.l.b16 %v1031
        %v1303 = vunpack.c.l.b16 %v1032
        %v1304 = vunpack.c.l.b16 %v1033
        %v1305 = vunpack.c.l.b16 %v1034
        %v1306 = vunpack.c.l.b16 %v1035
        %v1307 = vunpack.c.l.b16 %v1036
        %v1308 = vunpack.c.l.b16 %v1037
        %v1309 = vunpack.c.l.b16 %v1038
        %v1310 = vunpack.c.l.b16 %v1039
        %v1311 = vunpack.c.l.b16 %v1040
        %v1312 = vpack.c.b16 %v1185, %v1184
        %v1313 = vpack.c.b16 %v1187, %v1186
        %v1314 = vpack.c.b16 %v1189, %v1188
        %v1315 = vpack.c.b16 %v1191, %v1190
        %v1316 = vpack.c.b16 %v1193, %v1192
        %v1317 = vpack.c.b16 %v1195, %v1194
        %v1318 = vpack.c.b16 %v1197, %v1196
        %v1319 = vpack.c.b16 %v1199, %v1198
        %v1320 = vpack.c.b16 %v1201, %v1200
        %v1321 = vpack.c.b16 %v1203, %v1202
        %v1322 = vpack.c.b16 %v1205, %v1204
        %v1323 = vpack.c.b16 %v1207, %v1206
        %v1324 = vpack.c.b16 %v1209, %v1208
        %v1325 = vpack.c.b16 %v1211, %v1210
        %v1326 = vpack.c.b16 %v1213, %v1212
        %v1327 = vpack.c.b16 %v1215, %v1214
        %v1328 = vpack.c.b16 %v1217, %v1216
        %v1329 = vpack.c.b16 %v1219, %v1218
        %v1330 = vpack.c.b16 %v1221, %v1220
        %v1331 = vpack.c.b16 %v1223, %v1222
        %v1332 = vpack.c.b16 %v1225, %v1224
        %v1333 = vpack.c.b16 %v1227, %v1226
        %v1334 = vpack.c.b16 %v1229, %v1228
        %v1335 = vpack.c.b16 %v1231, %v1230
        %v1336 = vpack.c.b16 %v1233, %v1232
        %v1337 = vpack.c.b16 %v1235, %v1234
        %v1338 = vpack.c.b16 %v1237, %v1236
        %v1339 = vpack.c.b16 %v1239, %v1238
        %v1340 = vpack.c.b16 %v1241, %v1240
        %v1341 = vpack.c.b16 %v1243, %v1242
        %v1342 = vpack.c.b16 %v1245, %v1244
        %v1343 = vpack.c.b16 %v1247, %v1246
        %v1344 = vpack.c.b16 %v1249, %v1248
        %v1345 = vpack.c.b16 %v1251, %v1250
        %v1346 = vpack.c.b16 %v1253, %v1252
        %v1347 = vpack.c.b16 %v1255, %v1254
        %v1348 = vpack.c.b16 %v1257, %v1256
        %v1349 = vpack.c.b16 %v1259, %v1258
        %v1350 = vpack.c.b16 %v1261, %v1260
        %v1351 = vpack.c.b16 %v1263, %v1262
        %v1352 = vpack.c.b16 %v1265, %v1264
        %v1353 = vpack.c.b16 %v1267, %v1266
        %v1354 = vpack.c.b16 %v1269, %v1268
        %v1355 = vpack.c.b16 %v1271, %v1270
        %v1356 = vpack.c.b16 %v1273, %v1272
        %v1357 = vpack.c.b16 %v1275, %v1274
        %v1358 = vpack.c.b16 %v1277, %v1276
        %v1359 = vpack.c.b16 %v1279, %v1278
        %v1360 = vpack.c.b16 %v1281, %v1280
        %v1361 = vpack.c.b16 %v1283, %v1282
        %v1362 = vpack.c.b16 %v1285, %v1284
        %v1363 = vpack.c.b16 %v1287, %v1286
        %v1364 = vpack.c.b16 %v1289, %v1288
        %v1365 = vpack.c.b16 %v1291, %v1290
        %v1366 = vpack.c.b16 %v1293, %v1292
        %v1367 = vpack.c.b16 %v1295, %v1294
        %v1368 = vpack.c.b16 %v1297, %v1296
        %v1369 = vpack.c.b16 %v1299, %v1298
        %v1370 = vpack.c.b16 %v1301, %v1300
        %v1371 = vpack.c.b16 %v1303, %v1302
        %v1372 = vpack.c.b16 %v1305, %v1304
        %v1373 = vpack.c.b16 %v1307, %v1306
        %v1374 = vpack.c.b16 %v1309, %v1308
        %v1375 = vpack.c.b16 %v1311, %v1310
        %1440 = vmatprep.subr.bf16.mxu0 0
        %1441 = vmatpush1.bf16.msra.mxu0 %v1312
        %1442 = vmatprep.subr.bf16.mxu0 0
        %1443 = vmatpush1.bf16.msra.mxu0 %v1313
        %1444 = vmatprep.subr.bf16.mxu0 0
        %1445 = vmatpush1.bf16.msra.mxu0 %v1314
        %1446 = vmatprep.subr.bf16.mxu0 0
        %1447 = vmatpush1.bf16.msra.mxu0 %v1315
        %1448 = vmatprep.subr.bf16.mxu0 0
        %1449 = vmatpush1.bf16.msra.mxu0 %v1316
        %1450 = vmatprep.subr.bf16.mxu0 0
        %1451 = vmatpush1.bf16.msra.mxu0 %v1317
        %1452 = vmatprep.subr.bf16.mxu0 0
        %1453 = vmatpush1.bf16.msra.mxu0 %v1318
        %1454 = vmatprep.subr.bf16.mxu0 0
        %1455 = vmatpush1.bf16.msra.mxu0 %v1319
        %1456 = vmatprep.subr.bf16.mxu0 0
        %1457 = vmatpush1.bf16.msra.mxu0 %v1320
        %1458 = vmatprep.subr.bf16.mxu0 0
        %1459 = vmatpush1.bf16.msra.mxu0 %v1321
        %1460 = vmatprep.subr.bf16.mxu0 0
        %1461 = vmatpush1.bf16.msra.mxu0 %v1322
        %1462 = vmatprep.subr.bf16.mxu0 0
        %1463 = vmatpush1.bf16.msra.mxu0 %v1323
        %1464 = vmatprep.subr.bf16.mxu0 0
        %1465 = vmatpush1.bf16.msra.mxu0 %v1324
        %1466 = vmatprep.subr.bf16.mxu0 0
        %1467 = vmatpush1.bf16.msra.mxu0 %v1325
        %1468 = vmatprep.subr.bf16.mxu0 0
        %1469 = vmatpush1.bf16.msra.mxu0 %v1326
        %1470 = vmatprep.subr.bf16.mxu0 0
        %1471 = vmatpush1.bf16.msra.mxu0 %v1327
        %1472 = vmatprep.mubr.bf16.mxu0 %v1043
        %1473 = vmatmul.mubr.bf16.gmra.mrb[0].mxu0 %v1042
        %v1474 = vpop.f32.mrb[0].mxu0
        %v1475 = vadd.f32 %v1054, %v1474
        %v1476 = vpop.f32.mrb[0].mxu0
        %v1477 = vpop.f32.mrb[0].mxu0
        %v1478 = vpop.f32.mrb[0].mxu0
        %1479 = vdwg.mxu0
        %1480 = vmatprep.subr.bf16.mxu0 0
        %1481 = vmatpush1.bf16.msra.mxu0 %v1328
        %1482 = vmatprep.subr.bf16.mxu0 0
        %1483 = vmatpush1.bf16.msra.mxu0 %v1329
        %1484 = vmatprep.subr.bf16.mxu0 0
        %1485 = vmatpush1.bf16.msra.mxu0 %v1330
        %1486 = vmatprep.subr.bf16.mxu0 0
        %1487 = vmatpush1.bf16.msra.mxu0 %v1331
        %1488 = vmatprep.subr.bf16.mxu0 0
        %1489 = vmatpush1.bf16.msra.mxu0 %v1332
        %1490 = vmatprep.subr.bf16.mxu0 0
        %1491 = vmatpush1.bf16.msra.mxu0 %v1333
        %1492 = vmatprep.subr.bf16.mxu0 0
        %1493 = vmatpush1.bf16.msra.mxu0 %v1334
        %1494 = vmatprep.subr.bf16.mxu0 0
        %1495 = vmatpush1.bf16.msra.mxu0 %v1335
        %1496 = vmatprep.subr.bf16.mxu0 0
        %1497 = vmatpush1.bf16.msra.mxu0 %v1336
        %1498 = vmatprep.subr.bf16.mxu0 0
        %1499 = vmatpush1.bf16.msra.mxu0 %v1337
        %1500 = vmatprep.subr.bf16.mxu0 0
        %1501 = vmatpush1.bf16.msra.mxu0 %v1338
        %1502 = vmatprep.subr.bf16.mxu0 0
        %1503 = vmatpush1.bf16.msra.mxu0 %v1339
        %1504 = vmatprep.subr.bf16.mxu0 0
        %1505 = vmatpush1.bf16.msra.mxu0 %v1340
        %1506 = vmatprep.subr.bf16.mxu0 0
        %1507 = vmatpush1.bf16.msra.mxu0 %v1341
        %1508 = vmatprep.subr.bf16.mxu0 0
        %1509 = vmatpush1.bf16.msra.mxu0 %v1342
        %1510 = vmatprep.subr.bf16.mxu0 0
        %1511 = vmatpush1.bf16.msra.mxu0 %v1343
        %1512 = vmatprep.mubr.bf16.mxu0 %v1045
        %1513 = vmatmul.mubr.bf16.gmra.mrb[0].mxu0 %v1044
        %v1514 = vpop.f32.mrb[0].mxu0
        %v1515 = vadd.f32 %v1475, %v1514
        %v1516 = vpop.f32.mrb[0].mxu0
        %v1517 = vpop.f32.mrb[0].mxu0
        %v1518 = vpop.f32.mrb[0].mxu0
        %1519 = vdwg.mxu0
        %1520 = vmatprep.subr.bf16.mxu0 0
        %1521 = vmatpush1.bf16.msra.mxu0 %v1344
        %1522 = vmatprep.subr.bf16.mxu0 0
        %1523 = vmatpush1.bf16.msra.mxu0 %v1345
        %1524 = vmatprep.subr.bf16.mxu0 0
        %1525 = vmatpush1.bf16.msra.mxu0 %v1346
        %1526 = vmatprep.subr.bf16.mxu0 0
        %1527 = vmatpush1.bf16.msra.mxu0 %v1347
        %1528 = vmatprep.subr.bf16.mxu0 0
        %1529 = vmatpush1.bf16.msra.mxu0 %v1348
        %1530 = vmatprep.subr.bf16.mxu0 0
        %1531 = vmatpush1.bf16.msra.mxu0 %v1349
        %1532 = vmatprep.subr.bf16.mxu0 0
        %1533 = vmatpush1.bf16.msra.mxu0 %v1350
        %1534 = vmatprep.subr.bf16.mxu0 0
        %1535 = vmatpush1.bf16.msra.mxu0 %v1351
        %1536 = vmatprep.subr.bf16.mxu0 0
        %1537 = vmatpush1.bf16.msra.mxu0 %v1352
        %1538 = vmatprep.subr.bf16.mxu0 0
        %1539 = vmatpush1.bf16.msra.mxu0 %v1353
        %1540 = vmatprep.subr.bf16.mxu0 0
        %1541 = vmatpush1.bf16.msra.mxu0 %v1354
        %1542 = vmatprep.subr.bf16.mxu0 0
        %1543 = vmatpush1.bf16.msra.mxu0 %v1355
        %1544 = vmatprep.subr.bf16.mxu0 0
        %1545 = vmatpush1.bf16.msra.mxu0 %v1356
        %1546 = vmatprep.subr.bf16.mxu0 0
        %1547 = vmatpush1.bf16.msra.mxu0 %v1357
        %1548 = vmatprep.subr.bf16.mxu0 0
        %1549 = vmatpush1.bf16.msra.mxu0 %v1358
        %1550 = vmatprep.subr.bf16.mxu0 0
        %1551 = vmatpush1.bf16.msra.mxu0 %v1359
        %1552 = vmatprep.mubr.bf16.mxu0 %v1047
        %1553 = vmatmul.mubr.bf16.gmra.mrb[0].mxu0 %v1046
        %v1554 = vpop.f32.mrb[0].mxu0
        %v1555 = vadd.f32 %v1515, %v1554
        %v1556 = vpop.f32.mrb[0].mxu0
        %v1557 = vpop.f32.mrb[0].mxu0
        %v1558 = vpop.f32.mrb[0].mxu0
        %1559 = vdwg.mxu0
        %1560 = vmatprep.subr.bf16.mxu0 0
        %1561 = vmatpush1.bf16.msra.mxu0 %v1360
        %1562 = vmatprep.subr.bf16.mxu0 0
        %1563 = vmatpush1.bf16.msra.mxu0 %v1361
        %1564 = vmatprep.subr.bf16.mxu0 0
        %1565 = vmatpush1.bf16.msra.mxu0 %v1362
        %1566 = vmatprep.subr.bf16.mxu0 0
        %1567 = vmatpush1.bf16.msra.mxu0 %v1363
        %1568 = vmatprep.subr.bf16.mxu0 0
        %1569 = vmatpush1.bf16.msra.mxu0 %v1364
        %1570 = vmatprep.subr.bf16.mxu0 0
        %1571 = vmatpush1.bf16.msra.mxu0 %v1365
        %1572 = vmatprep.subr.bf16.mxu0 0
        %1573 = vmatpush1.bf16.msra.mxu0 %v1366
        %1574 = vmatprep.subr.bf16.mxu0 0
        %1575 = vmatpush1.bf16.msra.mxu0 %v1367
        %1576 = vmatprep.subr.bf16.mxu0 0
        %1577 = vmatpush1.bf16.msra.mxu0 %v1368
        %1578 = vmatprep.subr.bf16.mxu0 0
        %1579 = vmatpush1.bf16.msra.mxu0 %v1369
        %1580 = vmatprep.subr.bf16.mxu0 0
        %1581 = vmatpush1.bf16.msra.mxu0 %v1370
        %1582 = vmatprep.subr.bf16.mxu0 0
        %1583 = vmatpush1.bf16.msra.mxu0 %v1371
        %1584 = vmatprep.subr.bf16.mxu0 0
        %1585 = vmatpush1.bf16.msra.mxu0 %v1372
        %1586 = vmatprep.subr.bf16.mxu0 0
        %1587 = vmatpush1.bf16.msra.mxu0 %v1373
        %1588 = vmatprep.subr.bf16.mxu0 0
        %1589 = vmatpush1.bf16.msra.mxu0 %v1374
        %1590 = vmatprep.subr.bf16.mxu0 0
        %1591 = vmatpush1.bf16.msra.mxu0 %v1375
        %1592 = vmatprep.mubr.bf16.mxu0 %v1049
        %1593 = vmatmul.mubr.bf16.gmra.mrb[0].mxu0 %v1048
        %v1594 = vpop.f32.mrb[0].mxu0
        %v1595 = vadd.f32 %v1555, %v1594
        %v1596 = vpop.f32.mrb[0].mxu0
        %v1597 = vpop.f32.mrb[0].mxu0
        %v1598 = vpop.f32.mrb[0].mxu0
        %1599 = vdwg.mxu0
        %v1600 = vmax.f32 %v1595, 0.0
        %v1601 = vld [vmem:[#allocation8] sm:$0xf]
        %v1602 = vld [vmem:[#allocation8 + $0x4] sm:$0xf]
        %v1603 = vld [vmem:[#allocation8 + $0x8] sm:$0xf]
        %v1604 = vld [vmem:[#allocation8 + $0xc] sm:$0xf]
        %v1605 = vld [vmem:[#allocation8 + $0x10] sm:$0xf]
        %v1606 = vld [vmem:[#allocation8 + $0x14] sm:$0xf]
        %v1607 = vld [vmem:[#allocation8 + $0x18] sm:$0xf]
        %v1608 = vld [vmem:[#allocation8 + $0x1c] sm:$0xf]
        %v1609 = vld [vmem:[#allocation8 + $0x20] sm:$0xf]
        %v1610 = vld [vmem:[#allocation8 + $0x24] sm:$0xf]
        %v1611 = vld [vmem:[#allocation8 + $0x28] sm:$0xf]
        %v1612 = vld [vmem:[#allocation8 + $0x2c] sm:$0xf]
        %v1613 = vld [vmem:[#allocation8 + $0x30] sm:$0xf]
        %v1614 = vld [vmem:[#allocation8 + $0x34] sm:$0xf]
        %v1615 = vld [vmem:[#allocation8 + $0x38] sm:$0xf]
        %v1616 = vld [vmem:[#allocation8 + $0x3c] sm:$0xf]
        %v1617 = vld [vmem:[#allocation10] sm:$0x1]
        %v1618 = vpack.c.bf16 %v1600, %v1600
        %v1620 = vlaneseq
        %v1621 = vshrl.u32 %v1620, 7
        %v1622 = vsub.s32 0, %v1621
        %v1623 = vrot.slane %v1617, %v1622
        %v1641 = vunpack.c.l.b16 %v1601
        %v1642 = vunpack.c.l.b16 %v1602
        %v1643 = vunpack.c.l.b16 %v1603
        %v1644 = vunpack.c.l.b16 %v1604
        %v1645 = vunpack.c.l.b16 %v1605
        %v1646 = vunpack.c.l.b16 %v1606
        %v1647 = vunpack.c.l.b16 %v1607
        %v1648 = vunpack.c.l.b16 %v1608
        %v1649 = vunpack.c.l.b16 %v1609
        %v1650 = vunpack.c.l.b16 %v1610
        %v1651 = vunpack.c.l.b16 %v1611
        %v1652 = vunpack.c.l.b16 %v1612
        %v1653 = vunpack.c.l.b16 %v1613
        %v1654 = vunpack.c.l.b16 %v1614
        %v1655 = vunpack.c.l.b16 %v1615
        %v1656 = vunpack.c.l.b16 %v1616
        %v1657 = vpack.c.b16 %v1642, %v1641
        %v1658 = vpack.c.b16 %v1644, %v1643
        %v1659 = vpack.c.b16 %v1646, %v1645
        %v1660 = vpack.c.b16 %v1648, %v1647
        %v1661 = vpack.c.b16 %v1650, %v1649
        %v1662 = vpack.c.b16 %v1652, %v1651
        %v1663 = vpack.c.b16 %v1654, %v1653
        %v1664 = vpack.c.b16 %v1656, %v1655
        %1673 = vmatprep.subr.bf16.mxu0 0
        %1674 = vmatpush1.bf16.msra.mxu0 %v1657
        %1675 = vmatprep.subr.bf16.mxu0 0
        %1676 = vmatpush1.bf16.msra.mxu0 %v1658
        %1677 = vmatprep.subr.bf16.mxu0 0
        %1678 = vmatpush1.bf16.msra.mxu0 %v1659
        %1679 = vmatprep.subr.bf16.mxu0 0
        %1680 = vmatpush1.bf16.msra.mxu0 %v1660
        %1681 = vmatprep.subr.bf16.mxu0 0
        %1682 = vmatpush1.bf16.msra.mxu0 %v1661
        %1683 = vmatprep.subr.bf16.mxu0 0
        %1684 = vmatpush1.bf16.msra.mxu0 %v1662
        %1685 = vmatprep.subr.bf16.mxu0 0
        %1686 = vmatpush1.bf16.msra.mxu0 %v1663
        %1687 = vmatprep.subr.bf16.mxu0 0
        %1688 = vmatpush1.bf16.msra.mxu0 %v1664
        %1689 = vmatprep.subr.bf16.mxu0 0
        %1690 = vmatpush1.bf16.msra.mxu0 0
        %1691 = vmatprep.subr.bf16.mxu0 0
        %1692 = vmatpush1.bf16.msra.mxu0 0
        %1693 = vmatprep.subr.bf16.mxu0 0
        %1694 = vmatpush1.bf16.msra.mxu0 0
        %1695 = vmatprep.subr.bf16.mxu0 0
        %1696 = vmatpush1.bf16.msra.mxu0 0
        %1697 = vmatprep.subr.bf16.mxu0 0
        %1698 = vmatpush1.bf16.msra.mxu0 0
        %1699 = vmatprep.subr.bf16.mxu0 0
        %1700 = vmatpush1.bf16.msra.mxu0 0
        %1701 = vmatprep.subr.bf16.mxu0 0
        %1702 = vmatpush1.bf16.msra.mxu0 0
        %1703 = vmatprep.subr.bf16.mxu0 0
        %1704 = vmatpush1.bf16.msra.mxu0 0
        %1705 = vmatprep.mubr.bf16.mxu0 0
        %1706 = vmatmul.mubr.bf16.gmra.mrb[0].mxu0 %v1618
        %v1707 = vpop.f32.mrb[0].mxu0
        %v1708 = vadd.f32 %v1623, %v1707
        %v1709 = vpop.f32.mrb[0].mxu0
        %v1710 = vpop.f32.mrb[0].mxu0
        %v1711 = vpop.f32.mrb[0].mxu0
        %1712 = vdwg.mxu0
        %v1713 = vmax.f32 %v1708, 0.0
        %v1714 = vld [vmem:[#allocation11] sm:$0xf]
        %v1715 = vld [vmem:[#allocation11 + $0x4] sm:$0xf]
        %v1716 = vld [vmem:[#allocation11 + $0x8] sm:$0xf]
        %v1717 = vld [vmem:[#allocation11 + $0xc] sm:$0xf]
        %v1718 = vld [vmem:[#allocation11 + $0x10] sm:$0xf]
        %v1719 = vld [vmem:[#allocation11 + $0x14] sm:$0xf]
        %v1720 = vld [vmem:[#allocation11 + $0x18] sm:$0xf]
        %v1721 = vld [vmem:[#allocation11 + $0x1c] sm:$0xf]
        %v1722 = vld [vmem:[#allocation11 + $0x20] sm:$0xf]
        %v1723 = vld [vmem:[#allocation11 + $0x24] sm:$0xf]
        %v1724 = vld [vmem:[#allocation11 + $0x28] sm:$0xf]
        %v1725 = vld [vmem:[#allocation11 + $0x2c] sm:$0xf]
        %v1726 = vld [vmem:[#allocation11 + $0x30] sm:$0xf]
        %v1727 = vld [vmem:[#allocation11 + $0x34] sm:$0xf]
        %v1728 = vld [vmem:[#allocation11 + $0x38] sm:$0xf]
        %v1729 = vld [vmem:[#allocation11 + $0x3c] sm:$0xf]
        %v1730 = vld [vmem:[#allocation13] sm:$0x1]
        %v1731 = vpack.c.bf16 %v1713, %v1713
        %v1733 = vlaneseq
        %v1734 = vshrl.u32 %v1733, 7
        %v1735 = vsub.s32 0, %v1734
        %v1736 = vrot.slane %v1730, %v1735
        %v1754 = vunpack.c.l.b16 %v1714
        %v1755 = vunpack.c.l.b16 %v1715
        %v1756 = vunpack.c.l.b16 %v1716
        %v1757 = vunpack.c.l.b16 %v1717
        %v1758 = vunpack.c.l.b16 %v1718
        %v1759 = vunpack.c.l.b16 %v1719
        %v1760 = vunpack.c.l.b16 %v1720
        %v1761 = vunpack.c.l.b16 %v1721
        %v1762 = vunpack.c.l.b16 %v1722
        %v1763 = vunpack.c.l.b16 %v1723
        %v1764 = vunpack.c.l.b16 %v1724
        %v1765 = vunpack.c.l.b16 %v1725
        %v1766 = vunpack.c.l.b16 %v1726
        %v1767 = vunpack.c.l.b16 %v1727
        %v1768 = vunpack.c.l.b16 %v1728
        %v1769 = vunpack.c.l.b16 %v1729
        %v1770 = vpack.c.b16 %v1755, %v1754
        %v1771 = vpack.c.b16 %v1757, %v1756
        %v1772 = vpack.c.b16 %v1759, %v1758
        %v1773 = vpack.c.b16 %v1761, %v1760
        %v1774 = vpack.c.b16 %v1763, %v1762
        %v1775 = vpack.c.b16 %v1765, %v1764
        %v1776 = vpack.c.b16 %v1767, %v1766
        %v1777 = vpack.c.b16 %v1769, %v1768
        %1786 = vmatprep.subr.bf16.mxu0 0
        %1787 = vmatpush1.bf16.msra.mxu0 %v1770
        %1788 = vmatprep.subr.bf16.mxu0 0
        %1789 = vmatpush1.bf16.msra.mxu0 %v1771
        %1790 = vmatprep.subr.bf16.mxu0 0
        %1791 = vmatpush1.bf16.msra.mxu0 %v1772
        %1792 = vmatprep.subr.bf16.mxu0 0
        %1793 = vmatpush1.bf16.msra.mxu0 %v1773
        %1794 = vmatprep.subr.bf16.mxu0 0
        %1795 = vmatpush1.bf16.msra.mxu0 %v1774
        %1796 = vmatprep.subr.bf16.mxu0 0
        %1797 = vmatpush1.bf16.msra.mxu0 %v1775
        %1798 = vmatprep.subr.bf16.mxu0 0
        %1799 = vmatpush1.bf16.msra.mxu0 %v1776
        %1800 = vmatprep.subr.bf16.mxu0 0
        %1801 = vmatpush1.bf16.msra.mxu0 %v1777
        %1802 = vmatprep.subr.bf16.mxu0 0
        %1803 = vmatpush1.bf16.msra.mxu0 0
        %1804 = vmatprep.subr.bf16.mxu0 0
        %1805 = vmatpush1.bf16.msra.mxu0 0
        %1806 = vmatprep.subr.bf16.mxu0 0
        %1807 = vmatpush1.bf16.msra.mxu0 0
        %1808 = vmatprep.subr.bf16.mxu0 0
        %1809 = vmatpush1.bf16.msra.mxu0 0
        %1810 = vmatprep.subr.bf16.mxu0 0
        %1811 = vmatpush1.bf16.msra.mxu0 0
        %1812 = vmatprep.subr.bf16.mxu0 0
        %1813 = vmatpush1.bf16.msra.mxu0 0
        %1814 = vmatprep.subr.bf16.mxu0 0
        %1815 = vmatpush1.bf16.msra.mxu0 0
        %1816 = vmatprep.subr.bf16.mxu0 0
        %1817 = vmatpush1.bf16.msra.mxu0 0
        %1818 = vmatprep.mubr.bf16.mxu0 0
        %1819 = vmatmul.mubr.bf16.gmra.mrb[0].mxu0 %v1731
        %v1820 = vpop.f32.mrb[0].mxu0
        %v1821 = vadd.f32 %v1736, %v1820
        %v1822 = vpop.f32.mrb[0].mxu0
        %v1823 = vpop.f32.mrb[0].mxu0
        %v1824 = vpop.f32.mrb[0].mxu0
        %1825 = vdwg.mxu0
        %v1826 = vmax.f32 %v1821, 0.0
        %v1827 = vld [vmem:[#allocation14] sm:$0xf]
        %v1828 = vld [vmem:[#allocation14 + $0x4] sm:$0xf]
        %v1829 = vld [vmem:[#allocation14 + $0x8] sm:$0xf]
        %v1830 = vld [vmem:[#allocation14 + $0xc] sm:$0xf]
        %v1831 = vld [vmem:[#allocation14 + $0x10] sm:$0xf]
        %v1832 = vld [vmem:[#allocation14 + $0x14] sm:$0xf]
        %v1833 = vld [vmem:[#allocation14 + $0x18] sm:$0xf]
        %v1834 = vld [vmem:[#allocation14 + $0x1c] sm:$0xf]
        %v1835 = vld [vmem:[#allocation14 + $0x20] sm:$0xf]
        %v1836 = vld [vmem:[#allocation14 + $0x24] sm:$0xf]
        %v1837 = vld [vmem:[#allocation14 + $0x28] sm:$0xf]
        %v1838 = vld [vmem:[#allocation14 + $0x2c] sm:$0xf]
        %v1839 = vld [vmem:[#allocation14 + $0x30] sm:$0xf]
        %v1840 = vld [vmem:[#allocation14 + $0x34] sm:$0xf]
        %v1841 = vld [vmem:[#allocation14 + $0x38] sm:$0xf]
        %v1842 = vld [vmem:[#allocation14 + $0x3c] sm:$0xf]
        %v1843 = vld [vmem:[#allocation16] sm:$0x1]
        %v1844 = vpack.c.bf16 %v1826, %v1826
        %v1846 = vlaneseq
        %v1847 = vshrl.u32 %v1846, 7
        %v1848 = vsub.s32 0, %v1847
        %v1849 = vrot.slane %v1843, %v1848
        %v1867 = vunpack.c.l.b16 %v1827
        %v1868 = vunpack.c.l.b16 %v1828
        %v1869 = vunpack.c.l.b16 %v1829
        %v1870 = vunpack.c.l.b16 %v1830
        %v1871 = vunpack.c.l.b16 %v1831
        %v1872 = vunpack.c.l.b16 %v1832
        %v1873 = vunpack.c.l.b16 %v1833
        %v1874 = vunpack.c.l.b16 %v1834
        %v1875 = vunpack.c.l.b16 %v1835
        %v1876 = vunpack.c.l.b16 %v1836
        %v1877 = vunpack.c.l.b16 %v1837
        %v1878 = vunpack.c.l.b16 %v1838
        %v1879 = vunpack.c.l.b16 %v1839
        %v1880 = vunpack.c.l.b16 %v1840
        %v1881 = vunpack.c.l.b16 %v1841
        %v1882 = vunpack.c.l.b16 %v1842
        %v1883 = vpack.c.b16 %v1868, %v1867
        %v1884 = vpack.c.b16 %v1870, %v1869
        %v1885 = vpack.c.b16 %v1872, %v1871
        %v1886 = vpack.c.b16 %v1874, %v1873
        %v1887 = vpack.c.b16 %v1876, %v1875
        %v1888 = vpack.c.b16 %v1878, %v1877
        %v1889 = vpack.c.b16 %v1880, %v1879
        %v1890 = vpack.c.b16 %v1882, %v1881
        %1899 = vmatprep.subr.bf16.mxu0 0
        %1900 = vmatpush1.bf16.msra.mxu0 %v1883
        %1901 = vmatprep.subr.bf16.mxu0 0
        %1902 = vmatpush1.bf16.msra.mxu0 %v1884
        %1903 = vmatprep.subr.bf16.mxu0 0
        %1904 = vmatpush1.bf16.msra.mxu0 %v1885
        %1905 = vmatprep.subr.bf16.mxu0 0
        %1906 = vmatpush1.bf16.msra.mxu0 %v1886
        %1907 = vmatprep.subr.bf16.mxu0 0
        %1908 = vmatpush1.bf16.msra.mxu0 %v1887
        %1909 = vmatprep.subr.bf16.mxu0 0
        %1910 = vmatpush1.bf16.msra.mxu0 %v1888
        %1911 = vmatprep.subr.bf16.mxu0 0
        %1912 = vmatpush1.bf16.msra.mxu0 %v1889
        %1913 = vmatprep.subr.bf16.mxu0 0
        %1914 = vmatpush1.bf16.msra.mxu0 %v1890
        %1915 = vmatprep.subr.bf16.mxu0 0
        %1916 = vmatpush1.bf16.msra.mxu0 0
        %1917 = vmatprep.subr.bf16.mxu0 0
        %1918 = vmatpush1.bf16.msra.mxu0 0
        %1919 = vmatprep.subr.bf16.mxu0 0
        %1920 = vmatpush1.bf16.msra.mxu0 0
        %1921 = vmatprep.subr.bf16.mxu0 0
        %1922 = vmatpush1.bf16.msra.mxu0 0
        %1923 = vmatprep.subr.bf16.mxu0 0
        %1924 = vmatpush1.bf16.msra.mxu0 0
        %1925 = vmatprep.subr.bf16.mxu0 0
        %1926 = vmatpush1.bf16.msra.mxu0 0
        %1927 = vmatprep.subr.bf16.mxu0 0
        %1928 = vmatpush1.bf16.msra.mxu0 0
        %1929 = vmatprep.subr.bf16.mxu0 0
        %1930 = vmatpush1.bf16.msra.mxu0 0
        %1931 = vmatprep.mubr.bf16.mxu0 0
        %1932 = vmatmul.mubr.bf16.gmra.mrb[0].mxu0 %v1844
        %v1933 = vpop.f32.mrb[0].mxu0
        %v1934 = vadd.f32 %v1849, %v1933
        %v1935 = vpop.f32.mrb[0].mxu0
        %v1936 = vpop.f32.mrb[0].mxu0
        %v1937 = vpop.f32.mrb[0].mxu0
        %1938 = vdwg.mxu0
        %v1939 = vmax.f32 %v1934, 0.0
        %v1940 = vld [vmem:[#allocation17] sm:$0xf]
        %v1941 = vld [vmem:[#allocation17 + $0x4] sm:$0xf]
        %v1942 = vld [vmem:[#allocation17 + $0x8] sm:$0xf]
        %v1943 = vld [vmem:[#allocation17 + $0xc] sm:$0xf]
        %v1944 = vld [vmem:[#allocation17 + $0x10] sm:$0xf]
        %v1945 = vld [vmem:[#allocation17 + $0x14] sm:$0xf]
        %v1946 = vld [vmem:[#allocation17 + $0x18] sm:$0xf]
        %v1947 = vld [vmem:[#allocation17 + $0x1c] sm:$0xf]
        %v1948 = vld [vmem:[#allocation17 + $0x20] sm:$0xf]
        %v1949 = vld [vmem:[#allocation17 + $0x24] sm:$0xf]
        %v1950 = vld [vmem:[#allocation17 + $0x28] sm:$0xf]
        %v1951 = vld [vmem:[#allocation17 + $0x2c] sm:$0xf]
        %v1952 = vld [vmem:[#allocation17 + $0x30] sm:$0xf]
        %v1953 = vld [vmem:[#allocation17 + $0x34] sm:$0xf]
        %v1954 = vld [vmem:[#allocation17 + $0x38] sm:$0xf]
        %v1955 = vld [vmem:[#allocation17 + $0x3c] sm:$0xf]
        %v1956 = vld [vmem:[#allocation19] sm:$0x1]
        %v1957 = vpack.c.bf16 %v1939, %v1939
        %v1959 = vlaneseq
        %v1960 = vshrl.u32 %v1959, 7
        %v1961 = vsub.s32 0, %v1960
        %v1962 = vrot.slane %v1956, %v1961
        %v1980 = vunpack.c.l.b16 %v1940
        %v1981 = vunpack.c.l.b16 %v1941
        %v1982 = vunpack.c.l.b16 %v1942
        %v1983 = vunpack.c.l.b16 %v1943
        %v1984 = vunpack.c.l.b16 %v1944
        %v1985 = vunpack.c.l.b16 %v1945
        %v1986 = vunpack.c.l.b16 %v1946
        %v1987 = vunpack.c.l.b16 %v1947
        %v1988 = vunpack.c.l.b16 %v1948
        %v1989 = vunpack.c.l.b16 %v1949
        %v1990 = vunpack.c.l.b16 %v1950
        %v1991 = vunpack.c.l.b16 %v1951
        %v1992 = vunpack.c.l.b16 %v1952
        %v1993 = vunpack.c.l.b16 %v1953
        %v1994 = vunpack.c.l.b16 %v1954
        %v1995 = vunpack.c.l.b16 %v1955
        %v1996 = vpack.c.b16 %v1981, %v1980
        %v1997 = vpack.c.b16 %v1983, %v1982
        %v1998 = vpack.c.b16 %v1985, %v1984
        %v1999 = vpack.c.b16 %v1987, %v1986
        %v2000 = vpack.c.b16 %v1989, %v1988
        %v2001 = vpack.c.b16 %v1991, %v1990
        %v2002 = vpack.c.b16 %v1993, %v1992
        %v2003 = vpack.c.b16 %v1995, %v1994
        %2012 = vmatprep.subr.bf16.mxu0 0
        %2013 = vmatpush1.bf16.msra.mxu0 %v1996
        %2014 = vmatprep.subr.bf16.mxu0 0
        %2015 = vmatpush1.bf16.msra.mxu0 %v1997
        %2016 = vmatprep.subr.bf16.mxu0 0
        %2017 = vmatpush1.bf16.msra.mxu0 %v1998
        %2018 = vmatprep.subr.bf16.mxu0 0
        %2019 = vmatpush1.bf16.msra.mxu0 %v1999
        %2020 = vmatprep.subr.bf16.mxu0 0
        %2021 = vmatpush1.bf16.msra.mxu0 %v2000
        %2022 = vmatprep.subr.bf16.mxu0 0
        %2023 = vmatpush1.bf16.msra.mxu0 %v2001
        %2024 = vmatprep.subr.bf16.mxu0 0
        %2025 = vmatpush1.bf16.msra.mxu0 %v2002
        %2026 = vmatprep.subr.bf16.mxu0 0
        %2027 = vmatpush1.bf16.msra.mxu0 %v2003
        %2028 = vmatprep.subr.bf16.mxu0 0
        %2029 = vmatpush1.bf16.msra.mxu0 0
        %2030 = vmatprep.subr.bf16.mxu0 0
        %2031 = vmatpush1.bf16.msra.mxu0 0
        %2032 = vmatprep.subr.bf16.mxu0 0
        %2033 = vmatpush1.bf16.msra.mxu0 0
        %2034 = vmatprep.subr.bf16.mxu0 0
        %2035 = vmatpush1.bf16.msra.mxu0 0
        %2036 = vmatprep.subr.bf16.mxu0 0
        %2037 = vmatpush1.bf16.msra.mxu0 0
        %2038 = vmatprep.subr.bf16.mxu0 0
        %2039 = vmatpush1.bf16.msra.mxu0 0
        %2040 = vmatprep.subr.bf16.mxu0 0
        %2041 = vmatpush1.bf16.msra.mxu0 0
        %2042 = vmatprep.subr.bf16.mxu0 0
        %2043 = vmatpush1.bf16.msra.mxu0 0
        %2044 = vmatprep.mubr.bf16.mxu0 0
        %2045 = vmatmul.mubr.bf16.gmra.mrb[0].mxu0 %v1957
        %v2046 = vpop.f32.mrb[0].mxu0
        %v2047 = vadd.f32 %v1962, %v2046
        %v2048 = vpop.f32.mrb[0].mxu0
        %v2049 = vpop.f32.mrb[0].mxu0
        %v2050 = vpop.f32.mrb[0].mxu0
        %2051 = vdwg.mxu0
        %v2052 = vld [vmem:[#allocation20] sm:$0xf]
        %v2053 = vld [vmem:[#allocation20 + $0x4] sm:$0xf]
        %v2054 = vld [vmem:[#allocation20 + $0x8] sm:$0xf]
        %v2055 = vld [vmem:[#allocation20 + $0xc] sm:$0xf]
        %v2056 = vld [vmem:[#allocation20 + $0x10] sm:$0xf]
        %v2057 = vld [vmem:[#allocation20 + $0x14] sm:$0xf]
        %v2058 = vld [vmem:[#allocation20 + $0x18] sm:$0xf]
        %v2059 = vld [vmem:[#allocation20 + $0x1c] sm:$0xf]
        %v2060 = vld [vmem:[#allocation20 + $0x20] sm:$0xf]
        %v2061 = vld [vmem:[#allocation20 + $0x24] sm:$0xf]
        %v2062 = vld [vmem:[#allocation20 + $0x28] sm:$0xf]
        %v2063 = vld [vmem:[#allocation20 + $0x2c] sm:$0xf]
        %v2064 = vld [vmem:[#allocation20 + $0x30] sm:$0xf]
        %v2065 = vld [vmem:[#allocation20 + $0x34] sm:$0xf]
        %v2066 = vld [vmem:[#allocation20 + $0x38] sm:$0xf]
        %v2067 = vld [vmem:[#allocation20 + $0x3c] sm:$0xf]
        %v2068 = vld [vmem:[#allocation22] sm:$0x1]
        %v2069 = vpack.c.bf16 %v2047, %v2047
        %v2071 = vlaneseq
        %v2072 = vshrl.u32 %v2071, 7
        %v2073 = vsub.s32 0, %v2072
        %v2074 = vrot.slane %v2068, %v2073
        %v2092 = vunpack.c.l.b16 %v2052
        %v2093 = vunpack.c.l.b16 %v2053
        %v2094 = vunpack.c.l.b16 %v2054
        %v2095 = vunpack.c.l.b16 %v2055
        %v2096 = vunpack.c.l.b16 %v2056
        %v2097 = vunpack.c.l.b16 %v2057
        %v2098 = vunpack.c.l.b16 %v2058
        %v2099 = vunpack.c.l.b16 %v2059
        %v2100 = vunpack.c.l.b16 %v2060
        %v2101 = vunpack.c.l.b16 %v2061
        %v2102 = vunpack.c.l.b16 %v2062
        %v2103 = vunpack.c.l.b16 %v2063
        %v2104 = vunpack.c.l.b16 %v2064
        %v2105 = vunpack.c.l.b16 %v2065
        %v2106 = vunpack.c.l.b16 %v2066
        %v2107 = vunpack.c.l.b16 %v2067
        %v2108 = vpack.c.b16 %v2093, %v2092
        %v2109 = vpack.c.b16 %v2095, %v2094
        %v2110 = vpack.c.b16 %v2097, %v2096
        %v2111 = vpack.c.b16 %v2099, %v2098
        %v2112 = vpack.c.b16 %v2101, %v2100
        %v2113 = vpack.c.b16 %v2103, %v2102
        %v2114 = vpack.c.b16 %v2105, %v2104
        %v2115 = vpack.c.b16 %v2107, %v2106
        %2124 = vmatprep.subr.bf16.mxu0 0
        %2125 = vmatpush1.bf16.msra.mxu0 %v2108
        %2126 = vmatprep.subr.bf16.mxu0 0
        %2127 = vmatpush1.bf16.msra.mxu0 %v2109
        %2128 = vmatprep.subr.bf16.mxu0 0
        %2129 = vmatpush1.bf16.msra.mxu0 %v2110
        %2130 = vmatprep.subr.bf16.mxu0 0
        %2131 = vmatpush1.bf16.msra.mxu0 %v2111
        %2132 = vmatprep.subr.bf16.mxu0 0
        %2133 = vmatpush1.bf16.msra.mxu0 %v2112
        %2134 = vmatprep.subr.bf16.mxu0 0
        %2135 = vmatpush1.bf16.msra.mxu0 %v2113
        %2136 = vmatprep.subr.bf16.mxu0 0
        %2137 = vmatpush1.bf16.msra.mxu0 %v2114
        %2138 = vmatprep.subr.bf16.mxu0 0
        %2139 = vmatpush1.bf16.msra.mxu0 %v2115
        %2140 = vmatprep.subr.bf16.mxu0 0
        %2141 = vmatpush1.bf16.msra.mxu0 0
        %2142 = vmatprep.subr.bf16.mxu0 0
        %2143 = vmatpush1.bf16.msra.mxu0 0
        %2144 = vmatprep.subr.bf16.mxu0 0
        %2145 = vmatpush1.bf16.msra.mxu0 0
        %2146 = vmatprep.subr.bf16.mxu0 0
        %2147 = vmatpush1.bf16.msra.mxu0 0
        %2148 = vmatprep.subr.bf16.mxu0 0
        %2149 = vmatpush1.bf16.msra.mxu0 0
        %2150 = vmatprep.subr.bf16.mxu0 0
        %2151 = vmatpush1.bf16.msra.mxu0 0
        %2152 = vmatprep.subr.bf16.mxu0 0
        %2153 = vmatpush1.bf16.msra.mxu0 0
        %2154 = vmatprep.subr.bf16.mxu0 0
        %2155 = vmatpush1.bf16.msra.mxu0 0
        %2156 = vmatprep.mubr.bf16.mxu0 0
        %2157 = vmatmul.mubr.bf16.gmra.mrb[0].mxu0 %v2069
        %v2158 = vpop.f32.mrb[0].mxu0
        %v2159 = vadd.f32 %v2074, %v2158
        %v2160 = vpop.f32.mrb[0].mxu0
        %v2161 = vpop.f32.mrb[0].mxu0
        %v2162 = vpop.f32.mrb[0].mxu0
        %2163 = vdwg.mxu0
        %v2164 = vmax.f32 %v2159, 0.0
        %v2165 = vld [vmem:[#allocation23] sm:$0xf]
        %v2166 = vld [vmem:[#allocation23 + $0x4] sm:$0xf]
        %v2167 = vld [vmem:[#allocation23 + $0x8] sm:$0xf]
        %v2168 = vld [vmem:[#allocation23 + $0xc] sm:$0xf]
        %v2169 = vld [vmem:[#allocation23 + $0x10] sm:$0xf]
        %v2170 = vld [vmem:[#allocation23 + $0x14] sm:$0xf]
        %v2171 = vld [vmem:[#allocation23 + $0x18] sm:$0xf]
        %v2172 = vld [vmem:[#allocation23 + $0x1c] sm:$0xf]
        %v2173 = vld [vmem:[#allocation23 + $0x20] sm:$0xf]
        %v2174 = vld [vmem:[#allocation23 + $0x24] sm:$0xf]
        %v2175 = vld [vmem:[#allocation23 + $0x28] sm:$0xf]
        %v2176 = vld [vmem:[#allocation23 + $0x2c] sm:$0xf]
        %v2177 = vld [vmem:[#allocation23 + $0x30] sm:$0xf]
        %v2178 = vld [vmem:[#allocation23 + $0x34] sm:$0xf]
        %v2179 = vld [vmem:[#allocation23 + $0x38] sm:$0xf]
        %v2180 = vld [vmem:[#allocation23 + $0x3c] sm:$0xf]
        %v2181 = vld [vmem:[#allocation25] sm:$0x1]
        %v2182 = vpack.c.bf16 %v2164, %v2164
        %v2184 = vlaneseq
        %v2185 = vshrl.u32 %v2184, 7
        %v2186 = vsub.s32 0, %v2185
        %v2187 = vrot.slane %v2181, %v2186
        %v2205 = vunpack.c.l.b16 %v2165
        %v2206 = vunpack.c.l.b16 %v2166
        %v2207 = vunpack.c.l.b16 %v2167
        %v2208 = vunpack.c.l.b16 %v2168
        %v2209 = vunpack.c.l.b16 %v2169
        %v2210 = vunpack.c.l.b16 %v2170
        %v2211 = vunpack.c.l.b16 %v2171
        %v2212 = vunpack.c.l.b16 %v2172
        %v2213 = vunpack.c.l.b16 %v2173
        %v2214 = vunpack.c.l.b16 %v2174
        %v2215 = vunpack.c.l.b16 %v2175
        %v2216 = vunpack.c.l.b16 %v2176
        %v2217 = vunpack.c.l.b16 %v2177
        %v2218 = vunpack.c.l.b16 %v2178
        %v2219 = vunpack.c.l.b16 %v2179
        %v2220 = vunpack.c.l.b16 %v2180
        %v2221 = vpack.c.b16 %v2206, %v2205
        %v2222 = vpack.c.b16 %v2208, %v2207
        %v2223 = vpack.c.b16 %v2210, %v2209
        %v2224 = vpack.c.b16 %v2212, %v2211
        %v2225 = vpack.c.b16 %v2214, %v2213
        %v2226 = vpack.c.b16 %v2216, %v2215
        %v2227 = vpack.c.b16 %v2218, %v2217
        %v2228 = vpack.c.b16 %v2220, %v2219
        %2237 = vmatprep.subr.bf16.mxu0 0
        %2238 = vmatpush1.bf16.msra.mxu0 %v2221
        %2239 = vmatprep.subr.bf16.mxu0 0
        %2240 = vmatpush1.bf16.msra.mxu0 %v2222
        %2241 = vmatprep.subr.bf16.mxu0 0
        %2242 = vmatpush1.bf16.msra.mxu0 %v2223
        %2243 = vmatprep.subr.bf16.mxu0 0
        %2244 = vmatpush1.bf16.msra.mxu0 %v2224
        %2245 = vmatprep.subr.bf16.mxu0 0
        %2246 = vmatpush1.bf16.msra.mxu0 %v2225
        %2247 = vmatprep.subr.bf16.mxu0 0
        %2248 = vmatpush1.bf16.msra.mxu0 %v2226
        %2249 = vmatprep.subr.bf16.mxu0 0
        %2250 = vmatpush1.bf16.msra.mxu0 %v2227
        %2251 = vmatprep.subr.bf16.mxu0 0
        %2252 = vmatpush1.bf16.msra.mxu0 %v2228
        %2253 = vmatprep.subr.bf16.mxu0 0
        %2254 = vmatpush1.bf16.msra.mxu0 0
        %2255 = vmatprep.subr.bf16.mxu0 0
        %2256 = vmatpush1.bf16.msra.mxu0 0
        %2257 = vmatprep.subr.bf16.mxu0 0
        %2258 = vmatpush1.bf16.msra.mxu0 0
        %2259 = vmatprep.subr.bf16.mxu0 0
        %2260 = vmatpush1.bf16.msra.mxu0 0
        %2261 = vmatprep.subr.bf16.mxu0 0
        %2262 = vmatpush1.bf16.msra.mxu0 0
        %2263 = vmatprep.subr.bf16.mxu0 0
        %2264 = vmatpush1.bf16.msra.mxu0 0
        %2265 = vmatprep.subr.bf16.mxu0 0
        %2266 = vmatpush1.bf16.msra.mxu0 0
        %2267 = vmatprep.subr.bf16.mxu0 0
        %2268 = vmatpush1.bf16.msra.mxu0 0
        %2269 = vmatprep.mubr.bf16.mxu0 0
        %2270 = vmatmul.mubr.bf16.gmra.mrb[0].mxu0 %v2182
        %v2271 = vpop.f32.mrb[0].mxu0
        %v2272 = vadd.f32 %v2187, %v2271
        %v2273 = vpop.f32.mrb[0].mxu0
        %v2274 = vpop.f32.mrb[0].mxu0
        %v2275 = vpop.f32.mrb[0].mxu0
        %2276 = vdwg.mxu0
        %v2277 = vmax.f32 %v2272, 0.0
        %v2278 = vld [vmem:[#allocation26] sm:$0xf]
        %v2279 = vld [vmem:[#allocation26 + $0x4] sm:$0xf]
        %v2280 = vld [vmem:[#allocation26 + $0x8] sm:$0xf]
        %v2281 = vld [vmem:[#allocation26 + $0xc] sm:$0xf]
        %v2282 = vld [vmem:[#allocation26 + $0x10] sm:$0xf]
        %v2283 = vld [vmem:[#allocation26 + $0x14] sm:$0xf]
        %v2284 = vld [vmem:[#allocation26 + $0x18] sm:$0xf]
        %v2285 = vld [vmem:[#allocation26 + $0x1c] sm:$0xf]
        %v2286 = vld [vmem:[#allocation26 + $0x20] sm:$0xf]
        %v2287 = vld [vmem:[#allocation26 + $0x24] sm:$0xf]
        %v2288 = vld [vmem:[#allocation26 + $0x28] sm:$0xf]
        %v2289 = vld [vmem:[#allocation26 + $0x2c] sm:$0xf]
        %v2290 = vld [vmem:[#allocation26 + $0x30] sm:$0xf]
        %v2291 = vld [vmem:[#allocation26 + $0x34] sm:$0xf]
        %v2292 = vld [vmem:[#allocation26 + $0x38] sm:$0xf]
        %v2293 = vld [vmem:[#allocation26 + $0x3c] sm:$0xf]
        %v2294 = vld [vmem:[#allocation28] sm:$0x1]
        %v2295 = vpack.c.bf16 %v2277, %v2277
        %v2297 = vlaneseq
        %v2298 = vshrl.u32 %v2297, 7
        %v2299 = vsub.s32 0, %v2298
        %v2300 = vrot.slane %v2294, %v2299
        %v2318 = vunpack.c.l.b16 %v2278
        %v2319 = vunpack.c.l.b16 %v2279
        %v2320 = vunpack.c.l.b16 %v2280
        %v2321 = vunpack.c.l.b16 %v2281
        %v2322 = vunpack.c.l.b16 %v2282
        %v2323 = vunpack.c.l.b16 %v2283
        %v2324 = vunpack.c.l.b16 %v2284
        %v2325 = vunpack.c.l.b16 %v2285
        %v2326 = vunpack.c.l.b16 %v2286
        %v2327 = vunpack.c.l.b16 %v2287
        %v2328 = vunpack.c.l.b16 %v2288
        %v2329 = vunpack.c.l.b16 %v2289
        %v2330 = vunpack.c.l.b16 %v2290
        %v2331 = vunpack.c.l.b16 %v2291
        %v2332 = vunpack.c.l.b16 %v2292
        %v2333 = vunpack.c.l.b16 %v2293
        %v2334 = vpack.c.b16 %v2319, %v2318
        %v2335 = vpack.c.b16 %v2321, %v2320
        %v2336 = vpack.c.b16 %v2323, %v2322
        %v2337 = vpack.c.b16 %v2325, %v2324
        %v2338 = vpack.c.b16 %v2327, %v2326
        %v2339 = vpack.c.b16 %v2329, %v2328
        %v2340 = vpack.c.b16 %v2331, %v2330
        %v2341 = vpack.c.b16 %v2333, %v2332
        %2350 = vmatprep.subr.bf16.mxu0 0
        %2351 = vmatpush1.bf16.msra.mxu0 %v2334
        %2352 = vmatprep.subr.bf16.mxu0 0
        %2353 = vmatpush1.bf16.msra.mxu0 %v2335
        %2354 = vmatprep.subr.bf16.mxu0 0
        %2355 = vmatpush1.bf16.msra.mxu0 %v2336
        %2356 = vmatprep.subr.bf16.mxu0 0
        %2357 = vmatpush1.bf16.msra.mxu0 %v2337
        %2358 = vmatprep.subr.bf16.mxu0 0
        %2359 = vmatpush1.bf16.msra.mxu0 %v2338
        %2360 = vmatprep.subr.bf16.mxu0 0
        %2361 = vmatpush1.bf16.msra.mxu0 %v2339
        %2362 = vmatprep.subr.bf16.mxu0 0
        %2363 = vmatpush1.bf16.msra.mxu0 %v2340
        %2364 = vmatprep.subr.bf16.mxu0 0
        %2365 = vmatpush1.bf16.msra.mxu0 %v2341
        %2366 = vmatprep.subr.bf16.mxu0 0
        %2367 = vmatpush1.bf16.msra.mxu0 0
        %2368 = vmatprep.subr.bf16.mxu0 0
        %2369 = vmatpush1.bf16.msra.mxu0 0
        %2370 = vmatprep.subr.bf16.mxu0 0
        %2371 = vmatpush1.bf16.msra.mxu0 0
        %2372 = vmatprep.subr.bf16.mxu0 0
        %2373 = vmatpush1.bf16.msra.mxu0 0
        %2374 = vmatprep.subr.bf16.mxu0 0
        %2375 = vmatpush1.bf16.msra.mxu0 0
        %2376 = vmatprep.subr.bf16.mxu0 0
        %2377 = vmatpush1.bf16.msra.mxu0 0
        %2378 = vmatprep.subr.bf16.mxu0 0
        %2379 = vmatpush1.bf16.msra.mxu0 0
        %2380 = vmatprep.subr.bf16.mxu0 0
        %2381 = vmatpush1.bf16.msra.mxu0 0
        %2382 = vmatprep.mubr.bf16.mxu0 0
        %2383 = vmatmul.mubr.bf16.gmra.mrb[0].mxu0 %v2295
        %v2384 = vpop.f32.mrb[0].mxu0
        %v2385 = vadd.f32 %v2300, %v2384
        %v2386 = vpop.f32.mrb[0].mxu0
        %v2387 = vpop.f32.mrb[0].mxu0
        %v2388 = vpop.f32.mrb[0].mxu0
        %2389 = vdwg.mxu0
        %v2390 = vmax.f32 %v2385, 0.0
        %v2391 = vld [vmem:[%s17] sm:$0xf]
        %v2392 = vld [vmem:[%s17 + $0x4] sm:$0xf]
        %v2393 = vld [vmem:[%s17 + $0x8] sm:$0xf]
        %v2394 = vld [vmem:[%s17 + $0xc] sm:$0xf]
        %v2395 = vld [vmem:[%s17 + $0x10] sm:$0xf]
        %v2396 = vld [vmem:[%s17 + $0x14] sm:$0xf]
        %v2397 = vld [vmem:[%s17 + $0x18] sm:$0xf]
        %v2398 = vld [vmem:[%s17 + $0x1c] sm:$0xf]
        %v2399 = vld [vmem:[%s17 + $0x20] sm:$0xf]
        %v2400 = vld [vmem:[%s17 + $0x24] sm:$0xf]
        %v2401 = vld [vmem:[%s17 + $0x28] sm:$0xf]
        %v2402 = vld [vmem:[%s17 + $0x2c] sm:$0xf]
        %v2403 = vld [vmem:[%s17 + $0x30] sm:$0xf]
        %v2404 = vld [vmem:[%s17 + $0x34] sm:$0xf]
        %v2405 = vld [vmem:[%s17 + $0x38] sm:$0xf]
        %v2406 = vld [vmem:[%s17 + $0x3c] sm:$0xf]
        %v2407 = vld [vmem:[%s18] sm:$0x1]
        %v2408 = vpack.c.bf16 %v2390, %v2390
        %v2410 = vlaneseq
        %v2411 = vshrl.u32 %v2410, 7
        %v2412 = vsub.s32 0, %v2411
        %v2413 = vrot.slane %v2407, %v2412
        %v2431 = vunpack.c.l.b16 %v2391
        %v2432 = vunpack.c.l.b16 %v2392
        %v2433 = vunpack.c.l.b16 %v2393
        %v2434 = vunpack.c.l.b16 %v2394
        %v2435 = vunpack.c.l.b16 %v2395
        %v2436 = vunpack.c.l.b16 %v2396
        %v2437 = vunpack.c.l.b16 %v2397
        %v2438 = vunpack.c.l.b16 %v2398
        %v2439 = vunpack.c.l.b16 %v2399
        %v2440 = vunpack.c.l.b16 %v2400
        %v2441 = vunpack.c.l.b16 %v2401
        %v2442 = vunpack.c.l.b16 %v2402
        %v2443 = vunpack.c.l.b16 %v2403
        %v2444 = vunpack.c.l.b16 %v2404
        %v2445 = vunpack.c.l.b16 %v2405
        %v2446 = vunpack.c.l.b16 %v2406
        %v2447 = vpack.c.b16 %v2432, %v2431
        %v2448 = vpack.c.b16 %v2434, %v2433
        %v2449 = vpack.c.b16 %v2436, %v2435
        %v2450 = vpack.c.b16 %v2438, %v2437
        %v2451 = vpack.c.b16 %v2440, %v2439
        %v2452 = vpack.c.b16 %v2442, %v2441
        %v2453 = vpack.c.b16 %v2444, %v2443
        %v2454 = vpack.c.b16 %v2446, %v2445
        %2463 = vmatprep.subr.bf16.mxu0 0
        %2464 = vmatpush1.bf16.msra.mxu0 %v2447
        %2465 = vmatprep.subr.bf16.mxu0 0
        %2466 = vmatpush1.bf16.msra.mxu0 %v2448
        %2467 = vmatprep.subr.bf16.mxu0 0
        %2468 = vmatpush1.bf16.msra.mxu0 %v2449
        %2469 = vmatprep.subr.bf16.mxu0 0
        %2470 = vmatpush1.bf16.msra.mxu0 %v2450
        %2471 = vmatprep.subr.bf16.mxu0 0
        %2472 = vmatpush1.bf16.msra.mxu0 %v2451
        %2473 = vmatprep.subr.bf16.mxu0 0
        %2474 = vmatpush1.bf16.msra.mxu0 %v2452
        %2475 = vmatprep.subr.bf16.mxu0 0
        %2476 = vmatpush1.bf16.msra.mxu0 %v2453
        %2477 = vmatprep.subr.bf16.mxu0 0
        %2478 = vmatpush1.bf16.msra.mxu0 %v2454
        %2479 = vmatprep.subr.bf16.mxu0 0
        %2480 = vmatpush1.bf16.msra.mxu0 0
        %2481 = vmatprep.subr.bf16.mxu0 0
        %2482 = vmatpush1.bf16.msra.mxu0 0
        %2483 = vmatprep.subr.bf16.mxu0 0
        %2484 = vmatpush1.bf16.msra.mxu0 0
        %2485 = vmatprep.subr.bf16.mxu0 0
        %2486 = vmatpush1.bf16.msra.mxu0 0
        %2487 = vmatprep.subr.bf16.mxu0 0
        %2488 = vmatpush1.bf16.msra.mxu0 0
        %2489 = vmatprep.subr.bf16.mxu0 0
        %2490 = vmatpush1.bf16.msra.mxu0 0
        %2491 = vmatprep.subr.bf16.mxu0 0
        %2492 = vmatpush1.bf16.msra.mxu0 0
        %2493 = vmatprep.subr.bf16.mxu0 0
        %2494 = vmatpush1.bf16.msra.mxu0 0
        %2495 = vmatprep.mubr.bf16.mxu0 0
        %2496 = vmatmul.mubr.bf16.gmra.mrb[0].mxu0 %v2408
        %v2497 = vpop.f32.mrb[0].mxu0
        %v2498 = vadd.f32 %v2413, %v2497
        %v2499 = vpop.f32.mrb[0].mxu0
        %v2500 = vpop.f32.mrb[0].mxu0
        %v2501 = vpop.f32.mrb[0].mxu0
        %2502 = vdwg.mxu0
        %v2503 = vmax.f32 %v2498, 0.0
        %v2504 = vld [vmem:[#allocation29] sm:$0xff]
        %v2505 = vld [vmem:[#allocation29 + $0x8] sm:$0xff]
        %v2506 = vld [vmem:[#allocation29 + $0x10] sm:$0xff]
        %v2507 = vld [vmem:[#allocation29 + $0x18] sm:$0xff]
        %v2508 = vld [vmem:[#allocation29 + $0x20] sm:$0xff]
        %v2509 = vld [vmem:[#allocation29 + $0x28] sm:$0xff]
        %v2510 = vld [vmem:[#allocation29 + $0x30] sm:$0xff]
        %v2511 = vld [vmem:[#allocation29 + $0x38] sm:$0xff]
        %v2512 = vld [vmem:[#allocation29 + $0x40] sm:$0xff]
        %v2513 = vld [vmem:[#allocation29 + $0x48] sm:$0xff]
        %v2514 = vld [vmem:[#allocation29 + $0x50] sm:$0xff]
        %v2515 = vld [vmem:[#allocation29 + $0x58] sm:$0xff]
        %v2516 = vld [vmem:[#allocation29 + $0x60] sm:$0xff]
        %v2517 = vld [vmem:[#allocation29 + $0x68] sm:$0xff]
        %v2518 = vld [vmem:[#allocation29 + $0x70] sm:$0xff]
        %v2519 = vld [vmem:[#allocation29 + $0x78] sm:$0xff]
        %v2520 = vld [vmem:[#allocation29 + $0x80] sm:$0xff]
        %v2521 = vld [vmem:[#allocation29 + $0x88] sm:$0xff]
        %v2522 = vld [vmem:[#allocation29 + $0x90] sm:$0xff]
        %v2523 = vld [vmem:[#allocation29 + $0x98] sm:$0xff]
        %v2524 = vld [vmem:[#allocation29 + $0xa0] sm:$0xff]
        %v2525 = vld [vmem:[#allocation29 + $0xa8] sm:$0xff]
        %v2526 = vld [vmem:[#allocation29 + $0xb0] sm:$0xff]
        %v2527 = vld [vmem:[#allocation29 + $0xb8] sm:$0xff]
        %v2528 = vld [vmem:[#allocation29 + $0xc0] sm:$0xff]
        %v2529 = vld [vmem:[#allocation29 + $0xc8] sm:$0xff]
        %v2530 = vld [vmem:[#allocation29 + $0xd0] sm:$0xff]
        %v2531 = vld [vmem:[#allocation29 + $0xd8] sm:$0xff]
        %v2532 = vld [vmem:[#allocation29 + $0xe0] sm:$0xff]
        %v2533 = vld [vmem:[#allocation29 + $0xe8] sm:$0xff]
        %v2534 = vld [vmem:[#allocation29 + $0xf0] sm:$0xff]
        %v2535 = vld [vmem:[#allocation29 + $0xf8] sm:$0xff]
        %v2536 = vld [vmem:[#allocation29 + $0x100] sm:$0xff]
        %v2537 = vld [vmem:[#allocation29 + $0x108] sm:$0xff]
        %v2538 = vld [vmem:[#allocation29 + $0x110] sm:$0xff]
        %v2539 = vld [vmem:[#allocation29 + $0x118] sm:$0xff]
        %v2540 = vld [vmem:[#allocation29 + $0x120] sm:$0xff]
        %v2541 = vld [vmem:[#allocation29 + $0x128] sm:$0xff]
        %v2542 = vld [vmem:[#allocation29 + $0x130] sm:$0xff]
        %v2543 = vld [vmem:[#allocation29 + $0x138] sm:$0xff]
        %v2544 = vld [vmem:[#allocation29 + $0x140] sm:$0xff]
        %v2545 = vld [vmem:[#allocation29 + $0x148] sm:$0xff]
        %v2546 = vld [vmem:[#allocation29 + $0x150] sm:$0xff]
        %v2547 = vld [vmem:[#allocation29 + $0x158] sm:$0xff]
        %v2548 = vld [vmem:[#allocation29 + $0x160] sm:$0xff]
        %v2549 = vld [vmem:[#allocation29 + $0x168] sm:$0xff]
        %v2550 = vld [vmem:[#allocation29 + $0x170] sm:$0xff]
        %v2551 = vld [vmem:[#allocation29 + $0x178] sm:$0xff]
        %v2552 = vld [vmem:[#allocation29 + $0x180] sm:$0xff]
        %v2553 = vld [vmem:[#allocation29 + $0x188] sm:$0xff]
        %v2554 = vld [vmem:[#allocation29 + $0x190] sm:$0xff]
        %v2555 = vld [vmem:[#allocation29 + $0x198] sm:$0xff]
        %v2556 = vld [vmem:[#allocation29 + $0x1a0] sm:$0xff]
        %v2557 = vld [vmem:[#allocation29 + $0x1a8] sm:$0xff]
        %v2558 = vld [vmem:[#allocation29 + $0x1b0] sm:$0xff]
        %v2559 = vld [vmem:[#allocation29 + $0x1b8] sm:$0xff]
        %v2560 = vld [vmem:[#allocation29 + $0x1c0] sm:$0xff]
        %v2561 = vld [vmem:[#allocation29 + $0x1c8] sm:$0xff]
        %v2562 = vld [vmem:[#allocation29 + $0x1d0] sm:$0xff]
        %v2563 = vld [vmem:[#allocation29 + $0x1d8] sm:$0xff]
        %v2564 = vld [vmem:[#allocation29 + $0x1e0] sm:$0xff]
        %v2565 = vld [vmem:[#allocation29 + $0x1e8] sm:$0xff]
        %v2566 = vld [vmem:[#allocation29 + $0x1f0] sm:$0xff]
        %v2567 = vld [vmem:[#allocation29 + $0x1f8] sm:$0xff]
        %v2568 = vld [vmem:[%s20] sm:$0xff]
        %v2569 = vpack.c.bf16 %v2503, %v2503
        %v2571 = vlaneseq
        %v2572 = vshrl.u32 %v2571, 7
        %v2573 = vsub.s32 0, %v2572
        %v2574 = vrot.slane %v2568, %v2573
        %v2575 = vlaneseq
        %v2576 = vshrl.u32 %v2575, 7
        %v2577 = vsub.s32 1, %v2576
        %v2578 = vrot.slane %v2568, %v2577
        %v2579 = vlaneseq
        %v2580 = vshrl.u32 %v2579, 7
        %v2581 = vsub.s32 2, %v2580
        %v2582 = vrot.slane %v2568, %v2581
        %v2583 = vlaneseq
        %v2584 = vshrl.u32 %v2583, 7
        %v2585 = vsub.s32 3, %v2584
        %v2586 = vrot.slane %v2568, %v2585
        %v2587 = vlaneseq
        %v2588 = vshrl.u32 %v2587, 7
        %v2589 = vsub.s32 4, %v2588
        %v2590 = vrot.slane %v2568, %v2589
        %v2591 = vlaneseq
        %v2592 = vshrl.u32 %v2591, 7
        %v2593 = vsub.s32 5, %v2592
        %v2594 = vrot.slane %v2568, %v2593
        %v2595 = vlaneseq
        %v2596 = vshrl.u32 %v2595, 7
        %v2597 = vsub.s32 6, %v2596
        %v2598 = vrot.slane %v2568, %v2597
        %v2599 = vlaneseq
        %v2600 = vshrl.u32 %v2599, 7
        %v2601 = vsub.s32 7, %v2600
        %v2602 = vrot.slane %v2568, %v2601
        %v2675 = vunpack.c.l.b16 %v2504
        %v2676 = vunpack.c.h.b16 %v2504
        %v2677 = vunpack.c.l.b16 %v2505
        %v2678 = vunpack.c.h.b16 %v2505
        %v2679 = vunpack.c.l.b16 %v2506
        %v2680 = vunpack.c.h.b16 %v2506
        %v2681 = vunpack.c.l.b16 %v2507
        %v2682 = vunpack.c.h.b16 %v2507
        %v2683 = vunpack.c.l.b16 %v2508
        %v2684 = vunpack.c.h.b16 %v2508
        %v2685 = vunpack.c.l.b16 %v2509
        %v2686 = vunpack.c.h.b16 %v2509
        %v2687 = vunpack.c.l.b16 %v2510
        %v2688 = vunpack.c.h.b16 %v2510
        %v2689 = vunpack.c.l.b16 %v2511
        %v2690 = vunpack.c.h.b16 %v2511
        %v2691 = vunpack.c.l.b16 %v2512
        %v2692 = vunpack.c.h.b16 %v2512
        %v2693 = vunpack.c.l.b16 %v2513
        %v2694 = vunpack.c.h.b16 %v2513
        %v2695 = vunpack.c.l.b16 %v2514
        %v2696 = vunpack.c.h.b16 %v2514
        %v2697 = vunpack.c.l.b16 %v2515
        %v2698 = vunpack.c.h.b16 %v2515
        %v2699 = vunpack.c.l.b16 %v2516
        %v2700 = vunpack.c.h.b16 %v2516
        %v2701 = vunpack.c.l.b16 %v2517
        %v2702 = vunpack.c.h.b16 %v2517
        %v2703 = vunpack.c.l.b16 %v2518
        %v2704 = vunpack.c.h.b16 %v2518
        %v2705 = vunpack.c.l.b16 %v2519
        %v2706 = vunpack.c.h.b16 %v2519
        %v2707 = vunpack.c.l.b16 %v2520
        %v2708 = vunpack.c.h.b16 %v2520
        %v2709 = vunpack.c.l.b16 %v2521
        %v2710 = vunpack.c.h.b16 %v2521
        %v2711 = vunpack.c.l.b16 %v2522
        %v2712 = vunpack.c.h.b16 %v2522
        %v2713 = vunpack.c.l.b16 %v2523
        %v2714 = vunpack.c.h.b16 %v2523
        %v2715 = vunpack.c.l.b16 %v2524
        %v2716 = vunpack.c.h.b16 %v2524
        %v2717 = vunpack.c.l.b16 %v2525
        %v2718 = vunpack.c.h.b16 %v2525
        %v2719 = vunpack.c.l.b16 %v2526
        %v2720 = vunpack.c.h.b16 %v2526
        %v2721 = vunpack.c.l.b16 %v2527
        %v2722 = vunpack.c.h.b16 %v2527
        %v2723 = vunpack.c.l.b16 %v2528
        %v2724 = vunpack.c.h.b16 %v2528
        %v2725 = vunpack.c.l.b16 %v2529
        %v2726 = vunpack.c.h.b16 %v2529
        %v2727 = vunpack.c.l.b16 %v2530
        %v2728 = vunpack.c.h.b16 %v2530
        %v2729 = vunpack.c.l.b16 %v2531
        %v2730 = vunpack.c.h.b16 %v2531
        %v2731 = vunpack.c.l.b16 %v2532
        %v2732 = vunpack.c.h.b16 %v2532
        %v2733 = vunpack.c.l.b16 %v2533
        %v2734 = vunpack.c.h.b16 %v2533
        %v2735 = vunpack.c.l.b16 %v2534
        %v2736 = vunpack.c.h.b16 %v2534
        %v2737 = vunpack.c.l.b16 %v2535
        %v2738 = vunpack.c.h.b16 %v2535
        %v2739 = vunpack.c.l.b16 %v2536
        %v2740 = vunpack.c.h.b16 %v2536
        %v2741 = vunpack.c.l.b16 %v2537
        %v2742 = vunpack.c.h.b16 %v2537
        %v2743 = vunpack.c.l.b16 %v2538
        %v2744 = vunpack.c.h.b16 %v2538
        %v2745 = vunpack.c.l.b16 %v2539
        %v2746 = vunpack.c.h.b16 %v2539
        %v2747 = vunpack.c.l.b16 %v2540
        %v2748 = vunpack.c.h.b16 %v2540
        %v2749 = vunpack.c.l.b16 %v2541
        %v2750 = vunpack.c.h.b16 %v2541
        %v2751 = vunpack.c.l.b16 %v2542
        %v2752 = vunpack.c.h.b16 %v2542
        %v2753 = vunpack.c.l.b16 %v2543
        %v2754 = vunpack.c.h.b16 %v2543
        %v2755 = vunpack.c.l.b16 %v2544
        %v2756 = vunpack.c.h.b16 %v2544
        %v2757 = vunpack.c.l.b16 %v2545
        %v2758 = vunpack.c.h.b16 %v2545
        %v2759 = vunpack.c.l.b16 %v2546
        %v2760 = vunpack.c.h.b16 %v2546
        %v2761 = vunpack.c.l.b16 %v2547
        %v2762 = vunpack.c.h.b16 %v2547
        %v2763 = vunpack.c.l.b16 %v2548
        %v2764 = vunpack.c.h.b16 %v2548
        %v2765 = vunpack.c.l.b16 %v2549
        %v2766 = vunpack.c.h.b16 %v2549
        %v2767 = vunpack.c.l.b16 %v2550
        %v2768 = vunpack.c.h.b16 %v2550
        %v2769 = vunpack.c.l.b16 %v2551
        %v2770 = vunpack.c.h.b16 %v2551
        %v2771 = vunpack.c.l.b16 %v2552
        %v2772 = vunpack.c.h.b16 %v2552
        %v2773 = vunpack.c.l.b16 %v2553
        %v2774 = vunpack.c.h.b16 %v2553
        %v2775 = vunpack.c.l.b16 %v2554
        %v2776 = vunpack.c.h.b16 %v2554
        %v2777 = vunpack.c.l.b16 %v2555
        %v2778 = vunpack.c.h.b16 %v2555
        %v2779 = vunpack.c.l.b16 %v2556
        %v2780 = vunpack.c.h.b16 %v2556
        %v2781 = vunpack.c.l.b16 %v2557
        %v2782 = vunpack.c.h.b16 %v2557
        %v2783 = vunpack.c.l.b16 %v2558
        %v2784 = vunpack.c.h.b16 %v2558
        %v2785 = vunpack.c.l.b16 %v2559
        %v2786 = vunpack.c.h.b16 %v2559
        %v2787 = vunpack.c.l.b16 %v2560
        %v2788 = vunpack.c.h.b16 %v2560
        %v2789 = vunpack.c.l.b16 %v2561
        %v2790 = vunpack.c.h.b16 %v2561
        %v2791 = vunpack.c.l.b16 %v2562
        %v2792 = vunpack.c.h.b16 %v2562
        %v2793 = vunpack.c.l.b16 %v2563
        %v2794 = vunpack.c.h.b16 %v2563
        %v2795 = vunpack.c.l.b16 %v2564
        %v2796 = vunpack.c.h.b16 %v2564
        %v2797 = vunpack.c.l.b16 %v2565
        %v2798 = vunpack.c.h.b16 %v2565
        %v2799 = vunpack.c.l.b16 %v2566
        %v2800 = vunpack.c.h.b16 %v2566
        %v2801 = vunpack.c.l.b16 %v2567
        %v2802 = vunpack.c.h.b16 %v2567
        %v2803 = vpack.c.b16 %v2683, %v2675
        %v2804 = vpack.c.b16 %v2684, %v2676
        %v2805 = vpack.c.b16 %v2685, %v2677
        %v2806 = vpack.c.b16 %v2686, %v2678
        %v2807 = vpack.c.b16 %v2687, %v2679
        %v2808 = vpack.c.b16 %v2688, %v2680
        %v2809 = vpack.c.b16 %v2689, %v2681
        %v2810 = vpack.c.b16 %v2690, %v2682
        %v2811 = vpack.c.b16 %v2699, %v2691
        %v2812 = vpack.c.b16 %v2700, %v2692
        %v2813 = vpack.c.b16 %v2701, %v2693
        %v2814 = vpack.c.b16 %v2702, %v2694
        %v2815 = vpack.c.b16 %v2703, %v2695
        %v2816 = vpack.c.b16 %v2704, %v2696
        %v2817 = vpack.c.b16 %v2705, %v2697
        %v2818 = vpack.c.b16 %v2706, %v2698
        %v2819 = vpack.c.b16 %v2715, %v2707
        %v2820 = vpack.c.b16 %v2716, %v2708
        %v2821 = vpack.c.b16 %v2717, %v2709
        %v2822 = vpack.c.b16 %v2718, %v2710
        %v2823 = vpack.c.b16 %v2719, %v2711
        %v2824 = vpack.c.b16 %v2720, %v2712
        %v2825 = vpack.c.b16 %v2721, %v2713
        %v2826 = vpack.c.b16 %v2722, %v2714
        %v2827 = vpack.c.b16 %v2731, %v2723
        %v2828 = vpack.c.b16 %v2732, %v2724
        %v2829 = vpack.c.b16 %v2733, %v2725
        %v2830 = vpack.c.b16 %v2734, %v2726
        %v2831 = vpack.c.b16 %v2735, %v2727
        %v2832 = vpack.c.b16 %v2736, %v2728
        %v2833 = vpack.c.b16 %v2737, %v2729
        %v2834 = vpack.c.b16 %v2738, %v2730
        %v2835 = vpack.c.b16 %v2747, %v2739
        %v2836 = vpack.c.b16 %v2748, %v2740
        %v2837 = vpack.c.b16 %v2749, %v2741
        %v2838 = vpack.c.b16 %v2750, %v2742
        %v2839 = vpack.c.b16 %v2751, %v2743
        %v2840 = vpack.c.b16 %v2752, %v2744
        %v2841 = vpack.c.b16 %v2753, %v2745
        %v2842 = vpack.c.b16 %v2754, %v2746
        %v2843 = vpack.c.b16 %v2763, %v2755
        %v2844 = vpack.c.b16 %v2764, %v2756
        %v2845 = vpack.c.b16 %v2765, %v2757
        %v2846 = vpack.c.b16 %v2766, %v2758
        %v2847 = vpack.c.b16 %v2767, %v2759
        %v2848 = vpack.c.b16 %v2768, %v2760
        %v2849 = vpack.c.b16 %v2769, %v2761
        %v2850 = vpack.c.b16 %v2770, %v2762
        %v2851 = vpack.c.b16 %v2779, %v2771
        %v2852 = vpack.c.b16 %v2780, %v2772
        %v2853 = vpack.c.b16 %v2781, %v2773
        %v2854 = vpack.c.b16 %v2782, %v2774
        %v2855 = vpack.c.b16 %v2783, %v2775
        %v2856 = vpack.c.b16 %v2784, %v2776
        %v2857 = vpack.c.b16 %v2785, %v2777
        %v2858 = vpack.c.b16 %v2786, %v2778
        %v2859 = vpack.c.b16 %v2795, %v2787
        %v2860 = vpack.c.b16 %v2796, %v2788
        %v2861 = vpack.c.b16 %v2797, %v2789
        %v2862 = vpack.c.b16 %v2798, %v2790
        %v2863 = vpack.c.b16 %v2799, %v2791
        %v2864 = vpack.c.b16 %v2800, %v2792
        %v2865 = vpack.c.b16 %v2801, %v2793
        %v2866 = vpack.c.b16 %v2802, %v2794
        %2931 = vmatprep.subr.bf16.mxu0 %v2804
        %2932 = vmatpush1.bf16.msra.mxu0 %v2803
        %2933 = vmatprep.subr.bf16.mxu0 %v2812
        %2934 = vmatpush1.bf16.msra.mxu0 %v2811
        %2935 = vmatprep.subr.bf16.mxu0 %v2820
        %2936 = vmatpush1.bf16.msra.mxu0 %v2819
        %2937 = vmatprep.subr.bf16.mxu0 %v2828
        %2938 = vmatpush1.bf16.msra.mxu0 %v2827
        %2939 = vmatprep.subr.bf16.mxu0 %v2836
        %2940 = vmatpush1.bf16.msra.mxu0 %v2835
        %2941 = vmatprep.subr.bf16.mxu0 %v2844
        %2942 = vmatpush1.bf16.msra.mxu0 %v2843
        %2943 = vmatprep.subr.bf16.mxu0 %v2852
        %2944 = vmatpush1.bf16.msra.mxu0 %v2851
        %2945 = vmatprep.subr.bf16.mxu0 %v2860
        %2946 = vmatpush1.bf16.msra.mxu0 %v2859
        %2947 = vmatprep.subr.bf16.mxu0 0
        %2948 = vmatpush1.bf16.msra.mxu0 0
        %2949 = vmatprep.subr.bf16.mxu0 0
        %2950 = vmatpush1.bf16.msra.mxu0 0
        %2951 = vmatprep.subr.bf16.mxu0 0
        %2952 = vmatpush1.bf16.msra.mxu0 0
        %2953 = vmatprep.subr.bf16.mxu0 0
        %2954 = vmatpush1.bf16.msra.mxu0 0
        %2955 = vmatprep.subr.bf16.mxu0 0
        %2956 = vmatpush1.bf16.msra.mxu0 0
        %2957 = vmatprep.subr.bf16.mxu0 0
        %2958 = vmatpush1.bf16.msra.mxu0 0
        %2959 = vmatprep.subr.bf16.mxu0 0
        %2960 = vmatpush1.bf16.msra.mxu0 0
        %2961 = vmatprep.subr.bf16.mxu0 0
        %2962 = vmatpush1.bf16.msra.mxu0 0
        %2963 = vmatprep.mubr.bf16.mxu0 0
        %2964 = vmatmul.mubr.bf16.gmra.mrb[0].mxu0 %v2569
        %v2965 = vpop.f32.mrb[0].mxu0
        %v2966 = vadd.f32 %v2574, %v2965
        %v2967 = vpop.f32.mrb[0].mxu0
        %v2968 = vadd.f32 %v2578, %v2967
        %v2969 = vpop.f32.mrb[0].mxu0
        %v2970 = vpop.f32.mrb[0].mxu0
        %2971 = vdwg.mxu0
        %2972 = vmatprep.subr.bf16.mxu0 %v2806
        %2973 = vmatpush1.bf16.msra.mxu0 %v2805
        %2974 = vmatprep.subr.bf16.mxu0 %v2814
        %2975 = vmatpush1.bf16.msra.mxu0 %v2813
        %2976 = vmatprep.subr.bf16.mxu0 %v2822
        %2977 = vmatpush1.bf16.msra.mxu0 %v2821
        %2978 = vmatprep.subr.bf16.mxu0 %v2830
        %2979 = vmatpush1.bf16.msra.mxu0 %v2829
        %2980 = vmatprep.subr.bf16.mxu0 %v2838
        %2981 = vmatpush1.bf16.msra.mxu0 %v2837
        %2982 = vmatprep.subr.bf16.mxu0 %v2846
        %2983 = vmatpush1.bf16.msra.mxu0 %v2845
        %2984 = vmatprep.subr.bf16.mxu0 %v2854
        %2985 = vmatpush1.bf16.msra.mxu0 %v2853
        %2986 = vmatprep.subr.bf16.mxu0 %v2862
        %2987 = vmatpush1.bf16.msra.mxu0 %v2861
        %2988 = vmatprep.subr.bf16.mxu0 0
        %2989 = vmatpush1.bf16.msra.mxu0 0
        %2990 = vmatprep.subr.bf16.mxu0 0
        %2991 = vmatpush1.bf16.msra.mxu0 0
        %2992 = vmatprep.subr.bf16.mxu0 0
        %2993 = vmatpush1.bf16.msra.mxu0 0
        %2994 = vmatprep.subr.bf16.mxu0 0
        %2995 = vmatpush1.bf16.msra.mxu0 0
        %2996 = vmatprep.subr.bf16.mxu0 0
        %2997 = vmatpush1.bf16.msra.mxu0 0
        %2998 = vmatprep.subr.bf16.mxu0 0
        %2999 = vmatpush1.bf16.msra.mxu0 0
        %3000 = vmatprep.subr.bf16.mxu0 0
        %3001 = vmatpush1.bf16.msra.mxu0 0
        %3002 = vmatprep.subr.bf16.mxu0 0
        %3003 = vmatpush1.bf16.msra.mxu0 0
        %3004 = vmatprep.mubr.bf16.mxu0 0
        %3005 = vmatmul.mubr.bf16.gmra.mrb[0].mxu0 %v2569
        %v3006 = vpop.f32.mrb[0].mxu0
        %v3007 = vadd.f32 %v2582, %v3006
        %v3008 = vpop.f32.mrb[0].mxu0
        %v3009 = vadd.f32 %v2586, %v3008
        %v3010 = vpop.f32.mrb[0].mxu0
        %v3011 = vpop.f32.mrb[0].mxu0
        %3012 = vdwg.mxu0
        %3013 = vmatprep.subr.bf16.mxu0 %v2808
        %3014 = vmatpush1.bf16.msra.mxu0 %v2807
        %3015 = vmatprep.subr.bf16.mxu0 %v2816
        %3016 = vmatpush1.bf16.msra.mxu0 %v2815
        %3017 = vmatprep.subr.bf16.mxu0 %v2824
        %3018 = vmatpush1.bf16.msra.mxu0 %v2823
        %3019 = vmatprep.subr.bf16.mxu0 %v2832
        %3020 = vmatpush1.bf16.msra.mxu0 %v2831
        %3021 = vmatprep.subr.bf16.mxu0 %v2840
        %3022 = vmatpush1.bf16.msra.mxu0 %v2839
        %3023 = vmatprep.subr.bf16.mxu0 %v2848
        %3024 = vmatpush1.bf16.msra.mxu0 %v2847
        %3025 = vmatprep.subr.bf16.mxu0 %v2856
        %3026 = vmatpush1.bf16.msra.mxu0 %v2855
        %3027 = vmatprep.subr.bf16.mxu0 %v2864
        %3028 = vmatpush1.bf16.msra.mxu0 %v2863
        %3029 = vmatprep.subr.bf16.mxu0 0
        %3030 = vmatpush1.bf16.msra.mxu0 0
        %3031 = vmatprep.subr.bf16.mxu0 0
        %3032 = vmatpush1.bf16.msra.mxu0 0
        %3033 = vmatprep.subr.bf16.mxu0 0
        %3034 = vmatpush1.bf16.msra.mxu0 0
        %3035 = vmatprep.subr.bf16.mxu0 0
        %3036 = vmatpush1.bf16.msra.mxu0 0
        %3037 = vmatprep.subr.bf16.mxu0 0
        %3038 = vmatpush1.bf16.msra.mxu0 0
        %3039 = vmatprep.subr.bf16.mxu0 0
        %3040 = vmatpush1.bf16.msra.mxu0 0
        %3041 = vmatprep.subr.bf16.mxu0 0
        %3042 = vmatpush1.bf16.msra.mxu0 0
        %3043 = vmatprep.subr.bf16.mxu0 0
        %3044 = vmatpush1.bf16.msra.mxu0 0
        %3045 = vmatprep.mubr.bf16.mxu0 0
        %3046 = vmatmul.mubr.bf16.gmra.mrb[0].mxu0 %v2569
        %v3047 = vpop.f32.mrb[0].mxu0
        %v3048 = vadd.f32 %v2590, %v3047
        %v3049 = vpop.f32.mrb[0].mxu0
        %v3050 = vadd.f32 %v2594, %v3049
        %v3051 = vpop.f32.mrb[0].mxu0
        %v3052 = vpop.f32.mrb[0].mxu0
        %3053 = vdwg.mxu0
        %3054 = vmatprep.subr.bf16.mxu0 %v2810
        %3055 = vmatpush1.bf16.msra.mxu0 %v2809
        %3056 = vmatprep.subr.bf16.mxu0 %v2818
        %3057 = vmatpush1.bf16.msra.mxu0 %v2817
        %3058 = vmatprep.subr.bf16.mxu0 %v2826
        %3059 = vmatpush1.bf16.msra.mxu0 %v2825
        %3060 = vmatprep.subr.bf16.mxu0 %v2834
        %3061 = vmatpush1.bf16.msra.mxu0 %v2833
        %3062 = vmatprep.subr.bf16.mxu0 %v2842
        %3063 = vmatpush1.bf16.msra.mxu0 %v2841
        %3064 = vmatprep.subr.bf16.mxu0 %v2850
        %3065 = vmatpush1.bf16.msra.mxu0 %v2849
        %3066 = vmatprep.subr.bf16.mxu0 %v2858
        %3067 = vmatpush1.bf16.msra.mxu0 %v2857
        %3068 = vmatprep.subr.bf16.mxu0 %v2866
        %3069 = vmatpush1.bf16.msra.mxu0 %v2865
        %3070 = vmatprep.subr.bf16.mxu0 0
        %3071 = vmatpush1.bf16.msra.mxu0 0
        %3072 = vmatprep.subr.bf16.mxu0 0
        %3073 = vmatpush1.bf16.msra.mxu0 0
        %3074 = vmatprep.subr.bf16.mxu0 0
        %3075 = vmatpush1.bf16.msra.mxu0 0
        %3076 = vmatprep.subr.bf16.mxu0 0
        %3077 = vmatpush1.bf16.msra.mxu0 0
        %3078 = vmatprep.subr.bf16.mxu0 0
        %3079 = vmatpush1.bf16.msra.mxu0 0
        %3080 = vmatprep.subr.bf16.mxu0 0
        %3081 = vmatpush1.bf16.msra.mxu0 0
        %3082 = vmatprep.subr.bf16.mxu0 0
        %3083 = vmatpush1.bf16.msra.mxu0 0
        %3084 = vmatprep.subr.bf16.mxu0 0
        %3085 = vmatpush1.bf16.msra.mxu0 0
        %3086 = vmatprep.mubr.bf16.mxu0 0
        %3087 = vmatmul.mubr.bf16.gmra.mrb[0].mxu0 %v2569
        %v3088 = vpop.f32.mrb[0].mxu0
        %v3089 = vadd.f32 %v2598, %v3088
        %v3090 = vpop.f32.mrb[0].mxu0
        %v3091 = vadd.f32 %v2602, %v3090
        %v3092 = vpop.f32.mrb[0].mxu0
        %v3093 = vpop.f32.mrb[0].mxu0
        %3094 = vdwg.mxu0
        %v3095 = vxor.u32 %v2966, 2147483648
        %v3096 = vxor.u32 %v2968, 2147483648
        %v3097 = vxor.u32 %v3007, 2147483648
        %v3098 = vxor.u32 %v3009, 2147483648
        %v3099 = vxor.u32 %v3048, 2147483648
        %v3100 = vxor.u32 %v3050, 2147483648
        %v3101 = vxor.u32 %v3089, 2147483648
        %v3102 = vxor.u32 %v3091, 2147483648
        %v3103 = vmul.f32 %v3095, 1.442695
        %v3104 = vpow.pop %v3103
        %v3105 = vmul.f32 %v3096, 1.442695
        %v3106 = vpow.pop %v3105
        %v3107 = vmul.f32 %v3097, 1.442695
        %v3108 = vpow.pop %v3107
        %v3109 = vmul.f32 %v3098, 1.442695
        %v3110 = vpow.pop %v3109
        %v3111 = vmul.f32 %v3099, 1.442695
        %v3112 = vpow.pop %v3111
        %v3113 = vmul.f32 %v3100, 1.442695
        %v3114 = vpow.pop %v3113
        %v3115 = vmul.f32 %v3101, 1.442695
        %v3116 = vpow.pop %v3115
        %v3117 = vmul.f32 %v3102, 1.442695
        %v3118 = vpow.pop %v3117
        %v3119 = vadd.f32 %v3104, 1.0
        %v3120 = vadd.f32 %v3106, 1.0
        %v3121 = vadd.f32 %v3108, 1.0
        %v3122 = vadd.f32 %v3110, 1.0
        %v3123 = vadd.f32 %v3112, 1.0
        %v3124 = vadd.f32 %v3114, 1.0
        %v3125 = vadd.f32 %v3116, 1.0
        %v3126 = vadd.f32 %v3118, 1.0
        %v3127 = vrcp.pop %v3119
        %v3128 = vmul.f32 1.0, %v3127
        %v3129 = vrcp.pop %v3120
        %v3130 = vmul.f32 1.0, %v3129
        %v3131 = vrcp.pop %v3121
        %v3132 = vmul.f32 1.0, %v3131
        %v3133 = vrcp.pop %v3122
        %v3134 = vmul.f32 1.0, %v3133
        %v3135 = vrcp.pop %v3123
        %v3136 = vmul.f32 1.0, %v3135
        %v3137 = vrcp.pop %v3124
        %v3138 = vmul.f32 1.0, %v3137
        %v3139 = vrcp.pop %v3125
        %v3140 = vmul.f32 1.0, %v3139
        %v3141 = vrcp.pop %v3126
        %v3142 = vmul.f32 1.0, %v3141
        %3143 = vst [vmem:[%s903] sm:$0xff] %v3128
        %3144 = vst [vmem:[%s903 + $0x8] sm:$0xff] %v3130
        %3145 = vst [vmem:[%s903 + $0x10] sm:$0xff] %v3132
        %3146 = vst [vmem:[%s903 + $0x18] sm:$0xff] %v3134
        %3147 = vst [vmem:[%s903 + $0x20] sm:$0xff] %v3136
        %3148 = vst [vmem:[%s903 + $0x28] sm:$0xff] %v3138
        %3149 = vst [vmem:[%s903 + $0x30] sm:$0xff] %v3140
        %3150 = vst [vmem:[%s903 + $0x38] sm:$0xff] %v3142
        %s3151 = sand.u32 %s501, 1
        %s3152 = scalar_lea.sflag [#allocation4], %s3151
        %s3153 = sand.u32 %s501, 1
        %s3154 = smul.addr %s3153, 64
        %s3155 = scalar_lea.vmem [#allocation31], %s3154
        // Predicated region
        $region177: #{autoencoder_forward.1} parent=103 // pred_check
          %p3156 = pneg %p511
        $region178: #{autoencoder_forward.1} parent=103 // pred_check_branch
          %3158 = sbr.rel (%p3156) target = $region180
        $region179: #{autoencoder_forward.1} parent=103 // pred_region
          %s3160 = ssub.s32 1024, 1024
          %3161 = vsyncadd %s3152, %s3160
          %s3162 = smul.addr %s47, 8
          %s3163 = smul.addr %s3162, 128
          %s3164 = scalar_lea.hbm %s21, %s3163
          %s3166 = sshll.u32 %s3155, 4
          %s3167 = int_to_ptr.vmem [resolvable:$true] %s3166
          %3169 = dma.vmem_to_hbm [thread:$0]  %s3167, 1024, %s3164, %s3152
        $region180: #{autoencoder_forward.1} parent=103 // pred_fallthru
          _
      $region104: #{autoencoder_forward.1} parent=5 // pred_fallthru
        _
      %p3170 = scmp.le.s32.totalorder 2, %s42
      // Predicated region
      $region181: #{autoencoder_forward.1} parent=5 // pred_check
        %p3171 = pneg %p3170
      $region182: #{autoencoder_forward.1} parent=5 // pred_check_branch
        %3173 = sbr.rel (%p3171) target = $region184
      $region183: #{autoencoder_forward.1} parent=5 // pred_region
        %s3174 = ssub.s32 %s42, 2
        // Predicated region
        $region185: #{autoencoder_forward.1} parent=183 // pred_check
          %p3175 = pneg %p517
        $region186: #{autoencoder_forward.1} parent=183 // pred_check_branch
          %3177 = sbr.rel (%p3175) target = $region188
        $region187: #{autoencoder_forward.1} parent=183 // pred_region
          %s3178 = sand.u32 %s502, 1
          %s3179 = scalar_lea.sflag [#allocation4], %s3178
          %s3180 = sand.u32 %s502, 1
          %s3181 = smul.addr %s3180, 64
          %s3182 = scalar_lea.vmem [#allocation31], %s3181
          %3183 = dma.done %s3179, 1024
        $region188: #{autoencoder_forward.1} parent=183 // pred_fallthru
          _
      $region184: #{autoencoder_forward.1} parent=5 // pred_fallthru
        _
    $region6: #{autoencoder_forward.1} parent=1 // loop_footer
      %s46 = sadd.s32 1, %s42
    $region7: #{autoencoder_forward.1} parent=1 // loop_footer_branch
      %41 = sbr.rel target = $region3
    $region8: #{autoencoder_forward.1} parent=1 // loop_exit
      _
    %3184 = vsyncpa [#allocation3], 1
    %s3185 = scalar_lea.sflag [#allocation3], 1
    %3186 = vsyncpa %s3185, 1
    %3187 = vsyncpa [#allocation6], 1
    %3188 = vsyncpa [#allocation9], 1
    %3189 = vsyncpa [#allocation12], 1
    %3190 = vsyncpa [#allocation15], 1
    %3191 = vsyncpa [#allocation18], 1
    %3192 = vsyncpa [#allocation21], 1
    %3193 = vsyncpa [#allocation24], 1
    %3194 = vsyncpa [#allocation27], 1
    %3195 = vsyncpa [#allocation30], 1
    %3196 = vsyncpa [#allocation4], 1
    %s3197 = scalar_lea.sflag [#allocation4], 1
    %3198 = vsyncpa %s3197, 1

</llo_original>
